<compile_context>
chip_gen: v5e
topology: v5e:2x2
jax: 0.10.0
libtpu: 0.0.40
codegen_flags: <defaults>
</compile_context>

<pallas_src>
import math

import jax
import jax.numpy as jnp
from jax.experimental import pallas as pl
from jax.experimental.pallas import tpu as pltpu

# ---- small synthetic config standing in for 'bert-base-multilingual-cased' ----
VOCAB = 128
HIDDEN = 128            # lane-dense (multiple of 128)
N_HEADS = 2
HEAD_DIM = HIDDEN // N_HEADS
INTERMEDIATE = 256      # lane-dense
N_LAYERS = 2
MAX_POS = 32
NUM_LABELS = 11         # len(unique_labels)
PAD_LABELS = 128        # classifier output padded to a lane-dense last dim
LN_EPS = 1e-12
BATCH = 2
SEQ = 8


def _layernorm(x, g, b):
    mu = jnp.mean(x, axis=-1, keepdims=True)
    var = jnp.mean((x - mu) ** 2, axis=-1, keepdims=True)
    return (x - mu) * jax.lax.rsqrt(var + LN_EPS) * g + b


def _gelu(x):
    # TODO(synk): HF BERT uses exact (erf) gelu; tanh approximation used for Mosaic-safe lowering.
    return 0.5 * x * (1.0 + jnp.tanh(0.7978845608028654 * (x + 0.044715 * x * x * x)))


# ---------------- fused BERT forward kernel (grid over layers) ----------------
def bert_fused_kernel(ids_ref, mask_ref, labels_ref,
                      wemb_ref, pemb_ref, temb_ref, eg_ref, eb_ref,
                      wqkv_ref, bqkv_ref,
                      wo_ref, bo_ref, l1g_ref, l1b_ref,
                      wi_ref, bi_ref, wf_ref, bf_ref, l2g_ref, l2b_ref,
                      cw_ref, cb_ref,
                      logits_ref, loss_ref,
                      x_ref):
    l = pl.program_id(0)
    n_layers = pl.num_programs(0)
    B, S, H = x_ref.shape

    # ---------- embeddings + LN (first grid step only) ----------
    @pl.when(l == 0)
    def _():
        ids = ids_ref[...]                                           # (B, S) int32
        onehot = (jax.lax.broadcasted_iota(jnp.int32, (B, S, VOCAB), 2)
                  == ids[:, :, None]).astype(jnp.float32)
        emb = jnp.dot(onehot.reshape(B * S, VOCAB), wemb_ref[...],
                      preferred_element_type=jnp.float32).reshape(B, S, H)
        # token_type_ids default to all-zeros in the reference forward -> type row 0 only.
        emb = emb + pemb_ref[...][None, :, :] + temb_ref[...][None, :, :]
        x_ref[...] = _layernorm(emb, eg_ref[...], eb_ref[...])

    # ---------- one encoder layer per grid step ----------
    x = x_ref[...]                                                   # (B, S, H) f32, resident
    xf = x.reshape(B * S, H)
    xb = xf.astype(jnp.bfloat16)
    # additive attention-mask bias kept in f32 (old-HF -10000.0 convention)
    bias = ((1.0 - mask_ref[...].astype(jnp.float32)) * -10000.0)[:, None, :]   # (B, 1, S)

    # Fused Q/K/V projection: single bf16 MXU matmul, f32 accumulation; bias add in f32.
    qkv = (jnp.dot(xb, wqkv_ref[0], preferred_element_type=jnp.float32)
           + bqkv_ref[0])                                            # (B*S, 3H)
    q = qkv[:, 0 * H:1 * H].reshape(B, S, H)
    k = qkv[:, 1 * H:2 * H].reshape(B, S, H)
    v = qkv[:, 2 * H:3 * H].reshape(B, S, H)

    scale = 1.0 / math.sqrt(HEAD_DIM)
    wo = wo_ref[0]
    attn = jnp.zeros((B * S, H), jnp.float32) + bo_ref[0]
    # Heads are unrolled (N_HEADS=2) and folded straight into the output projection via
    # per-head Wo row-slices, so no jnp.concatenate / lane re-shuffle is needed.
    # TODO(synk): a single 2-batch-dim einsum over (B, N_HEADS) would be denser still, but
    # multi-batch-dim dot_general is not reliably lowered by Mosaic; single-batch einsums only.
    for h in range(N_HEADS):
        sl = slice(h * HEAD_DIM, (h + 1) * HEAD_DIM)
        qh = q[:, :, sl].astype(jnp.bfloat16)
        kh = k[:, :, sl].astype(jnp.bfloat16)
        vh = v[:, :, sl].astype(jnp.bfloat16)
        s = jnp.einsum('bqd,bkd->bqk', qh, kh,
                       preferred_element_type=jnp.float32) * scale + bias
        m = jnp.max(s, axis=-1, keepdims=True)                       # softmax in f32
        e = jnp.exp(s - m)
        p = e * pl.reciprocal(jnp.sum(e, axis=-1, keepdims=True), approx=True)
        ctx = jnp.einsum('bqk,bkd->bqd', p.astype(jnp.bfloat16), vh,
                         preferred_element_type=jnp.float32).reshape(B * S, HEAD_DIM)
        attn = attn + jnp.dot(ctx.astype(jnp.bfloat16), wo[sl, :],
                              preferred_element_type=jnp.float32)

    # TODO(synk): dropout layers skipped (eval-mode forward; dropout is identity at inference).
    h1 = _layernorm(xf + attn, l1g_ref[0], l1b_ref[0])
    ff = _gelu(jnp.dot(h1.astype(jnp.bfloat16), wi_ref[0],
                       preferred_element_type=jnp.float32) + bi_ref[0])
    ff2 = jnp.dot(ff.astype(jnp.bfloat16), wf_ref[0],
                  preferred_element_type=jnp.float32) + bf_ref[0]
    out = _layernorm(h1 + ff2, l2g_ref[0], l2b_ref[0])               # (B*S, H) f32
    x_ref[...] = out.reshape(B, S, H)

    # ---------- classifier + token-level CE loss (last grid step only) ----------
    @pl.when(l == n_layers - 1)
    def _():
        logits2 = jnp.dot(out.astype(jnp.bfloat16), cw_ref[...],
                          preferred_element_type=jnp.float32) + cb_ref[...]
        logits = logits2.reshape(B, S, PAD_LABELS)
        logits_ref[...] = logits                                     # lane-dense padded store

        labels = labels_ref[...]                                     # (B, S) int32
        col = jax.lax.broadcasted_iota(jnp.int32, (B, S, PAD_LABELS), 2)
        masked = jnp.where(col < NUM_LABELS, logits, -1e9)           # exclude pad cols from LSE
        m = jnp.max(masked, axis=-1, keepdims=True)
        lse = (m + jnp.log(jnp.sum(jnp.exp(masked - m), axis=-1, keepdims=True)))[:, :, 0]
        picked = jnp.sum(jnp.where(col == labels[:, :, None], masked, 0.0), axis=-1)
        valid = (labels != -100).astype(jnp.float32)                 # CrossEntropyLoss ignore_index
        nll = (lse - picked) * valid
        loss_ref[0, 0] = jnp.sum(nll) / jnp.maximum(jnp.sum(valid), 1.0)


# ---------------- wrapper ----------------
def bert_forward(params, input_ids, attention_mask, labels):
    B, S = input_ids.shape
    pos = params['pos_emb'][:S]                                      # (S, H)
    type0 = params['type_emb'][0:1]                                  # (1, H)

    def fixed2(shape):
        return pl.BlockSpec(shape, lambda l: (0, 0))

    def fixed3(shape):
        return pl.BlockSpec(shape, lambda l: (0, 0, 0))

    def per_layer(shape):
        return pl.BlockSpec((1,) + shape, lambda l: (l, 0, 0))

    in_specs = [
        fixed2((B, S)), fixed2((B, S)), fixed2((B, S)),              # ids, mask, labels
        fixed2((VOCAB, HIDDEN)), fixed2((S, HIDDEN)), fixed2((1, HIDDEN)),
        fixed2((1, HIDDEN)), fixed2((1, HIDDEN)),                    # emb LN g/b
        per_layer((HIDDEN, 3 * HIDDEN)), per_layer((1, 3 * HIDDEN)),  # fused Wqkv, bqkv
        per_layer((HIDDEN, HIDDEN)), per_layer((1, HIDDEN)),         # Wo, bo
        per_layer((1, HIDDEN)), per_layer((1, HIDDEN)),              # LN1 g/b
        per_layer((HIDDEN, INTERMEDIATE)), per_layer((1, INTERMEDIATE)),  # Wi, bi
        per_layer((INTERMEDIATE, HIDDEN)), per_layer((1, HIDDEN)),        # Wf, bf
        per_layer((1, HIDDEN)), per_layer((1, HIDDEN)),              # LN2 g/b
        fixed2((HIDDEN, PAD_LABELS)), fixed2((1, PAD_LABELS)),       # classifier W, b (padded)
    ]
    out_specs = (
        fixed3((B, S, PAD_LABELS)),                                  # padded logits (lane-dense)
        pl.BlockSpec(memory_space=pltpu.MemorySpace.SMEM),           # scalar loss in SMEM
    )
    grid_spec = pltpu.PrefetchScalarGridSpec(
        num_scalar_prefetch=0,
        grid=(N_LAYERS,),
        in_specs=in_specs,
        out_specs=out_specs,
        scratch_shapes=[pltpu.VMEM((B, S, HIDDEN), jnp.float32)],    # resident hidden state
    )
    logits_pad, loss = pl.pallas_call(
        bert_fused_kernel,
        grid_spec=grid_spec,
        out_shape=(jax.ShapeDtypeStruct((B, S, PAD_LABELS), jnp.float32),
                   jax.ShapeDtypeStruct((1, 1), jnp.float32)),
        compiler_params=pltpu.CompilerParams(
            # Layer axis carries the hidden state -> sequential ("arbitrary").
            # TODO(synk): at real bert-base scale add a "parallel" batch/seq grid axis and
            # re-derive tiling / vmem_limit_bytes for the 64 MiB v7x VMEM budget.
            dimension_semantics=("arbitrary",)),
    )(input_ids, attention_mask, labels,
      params['word_emb'], pos, type0, params['emb_ln_g'], params['emb_ln_b'],
      params['wqkv'], params['bqkv'], params['wo'], params['bo'],
      params['ln1_g'], params['ln1_b'], params['wi'], params['bi'],
      params['wf'], params['bf'], params['ln2_g'], params['ln2_b'],
      params['cls_w'], params['cls_b'])
    return loss[0, 0], logits_pad[:, :, :NUM_LABELS]


# ---------------- parameters (deterministic synthetic init) ----------------
def init_params(key):
    keys = jax.random.split(key, 16)
    it = iter(keys)

    def nrm(shape):
        return (0.02 * jax.random.normal(next(it), shape)).astype(jnp.float32)

    def nrm_bf16(shape):
        # bf16 MXU operands -> native MXU path + half the per-layer weight DMA bytes
        return nrm(shape).astype(jnp.bfloat16)

    cls_w = jnp.zeros((HIDDEN, PAD_LABELS), jnp.float32)
    cls_w = cls_w.at[:, :NUM_LABELS].set(
        0.02 * jax.random.normal(next(it), (HIDDEN, NUM_LABELS)))

    return {
        'word_emb': nrm((VOCAB, HIDDEN)),                # kept f32: exact embedding lookup
        'pos_emb': nrm((MAX_POS, HIDDEN)),
        'type_emb': nrm((2, HIDDEN)),
        'emb_ln_g': jnp.ones((1, HIDDEN), jnp.float32),
        'emb_ln_b': jnp.zeros((1, HIDDEN), jnp.float32),
        # fused Q/K/V projection: one (H, 3H) matmul per layer
        'wqkv': nrm_bf16((N_LAYERS, HIDDEN, 3 * HIDDEN)),
        'bqkv': jnp.zeros((N_LAYERS, 1, 3 * HIDDEN), jnp.float32),
        'wo': nrm_bf16((N_LAYERS, HIDDEN, HIDDEN)),
        'bo': jnp.zeros((N_LAYERS, 1, HIDDEN), jnp.float32),
        'ln1_g': jnp.ones((N_LAYERS, 1, HIDDEN), jnp.float32),
        'ln1_b': jnp.zeros((N_LAYERS, 1, HIDDEN), jnp.float32),
        'wi': nrm_bf16((N_LAYERS, HIDDEN, INTERMEDIATE)),
        'bi': jnp.zeros((N_LAYERS, 1, INTERMEDIATE), jnp.float32),
        'wf': nrm_bf16((N_LAYERS, INTERMEDIATE, HIDDEN)),
        'bf': jnp.zeros((N_LAYERS, 1, HIDDEN), jnp.float32),
        'ln2_g': jnp.ones((N_LAYERS, 1, HIDDEN), jnp.float32),
        'ln2_b': jnp.zeros((N_LAYERS, 1, HIDDEN), jnp.float32),
        'cls_w': cls_w.astype(jnp.bfloat16),             # zero-padded to PAD_LABELS lanes
        'cls_b': jnp.zeros((1, PAD_LABELS), jnp.float32),
    }


if __name__ == "__main__":
    key = jax.random.PRNGKey(0)
    pkey, ikey, lkey = jax.random.split(key, 3)
    params = init_params(pkey)

    input_ids = jax.random.randint(ikey, (BATCH, SEQ), 0, VOCAB, dtype=jnp.int32)
    mask = jnp.ones((BATCH, SEQ), jnp.int32).at[:, SEQ - 2:].set(0)
    labels = jax.random.randint(lkey, (BATCH, SEQ), 0, NUM_LABELS, dtype=jnp.int32)
    labels = labels.at[:, SEQ - 2:].set(-100)            # exercise ignore_index like HF loss

    fwd = jax.jit(bert_forward)
    loss, logits = fwd(params, input_ids, mask, labels)
    jax.block_until_ready((loss, logits))
    assert logits.shape == (BATCH, SEQ, NUM_LABELS)
    assert bool(jnp.isfinite(loss))
    print("KERNEL_OK")
</pallas_src>

<mosaic_0001>
module attributes {stable_mosaic.version = 11 : i64} {
  func.func @bert_fused_kernel(%arg0: i32, %arg1: memref<2x8xi32, #tpu.memory_space<vmem>>, %arg2: memref<2x8xi32, #tpu.memory_space<vmem>>, %arg3: memref<2x8xi32, #tpu.memory_space<vmem>>, %arg4: memref<128x128xf32, #tpu.memory_space<vmem>>, %arg5: memref<8x128xf32, #tpu.memory_space<vmem>>, %arg6: memref<1x128xf32, #tpu.memory_space<vmem>>, %arg7: memref<1x128xf32, #tpu.memory_space<vmem>>, %arg8: memref<1x128xf32, #tpu.memory_space<vmem>>, %arg9: memref<1x128x384xbf16, #tpu.memory_space<vmem>>, %arg10: memref<1x1x384xf32, #tpu.memory_space<vmem>>, %arg11: memref<1x128x128xbf16, #tpu.memory_space<vmem>>, %arg12: memref<1x1x128xf32, #tpu.memory_space<vmem>>, %arg13: memref<1x1x128xf32, #tpu.memory_space<vmem>>, %arg14: memref<1x1x128xf32, #tpu.memory_space<vmem>>, %arg15: memref<1x128x256xbf16, #tpu.memory_space<vmem>>, %arg16: memref<1x1x256xf32, #tpu.memory_space<vmem>>, %arg17: memref<1x256x128xbf16, #tpu.memory_space<vmem>>, %arg18: memref<1x1x128xf32, #tpu.memory_space<vmem>>, %arg19: memref<1x1x128xf32, #tpu.memory_space<vmem>>, %arg20: memref<1x1x128xf32, #tpu.memory_space<vmem>>, %arg21: memref<128x128xbf16, #tpu.memory_space<vmem>>, %arg22: memref<1x128xf32, #tpu.memory_space<vmem>>, %arg23: memref<2x8x128xf32, #tpu.memory_space<vmem>>, %arg24: memref<1x1xf32, #tpu.memory_space<smem>>, %arg25: memref<2x8x128xf32, #tpu.memory_space<vmem>>) attributes {dimension_semantics = [#tpu.dimension_semantics<arbitrary>], iteration_bounds = array<i64: 2>, scalar_prefetch = 0 : i64, scratch_operands = 1 : i64, tpu.core_type = #tpu.core_type<tc>, window_params = [{pipeline_mode = #tpu.pipeline_mode<synchronous>, transform_indices = @transform_0, window_bounds = array<i64: 2, 8>}, {pipeline_mode = #tpu.pipeline_mode<synchronous>, transform_indices = @transform_1, window_bounds = array<i64: 2, 8>}, {pipeline_mode = #tpu.pipeline_mode<synchronous>, transform_indices = @transform_2, window_bounds = array<i64: 2, 8>}, {pipeline_mode = #tpu.pipeline_mode<synchronous>, transform_indices = @transform_3, window_bounds = array<i64: 128, 128>}, {pipeline_mode = #tpu.pipeline_mode<synchronous>, transform_indices = @transform_4, window_bounds = array<i64: 8, 128>}, {pipeline_mode = #tpu.pipeline_mode<synchronous>, transform_indices = @transform_5, window_bounds = array<i64: 1, 128>}, {pipeline_mode = #tpu.pipeline_mode<synchronous>, transform_indices = @transform_6, window_bounds = array<i64: 1, 128>}, {pipeline_mode = #tpu.pipeline_mode<synchronous>, transform_indices = @transform_7, window_bounds = array<i64: 1, 128>}, {transform_indices = @transform_8, window_bounds = array<i64: 1, 128, 384>}, {transform_indices = @transform_9, window_bounds = array<i64: 1, 1, 384>}, {transform_indices = @transform_10, window_bounds = array<i64: 1, 128, 128>}, {transform_indices = @transform_11, window_bounds = array<i64: 1, 1, 128>}, {transform_indices = @transform_12, window_bounds = array<i64: 1, 1, 128>}, {transform_indices = @transform_13, window_bounds = array<i64: 1, 1, 128>}, {transform_indices = @transform_14, window_bounds = array<i64: 1, 128, 256>}, {transform_indices = @transform_15, window_bounds = array<i64: 1, 1, 256>}, {transform_indices = @transform_16, window_bounds = array<i64: 1, 256, 128>}, {transform_indices = @transform_17, window_bounds = array<i64: 1, 1, 128>}, {transform_indices = @transform_18, window_bounds = array<i64: 1, 1, 128>}, {transform_indices = @transform_19, window_bounds = array<i64: 1, 1, 128>}, {pipeline_mode = #tpu.pipeline_mode<synchronous>, transform_indices = @transform_20, window_bounds = array<i64: 128, 128>}, {pipeline_mode = #tpu.pipeline_mode<synchronous>, transform_indices = @transform_21, window_bounds = array<i64: 1, 128>}, {pipeline_mode = #tpu.pipeline_mode<synchronous>, transform_indices = @transform_22, window_bounds = array<i64: 2, 8, 128>}, {transform_indices = @transform_23, window_bounds = array<i64: 1, 1>}]} {
    %c0_i32 = arith.constant 0 : i32
    %0 = arith.cmpi eq, %arg0, %c0_i32 : i32
    %1 = arith.extui %0 : i1 to i32
    %c0_i32_0 = arith.constant 0 : i32
    %2 = arith.cmpi ne, %1, %c0_i32_0 : i32
    scf.if %2 {
      %c0_76 = arith.constant 0 : index
      %c0_77 = arith.constant 0 : index
      %177 = vector.load %arg1[%c0_76, %c0_77] : memref<2x8xi32, #tpu.memory_space<vmem>>, vector<2x8xi32>
      %178 = tpu.iota {dimensions = array<i32: 2>} : vector<2x8x128xi32>
      %179 = vector.shape_cast %177 : vector<2x8xi32> to vector<2x8x1xi32>
      %180 = vector.broadcast %179 : vector<2x8x1xi32> to vector<2x8x128xi32>
      %181 = arith.cmpi eq, %178, %180 : vector<2x8x128xi32>
      %182 = arith.extui %181 : vector<2x8x128xi1> to vector<2x8x128xi32>
      %183 = arith.sitofp %182 : vector<2x8x128xi32> to vector<2x8x128xf32>
      %184 = vector.shape_cast %183 : vector<2x8x128xf32> to vector<16x128xf32>
      %c0_78 = arith.constant 0 : index
      %c0_79 = arith.constant 0 : index
      %185 = vector.load %arg4[%c0_78, %c0_79] : memref<128x128xf32, #tpu.memory_space<vmem>>, vector<128x128xf32>
      %cst_80 = arith.constant dense<0.000000e+00> : vector<16x128xf32>
      %186 = tpu.matmul %184, %185, %cst_80 {dimension_numbers = #tpu.dot_dimension_numbers<[1], [0], [0], [1], [0, 0, 1, 1], [], []>} : vector<16x128xf32>, vector<128x128xf32>, vector<16x128xf32> -> vector<16x128xf32>
      %187 = vector.shape_cast %186 : vector<16x128xf32> to vector<2x8x128xf32>
      %c0_81 = arith.constant 0 : index
      %c0_82 = arith.constant 0 : index
      %188 = vector.load %arg5[%c0_81, %c0_82] : memref<8x128xf32, #tpu.memory_space<vmem>>, vector<8x128xf32>
      %189 = vector.shape_cast %188 : vector<8x128xf32> to vector<1x8x128xf32>
      %190 = vector.broadcast %189 : vector<1x8x128xf32> to vector<2x8x128xf32>
      %191 = arith.addf %187, %190 : vector<2x8x128xf32>
      %c0_83 = arith.constant 0 : index
      %c0_84 = arith.constant 0 : index
      %192 = vector.load %arg6[%c0_83, %c0_84] : memref<1x128xf32, #tpu.memory_space<vmem>>, vector<1x128xf32>
      %193 = vector.shape_cast %192 : vector<1x128xf32> to vector<1x1x128xf32>
      %194 = vector.broadcast %193 : vector<1x1x128xf32> to vector<2x8x128xf32>
      %195 = arith.addf %191, %194 : vector<2x8x128xf32>
      %c0_85 = arith.constant 0 : index
      %c0_86 = arith.constant 0 : index
      %196 = vector.load %arg7[%c0_85, %c0_86] : memref<1x128xf32, #tpu.memory_space<vmem>>, vector<1x128xf32>
      %c0_87 = arith.constant 0 : index
      %c0_88 = arith.constant 0 : index
      %197 = vector.load %arg8[%c0_87, %c0_88] : memref<1x128xf32, #tpu.memory_space<vmem>>, vector<1x128xf32>
      %cst_89 = arith.constant dense<0.000000e+00> : vector<2x8xf32>
      %198 = vector.multi_reduction <add>, %195, %cst_89 [2] : vector<2x8x128xf32> to vector<2x8xf32>
      %199 = vector.shape_cast %198 : vector<2x8xf32> to vector<2x8x1xf32>
      %cst_90 = arith.constant 1.280000e+02 : f32
      %200 = vector.broadcast %cst_90 : f32 to vector<2x8x1xf32>
      %201 = arith.divf %199, %200 : vector<2x8x1xf32>
      %202 = vector.broadcast %201 : vector<2x8x1xf32> to vector<2x8x128xf32>
      %203 = arith.subf %195, %202 : vector<2x8x128xf32>
      %204 = arith.mulf %203, %203 : vector<2x8x128xf32>
      %cst_91 = arith.constant dense<0.000000e+00> : vector<2x8xf32>
      %205 = vector.multi_reduction <add>, %204, %cst_91 [2] : vector<2x8x128xf32> to vector<2x8xf32>
      %206 = vector.shape_cast %205 : vector<2x8xf32> to vector<2x8x1xf32>
      %cst_92 = arith.constant 1.280000e+02 : f32
      %207 = vector.broadcast %cst_92 : f32 to vector<2x8x1xf32>
      %208 = arith.divf %206, %207 : vector<2x8x1xf32>
      %209 = vector.broadcast %201 : vector<2x8x1xf32> to vector<2x8x128xf32>
      %210 = arith.subf %195, %209 : vector<2x8x128xf32>
      %cst_93 = arith.constant 9.99999996E-13 : f32
      %211 = vector.broadcast %cst_93 : f32 to vector<2x8x1xf32>
      %212 = arith.addf %208, %211 : vector<2x8x1xf32>
      %213 = math.rsqrt %212 : vector<2x8x1xf32>
      %214 = vector.broadcast %213 : vector<2x8x1xf32> to vector<2x8x128xf32>
      %215 = arith.mulf %210, %214 : vector<2x8x128xf32>
      %216 = vector.shape_cast %196 : vector<1x128xf32> to vector<1x1x128xf32>
      %217 = vector.broadcast %216 : vector<1x1x128xf32> to vector<2x8x128xf32>
      %218 = arith.mulf %215, %217 : vector<2x8x128xf32>
      %219 = vector.shape_cast %197 : vector<1x128xf32> to vector<1x1x128xf32>
      %220 = vector.broadcast %219 : vector<1x1x128xf32> to vector<2x8x128xf32>
      %221 = arith.addf %218, %220 : vector<2x8x128xf32>
      %c0_94 = arith.constant 0 : index
      %c0_95 = arith.constant 0 : index
      %c0_96 = arith.constant 0 : index
      %222 = vector.load %arg25[%c0_94, %c0_95, %c0_96] : memref<2x8x128xf32, #tpu.memory_space<vmem>>, vector<2x8x128xf32>
      tpu.vector_store %arg25[%c0_94, %c0_95, %c0_96], %221 {strides = array<i32>} : memref<2x8x128xf32, #tpu.memory_space<vmem>>, vector<2x8x128xf32>,
    } else {
    }
    %c0 = arith.constant 0 : index
    %c0_1 = arith.constant 0 : index
    %c0_2 = arith.constant 0 : index
    %3 = vector.load %arg25[%c0, %c0_1, %c0_2] : memref<2x8x128xf32, #tpu.memory_space<vmem>>, vector<2x8x128xf32>
    %4 = vector.shape_cast %3 : vector<2x8x128xf32> to vector<16x128xf32>
    %5 = arith.truncf %4 : vector<16x128xf32> to vector<16x128xbf16>
    %c0_3 = arith.constant 0 : index
    %c0_4 = arith.constant 0 : index
    %6 = vector.load %arg2[%c0_3, %c0_4] : memref<2x8xi32, #tpu.memory_space<vmem>>, vector<2x8xi32>
    %7 = arith.sitofp %6 : vector<2x8xi32> to vector<2x8xf32>
    %cst = arith.constant 1.000000e+00 : f32
    %8 = vector.broadcast %cst : f32 to vector<2x8xf32>
    %9 = arith.subf %8, %7 : vector<2x8xf32>
    %cst_5 = arith.constant -1.000000e+04 : f32
    %10 = vector.broadcast %cst_5 : f32 to vector<2x8xf32>
    %11 = arith.mulf %9, %10 : vector<2x8xf32>
    %12 = vector.shape_cast %11 : vector<2x8xf32> to vector<2x1x8xf32>
    %c0_6 = arith.constant 0 : index
    %c0_7 = arith.constant 0 : index
    %c0_8 = arith.constant 0 : index
    %13 = vector.load %arg9[%c0_6, %c0_7, %c0_8] : memref<1x128x384xbf16, #tpu.memory_space<vmem>>, vector<1x128x384xbf16>
    %14 = vector.shape_cast %13 : vector<1x128x384xbf16> to vector<128x384xbf16>
    %cst_9 = arith.constant dense<0.000000e+00> : vector<16x384xf32>
    %15 = tpu.matmul %5, %14, %cst_9 {dimension_numbers = #tpu.dot_dimension_numbers<[1], [0], [0], [1], [0, 0, 1, 1], [], []>} : vector<16x128xbf16>, vector<128x384xbf16>, vector<16x384xf32> -> vector<16x384xf32>
    %c0_10 = arith.constant 0 : index
    %c0_11 = arith.constant 0 : index
    %c0_12 = arith.constant 0 : index
    %16 = vector.load %arg10[%c0_10, %c0_11, %c0_12] : memref<1x1x384xf32, #tpu.memory_space<vmem>>, vector<1x1x384xf32>
    %17 = vector.shape_cast %16 : vector<1x1x384xf32> to vector<1x384xf32>
    %18 = vector.broadcast %17 : vector<1x384xf32> to vector<16x384xf32>
    %19 = arith.addf %15, %18 : vector<16x384xf32>
    %20 = vector.extract_strided_slice %19 {offsets = [0, 0], sizes = [16, 128], strides = [1, 1]} : vector<16x384xf32> to vector<16x128xf32>
    %21 = vector.shape_cast %20 : vector<16x128xf32> to vector<2x8x128xf32>
    %22 = vector.extract_strided_slice %19 {offsets = [0, 128], sizes = [16, 128], strides = [1, 1]} : vector<16x384xf32> to vector<16x128xf32>
    %23 = vector.shape_cast %22 : vector<16x128xf32> to vector<2x8x128xf32>
    %24 = vector.extract_strided_slice %19 {offsets = [0, 256], sizes = [16, 128], strides = [1, 1]} : vector<16x384xf32> to vector<16x128xf32>
    %25 = vector.shape_cast %24 : vector<16x128xf32> to vector<2x8x128xf32>
    %c0_13 = arith.constant 0 : index
    %c0_14 = arith.constant 0 : index
    %c0_15 = arith.constant 0 : index
    %26 = vector.load %arg11[%c0_13, %c0_14, %c0_15] : memref<1x128x128xbf16, #tpu.memory_space<vmem>>, vector<1x128x128xbf16>
    %27 = vector.shape_cast %26 : vector<1x128x128xbf16> to vector<128x128xbf16>
    %cst_16 = arith.constant 0.000000e+00 : f32
    %28 = vector.broadcast %cst_16 : f32 to vector<16x128xf32>
    %c0_17 = arith.constant 0 : index
    %c0_18 = arith.constant 0 : index
    %c0_19 = arith.constant 0 : index
    %29 = vector.load %arg12[%c0_17, %c0_18, %c0_19] : memref<1x1x128xf32, #tpu.memory_space<vmem>>, vector<1x1x128xf32>
    %30 = vector.shape_cast %29 : vector<1x1x128xf32> to vector<1x128xf32>
    %31 = vector.broadcast %30 : vector<1x128xf32> to vector<16x128xf32>
    %32 = arith.addf %28, %31 : vector<16x128xf32>
    %33 = vector.extract_strided_slice %21 {offsets = [0, 0, 0], sizes = [2, 8, 64], strides = [1, 1, 1]} : vector<2x8x128xf32> to vector<2x8x64xf32>
    %34 = arith.truncf %33 : vector<2x8x64xf32> to vector<2x8x64xbf16>
    %35 = vector.extract_strided_slice %23 {offsets = [0, 0, 0], sizes = [2, 8, 64], strides = [1, 1, 1]} : vector<2x8x128xf32> to vector<2x8x64xf32>
    %36 = arith.truncf %35 : vector<2x8x64xf32> to vector<2x8x64xbf16>
    %37 = vector.extract_strided_slice %25 {offsets = [0, 0, 0], sizes = [2, 8, 64], strides = [1, 1, 1]} : vector<2x8x128xf32> to vector<2x8x64xf32>
    %38 = arith.truncf %37 : vector<2x8x64xf32> to vector<2x8x64xbf16>
    "tpu.trace_start"() <{level = 10 : i32, message = "bqd,bkd->bqk"}> : () -> ()
    %cst_20 = arith.constant dense<0.000000e+00> : vector<2x8x8xf32>
    %39 = tpu.matmul %34, %36, %cst_20 {dimension_numbers = #tpu.dot_dimension_numbers<[2], [2], [1], [1], [0, 0, 0, 1, 1, 1], [0], [0]>} : vector<2x8x64xbf16>, vector<2x8x64xbf16>, vector<2x8x8xf32> -> vector<2x8x8xf32>
    "tpu.trace_stop"() : () -> ()
    %cst_21 = arith.constant 1.250000e-01 : f32
    %40 = vector.broadcast %cst_21 : f32 to vector<2x8x8xf32>
    %41 = arith.mulf %39, %40 : vector<2x8x8xf32>
    %42 = vector.broadcast %12 : vector<2x1x8xf32> to vector<2x8x8xf32>
    %43 = arith.addf %41, %42 : vector<2x8x8xf32>
    %cst_22 = arith.constant dense<0xFF800000> : vector<2x8xf32>
    %44 = vector.multi_reduction <maximumf>, %43, %cst_22 [2] : vector<2x8x8xf32> to vector<2x8xf32>
    %45 = vector.shape_cast %44 : vector<2x8xf32> to vector<2x8x1xf32>
    %46 = vector.broadcast %45 : vector<2x8x1xf32> to vector<2x8x8xf32>
    %47 = arith.subf %43, %46 : vector<2x8x8xf32>
    %48 = math.exp %47 : vector<2x8x8xf32>
    %cst_23 = arith.constant dense<0.000000e+00> : vector<2x8xf32>
    %49 = vector.multi_reduction <add>, %48, %cst_23 [2] : vector<2x8x8xf32> to vector<2x8xf32>
    %50 = vector.shape_cast %49 : vector<2x8xf32> to vector<2x8x1xf32>
    %51 = tpu.reciprocal %50 {approx = true} : vector<2x8x1xf32> -> vector<2x8x1xf32>
    %52 = vector.broadcast %51 : vector<2x8x1xf32> to vector<2x8x8xf32>
    %53 = arith.mulf %48, %52 : vector<2x8x8xf32>
    %54 = arith.truncf %53 : vector<2x8x8xf32> to vector<2x8x8xbf16>
    "tpu.trace_start"() <{level = 10 : i32, message = "bqk,bkd->bqd"}> : () -> ()
    %cst_24 = arith.constant dense<0.000000e+00> : vector<2x8x64xf32>
    %55 = tpu.matmul %54, %38, %cst_24 {dimension_numbers = #tpu.dot_dimension_numbers<[2], [1], [1], [2], [0, 0, 0, 1, 1, 2], [0], [0]>} : vector<2x8x8xbf16>, vector<2x8x64xbf16>, vector<2x8x64xf32> -> vector<2x8x64xf32>
    "tpu.trace_stop"() : () -> ()
    %56 = vector.shape_cast %55 : vector<2x8x64xf32> to vector<16x64xf32>
    %57 = arith.truncf %56 : vector<16x64xf32> to vector<16x64xbf16>
    %58 = vector.extract_strided_slice %27 {offsets = [0, 0], sizes = [64, 128], strides = [1, 1]} : vector<128x128xbf16> to vector<64x128xbf16>
    %cst_25 = arith.constant dense<0.000000e+00> : vector<16x128xf32>
    %59 = tpu.matmul %57, %58, %cst_25 {dimension_numbers = #tpu.dot_dimension_numbers<[1], [0], [0], [1], [0, 0, 1, 1], [], []>} : vector<16x64xbf16>, vector<64x128xbf16>, vector<16x128xf32> -> vector<16x128xf32>
    %60 = arith.addf %32, %59 : vector<16x128xf32>
    %61 = vector.extract_strided_slice %21 {offsets = [0, 0, 64], sizes = [2, 8, 64], strides = [1, 1, 1]} : vector<2x8x128xf32> to vector<2x8x64xf32>
    %62 = arith.truncf %61 : vector<2x8x64xf32> to vector<2x8x64xbf16>
    %63 = vector.extract_strided_slice %23 {offsets = [0, 0, 64], sizes = [2, 8, 64], strides = [1, 1, 1]} : vector<2x8x128xf32> to vector<2x8x64xf32>
    %64 = arith.truncf %63 : vector<2x8x64xf32> to vector<2x8x64xbf16>
    %65 = vector.extract_strided_slice %25 {offsets = [0, 0, 64], sizes = [2, 8, 64], strides = [1, 1, 1]} : vector<2x8x128xf32> to vector<2x8x64xf32>
    %66 = arith.truncf %65 : vector<2x8x64xf32> to vector<2x8x64xbf16>
    "tpu.trace_start"() <{level = 10 : i32, message = "bqd,bkd->bqk"}> : () -> ()
    %cst_26 = arith.constant dense<0.000000e+00> : vector<2x8x8xf32>
    %67 = tpu.matmul %62, %64, %cst_26 {dimension_numbers = #tpu.dot_dimension_numbers<[2], [2], [1], [1], [0, 0, 0, 1, 1, 1], [0], [0]>} : vector<2x8x64xbf16>, vector<2x8x64xbf16>, vector<2x8x8xf32> -> vector<2x8x8xf32>
    "tpu.trace_stop"() : () -> ()
    %cst_27 = arith.constant 1.250000e-01 : f32
    %68 = vector.broadcast %cst_27 : f32 to vector<2x8x8xf32>
    %69 = arith.mulf %67, %68 : vector<2x8x8xf32>
    %70 = vector.broadcast %12 : vector<2x1x8xf32> to vector<2x8x8xf32>
    %71 = arith.addf %69, %70 : vector<2x8x8xf32>
    %cst_28 = arith.constant dense<0xFF800000> : vector<2x8xf32>
    %72 = vector.multi_reduction <maximumf>, %71, %cst_28 [2] : vector<2x8x8xf32> to vector<2x8xf32>
    %73 = vector.shape_cast %72 : vector<2x8xf32> to vector<2x8x1xf32>
    %74 = vector.broadcast %73 : vector<2x8x1xf32> to vector<2x8x8xf32>
    %75 = arith.subf %71, %74 : vector<2x8x8xf32>
    %76 = math.exp %75 : vector<2x8x8xf32>
    %cst_29 = arith.constant dense<0.000000e+00> : vector<2x8xf32>
    %77 = vector.multi_reduction <add>, %76, %cst_29 [2] : vector<2x8x8xf32> to vector<2x8xf32>
    %78 = vector.shape_cast %77 : vector<2x8xf32> to vector<2x8x1xf32>
    %79 = tpu.reciprocal %78 {approx = true} : vector<2x8x1xf32> -> vector<2x8x1xf32>
    %80 = vector.broadcast %79 : vector<2x8x1xf32> to vector<2x8x8xf32>
    %81 = arith.mulf %76, %80 : vector<2x8x8xf32>
    %82 = arith.truncf %81 : vector<2x8x8xf32> to vector<2x8x8xbf16>
    "tpu.trace_start"() <{level = 10 : i32, message = "bqk,bkd->bqd"}> : () -> ()
    %cst_30 = arith.constant dense<0.000000e+00> : vector<2x8x64xf32>
    %83 = tpu.matmul %82, %66, %cst_30 {dimension_numbers = #tpu.dot_dimension_numbers<[2], [1], [1], [2], [0, 0, 0, 1, 1, 2], [0], [0]>} : vector<2x8x8xbf16>, vector<2x8x64xbf16>, vector<2x8x64xf32> -> vector<2x8x64xf32>
    "tpu.trace_stop"() : () -> ()
    %84 = vector.shape_cast %83 : vector<2x8x64xf32> to vector<16x64xf32>
    %85 = arith.truncf %84 : vector<16x64xf32> to vector<16x64xbf16>
    %86 = vector.extract_strided_slice %27 {offsets = [64, 0], sizes = [64, 128], strides = [1, 1]} : vector<128x128xbf16> to vector<64x128xbf16>
    %cst_31 = arith.constant dense<0.000000e+00> : vector<16x128xf32>
    %87 = tpu.matmul %85, %86, %cst_31 {dimension_numbers = #tpu.dot_dimension_numbers<[1], [0], [0], [1], [0, 0, 1, 1], [], []>} : vector<16x64xbf16>, vector<64x128xbf16>, vector<16x128xf32> -> vector<16x128xf32>
    %88 = arith.addf %60, %87 : vector<16x128xf32>
    %89 = arith.addf %4, %88 : vector<16x128xf32>
    %c0_32 = arith.constant 0 : index
    %c0_33 = arith.constant 0 : index
    %c0_34 = arith.constant 0 : index
    %90 = vector.load %arg13[%c0_32, %c0_33, %c0_34] : memref<1x1x128xf32, #tpu.memory_space<vmem>>, vector<1x1x128xf32>
    %91 = vector.shape_cast %90 : vector<1x1x128xf32> to vector<1x128xf32>
    %c0_35 = arith.constant 0 : index
    %c0_36 = arith.constant 0 : index
    %c0_37 = arith.constant 0 : index
    %92 = vector.load %arg14[%c0_35, %c0_36, %c0_37] : memref<1x1x128xf32, #tpu.memory_space<vmem>>, vector<1x1x128xf32>
    %93 = vector.shape_cast %92 : vector<1x1x128xf32> to vector<1x128xf32>
    %cst_38 = arith.constant dense<0.000000e+00> : vector<16xf32>
    %94 = vector.multi_reduction <add>, %89, %cst_38 [1] : vector<16x128xf32> to vector<16xf32>
    %95 = vector.shape_cast %94 : vector<16xf32> to vector<16x1xf32>
    %cst_39 = arith.constant 1.280000e+02 : f32
    %96 = vector.broadcast %cst_39 : f32 to vector<16x1xf32>
    %97 = arith.divf %95, %96 : vector<16x1xf32>
    %98 = vector.broadcast %97 : vector<16x1xf32> to vector<16x128xf32>
    %99 = arith.subf %89, %98 : vector<16x128xf32>
    %100 = arith.mulf %99, %99 : vector<16x128xf32>
    %cst_40 = arith.constant dense<0.000000e+00> : vector<16xf32>
    %101 = vector.multi_reduction <add>, %100, %cst_40 [1] : vector<16x128xf32> to vector<16xf32>
    %102 = vector.shape_cast %101 : vector<16xf32> to vector<16x1xf32>
    %cst_41 = arith.constant 1.280000e+02 : f32
    %103 = vector.broadcast %cst_41 : f32 to vector<16x1xf32>
    %104 = arith.divf %102, %103 : vector<16x1xf32>
    %105 = vector.broadcast %97 : vector<16x1xf32> to vector<16x128xf32>
    %106 = arith.subf %89, %105 : vector<16x128xf32>
    %cst_42 = arith.constant 9.99999996E-13 : f32
    %107 = vector.broadcast %cst_42 : f32 to vector<16x1xf32>
    %108 = arith.addf %104, %107 : vector<16x1xf32>
    %109 = math.rsqrt %108 : vector<16x1xf32>
    %110 = vector.broadcast %109 : vector<16x1xf32> to vector<16x128xf32>
    %111 = arith.mulf %106, %110 : vector<16x128xf32>
    %112 = vector.broadcast %91 : vector<1x128xf32> to vector<16x128xf32>
    %113 = arith.mulf %111, %112 : vector<16x128xf32>
    %114 = vector.broadcast %93 : vector<1x128xf32> to vector<16x128xf32>
    %115 = arith.addf %113, %114 : vector<16x128xf32>
    %116 = arith.truncf %115 : vector<16x128xf32> to vector<16x128xbf16>
    %c0_43 = arith.constant 0 : index
    %c0_44 = arith.constant 0 : index
    %c0_45 = arith.constant 0 : index
    %117 = vector.load %arg15[%c0_43, %c0_44, %c0_45] : memref<1x128x256xbf16, #tpu.memory_space<vmem>>, vector<1x128x256xbf16>
    %118 = vector.shape_cast %117 : vector<1x128x256xbf16> to vector<128x256xbf16>
    %cst_46 = arith.constant dense<0.000000e+00> : vector<16x256xf32>
    %119 = tpu.matmul %116, %118, %cst_46 {dimension_numbers = #tpu.dot_dimension_numbers<[1], [0], [0], [1], [0, 0, 1, 1], [], []>} : vector<16x128xbf16>, vector<128x256xbf16>, vector<16x256xf32> -> vector<16x256xf32>
    %c0_47 = arith.constant 0 : index
    %c0_48 = arith.constant 0 : index
    %c0_49 = arith.constant 0 : index
    %120 = vector.load %arg16[%c0_47, %c0_48, %c0_49] : memref<1x1x256xf32, #tpu.memory_space<vmem>>, vector<1x1x256xf32>
    %121 = vector.shape_cast %120 : vector<1x1x256xf32> to vector<1x256xf32>
    %122 = vector.broadcast %121 : vector<1x256xf32> to vector<16x256xf32>
    %123 = arith.addf %119, %122 : vector<16x256xf32>
    %cst_50 = arith.constant 5.000000e-01 : f32
    %124 = vector.broadcast %cst_50 : f32 to vector<16x256xf32>
    %125 = arith.mulf %124, %123 : vector<16x256xf32>
    %cst_51 = arith.constant 4.471500e-02 : f32
    %126 = vector.broadcast %cst_51 : f32 to vector<16x256xf32>
    %127 = arith.mulf %126, %123 : vector<16x256xf32>
    %128 = arith.mulf %127, %123 : vector<16x256xf32>
    %129 = arith.mulf %128, %123 : vector<16x256xf32>
    %130 = arith.addf %123, %129 : vector<16x256xf32>
    %cst_52 = arith.constant 0.797884583 : f32
    %131 = vector.broadcast %cst_52 : f32 to vector<16x256xf32>
    %132 = arith.mulf %131, %130 : vector<16x256xf32>
    %133 = math.tanh %132 : vector<16x256xf32>
    %cst_53 = arith.constant 1.000000e+00 : f32
    %134 = vector.broadcast %cst_53 : f32 to vector<16x256xf32>
    %135 = arith.addf %134, %133 : vector<16x256xf32>
    %136 = arith.mulf %125, %135 : vector<16x256xf32>
    %137 = arith.truncf %136 : vector<16x256xf32> to vector<16x256xbf16>
    %c0_54 = arith.constant 0 : index
    %c0_55 = arith.constant 0 : index
    %c0_56 = arith.constant 0 : index
    %138 = vector.load %arg17[%c0_54, %c0_55, %c0_56] : memref<1x256x128xbf16, #tpu.memory_space<vmem>>, vector<1x256x128xbf16>
    %139 = vector.shape_cast %138 : vector<1x256x128xbf16> to vector<256x128xbf16>
    %cst_57 = arith.constant dense<0.000000e+00> : vector<16x128xf32>
    %140 = tpu.matmul %137, %139, %cst_57 {dimension_numbers = #tpu.dot_dimension_numbers<[1], [0], [0], [1], [0, 0, 1, 1], [], []>} : vector<16x256xbf16>, vector<256x128xbf16>, vector<16x128xf32> -> vector<16x128xf32>
    %c0_58 = arith.constant 0 : index
    %c0_59 = arith.constant 0 : index
    %c0_60 = arith.constant 0 : index
    %141 = vector.load %arg18[%c0_58, %c0_59, %c0_60] : memref<1x1x128xf32, #tpu.memory_space<vmem>>, vector<1x1x128xf32>
    %142 = vector.shape_cast %141 : vector<1x1x128xf32> to vector<1x128xf32>
    %143 = vector.broadcast %142 : vector<1x128xf32> to vector<16x128xf32>
    %144 = arith.addf %140, %143 : vector<16x128xf32>
    %145 = arith.addf %115, %144 : vector<16x128xf32>
    %c0_61 = arith.constant 0 : index
    %c0_62 = arith.constant 0 : index
    %c0_63 = arith.constant 0 : index
    %146 = vector.load %arg19[%c0_61, %c0_62, %c0_63] : memref<1x1x128xf32, #tpu.memory_space<vmem>>, vector<1x1x128xf32>
    %147 = vector.shape_cast %146 : vector<1x1x128xf32> to vector<1x128xf32>
    %c0_64 = arith.constant 0 : index
    %c0_65 = arith.constant 0 : index
    %c0_66 = arith.constant 0 : index
    %148 = vector.load %arg20[%c0_64, %c0_65, %c0_66] : memref<1x1x128xf32, #tpu.memory_space<vmem>>, vector<1x1x128xf32>
    %149 = vector.shape_cast %148 : vector<1x1x128xf32> to vector<1x128xf32>
    %cst_67 = arith.constant dense<0.000000e+00> : vector<16xf32>
    %150 = vector.multi_reduction <add>, %145, %cst_67 [1] : vector<16x128xf32> to vector<16xf32>
    %151 = vector.shape_cast %150 : vector<16xf32> to vector<16x1xf32>
    %cst_68 = arith.constant 1.280000e+02 : f32
    %152 = vector.broadcast %cst_68 : f32 to vector<16x1xf32>
    %153 = arith.divf %151, %152 : vector<16x1xf32>
    %154 = vector.broadcast %153 : vector<16x1xf32> to vector<16x128xf32>
    %155 = arith.subf %145, %154 : vector<16x128xf32>
    %156 = arith.mulf %155, %155 : vector<16x128xf32>
    %cst_69 = arith.constant dense<0.000000e+00> : vector<16xf32>
    %157 = vector.multi_reduction <add>, %156, %cst_69 [1] : vector<16x128xf32> to vector<16xf32>
    %158 = vector.shape_cast %157 : vector<16xf32> to vector<16x1xf32>
    %cst_70 = arith.constant 1.280000e+02 : f32
    %159 = vector.broadcast %cst_70 : f32 to vector<16x1xf32>
    %160 = arith.divf %158, %159 : vector<16x1xf32>
    %161 = vector.broadcast %153 : vector<16x1xf32> to vector<16x128xf32>
    %162 = arith.subf %145, %161 : vector<16x128xf32>
    %cst_71 = arith.constant 9.99999996E-13 : f32
    %163 = vector.broadcast %cst_71 : f32 to vector<16x1xf32>
    %164 = arith.addf %160, %163 : vector<16x1xf32>
    %165 = math.rsqrt %164 : vector<16x1xf32>
    %166 = vector.broadcast %165 : vector<16x1xf32> to vector<16x128xf32>
    %167 = arith.mulf %162, %166 : vector<16x128xf32>
    %168 = vector.broadcast %147 : vector<1x128xf32> to vector<16x128xf32>
    %169 = arith.mulf %167, %168 : vector<16x128xf32>
    %170 = vector.broadcast %149 : vector<1x128xf32> to vector<16x128xf32>
    %171 = arith.addf %169, %170 : vector<16x128xf32>
    %172 = vector.shape_cast %171 : vector<16x128xf32> to vector<2x8x128xf32>
    %c0_72 = arith.constant 0 : index
    %c0_73 = arith.constant 0 : index
    %c0_74 = arith.constant 0 : index
    %173 = vector.load %arg25[%c0_72, %c0_73, %c0_74] : memref<2x8x128xf32, #tpu.memory_space<vmem>>, vector<2x8x128xf32>
    tpu.vector_store %arg25[%c0_72, %c0_73, %c0_74], %172 {strides = array<i32>} : memref<2x8x128xf32, #tpu.memory_space<vmem>>, vector<2x8x128xf32>,
    %c1_i32 = arith.constant 1 : i32
    %174 = arith.cmpi eq, %arg0, %c1_i32 : i32
    %175 = arith.extui %174 : i1 to i32
    %c0_i32_75 = arith.constant 0 : i32
    %176 = arith.cmpi ne, %175, %c0_i32_75 : i32
    scf.if %176 {
      %177 = arith.truncf %171 : vector<16x128xf32> to vector<16x128xbf16>
      %c0_76 = arith.constant 0 : index
      %c0_77 = arith.constant 0 : index
      %178 = vector.load %arg21[%c0_76, %c0_77] : memref<128x128xbf16, #tpu.memory_space<vmem>>, vector<128x128xbf16>
      %cst_78 = arith.constant dense<0.000000e+00> : vector<16x128xf32>
      %179 = tpu.matmul %177, %178, %cst_78 {dimension_numbers = #tpu.dot_dimension_numbers<[1], [0], [0], [1], [0, 0, 1, 1], [], []>} : vector<16x128xbf16>, vector<128x128xbf16>, vector<16x128xf32> -> vector<16x128xf32>
      %c0_79 = arith.constant 0 : index
      %c0_80 = arith.constant 0 : index
      %180 = vector.load %arg22[%c0_79, %c0_80] : memref<1x128xf32, #tpu.memory_space<vmem>>, vector<1x128xf32>
      %181 = vector.broadcast %180 : vector<1x128xf32> to vector<16x128xf32>
      %182 = arith.addf %179, %181 : vector<16x128xf32>
      %183 = vector.shape_cast %182 : vector<16x128xf32> to vector<2x8x128xf32>
      %c0_81 = arith.constant 0 : index
      %c0_82 = arith.constant 0 : index
      %c0_83 = arith.constant 0 : index
      %184 = vector.load %arg23[%c0_81, %c0_82, %c0_83] : memref<2x8x128xf32, #tpu.memory_space<vmem>>, vector<2x8x128xf32>
      tpu.vector_store %arg23[%c0_81, %c0_82, %c0_83], %183 {strides = array<i32>} : memref<2x8x128xf32, #tpu.memory_space<vmem>>, vector<2x8x128xf32>,
      %c0_84 = arith.constant 0 : index
      %c0_85 = arith.constant 0 : index
      %185 = vector.load %arg3[%c0_84, %c0_85] : memref<2x8xi32, #tpu.memory_space<vmem>>, vector<2x8xi32>
      %186 = tpu.iota {dimensions = array<i32: 2>} : vector<2x8x128xi32>
      %c11_i32 = arith.constant 11 : i32
      %187 = vector.broadcast %c11_i32 : i32 to vector<2x8x128xi32>
      %188 = arith.cmpi slt, %186, %187 : vector<2x8x128xi32>
      %cst_86 = arith.constant -1.000000e+09 : f32
      %189 = vector.broadcast %cst_86 : f32 to vector<2x8x128xf32>
      %190 = arith.select %188, %183, %189 : vector<2x8x128xi1>, vector<2x8x128xf32>
      %cst_87 = arith.constant dense<0xFF800000> : vector<2x8xf32>
      %191 = vector.multi_reduction <maximumf>, %190, %cst_87 [2] : vector<2x8x128xf32> to vector<2x8xf32>
      %192 = vector.shape_cast %191 : vector<2x8xf32> to vector<2x8x1xf32>
      %193 = vector.broadcast %192 : vector<2x8x1xf32> to vector<2x8x128xf32>
      %194 = arith.subf %190, %193 : vector<2x8x128xf32>
      %195 = math.exp %194 : vector<2x8x128xf32>
      %cst_88 = arith.constant dense<0.000000e+00> : vector<2x8xf32>
      %196 = vector.multi_reduction <add>, %195, %cst_88 [2] : vector<2x8x128xf32> to vector<2x8xf32>
      %197 = vector.shape_cast %196 : vector<2x8xf32> to vector<2x8x1xf32>
      %198 = math.log %197 : vector<2x8x1xf32>
      %199 = arith.addf %192, %198 : vector<2x8x1xf32>
      %200 = vector.shape_cast %199 : vector<2x8x1xf32> to vector<2x8xf32>
      %201 = vector.shape_cast %185 : vector<2x8xi32> to vector<2x8x1xi32>
      %202 = vector.broadcast %201 : vector<2x8x1xi32> to vector<2x8x128xi32>
      %203 = arith.cmpi eq, %186, %202 : vector<2x8x128xi32>
      %cst_89 = arith.constant 0.000000e+00 : f32
      %204 = vector.broadcast %cst_89 : f32 to vector<2x8x128xf32>
      %205 = arith.select %203, %190, %204 : vector<2x8x128xi1>, vector<2x8x128xf32>
      %cst_90 = arith.constant dense<0.000000e+00> : vector<2x8xf32>
      %206 = vector.multi_reduction <add>, %205, %cst_90 [2] : vector<2x8x128xf32> to vector<2x8xf32>
      %c-100_i32 = arith.constant -100 : i32
      %207 = vector.broadcast %c-100_i32 : i32 to vector<2x8xi32>
      %208 = arith.cmpi ne, %185, %207 : vector<2x8xi32>
      %209 = arith.extui %208 : vector<2x8xi1> to vector<2x8xi32>
      %210 = arith.sitofp %209 : vector<2x8xi32> to vector<2x8xf32>
      %211 = arith.subf %200, %206 : vector<2x8xf32>
      %212 = arith.mulf %211, %210 : vector<2x8xf32>
      %213 = vector.shape_cast %212 : vector<2x8xf32> to vector<1x2x8xf32>
      %cst_91 = arith.constant dense<0.000000e+00> : vector<1xf32>
      %214 = vector.multi_reduction <add>, %213, %cst_91 [1, 2] : vector<1x2x8xf32> to vector<1xf32>
      %215 = vector.shape_cast %214 : vector<1xf32> to vector<1x1x1xf32>
      %216 = vector.extract %215[0, 0, 0] : f32 from vector<1x1x1xf32>
      %217 = vector.shape_cast %210 : vector<2x8xf32> to vector<1x2x8xf32>
      %cst_92 = arith.constant dense<0.000000e+00> : vector<1xf32>
      %218 = vector.multi_reduction <add>, %217, %cst_92 [1, 2] : vector<1x2x8xf32> to vector<1xf32>
      %219 = vector.shape_cast %218 : vector<1xf32> to vector<1x1x1xf32>
      %220 = vector.extract %219[0, 0, 0] : f32 from vector<1x1x1xf32>
      %cst_93 = arith.constant 1.000000e+00 : f32
      %221 = arith.maximumf %220, %cst_93 : f32
      %222 = arith.divf %216, %221 : f32
      %c0_94 = arith.constant 0 : index
      %c0_95 = arith.constant 0 : index
      %223 = memref.load %arg24[%c0_94, %c0_95] : memref<1x1xf32, #tpu.memory_space<smem>>
      memref.store %222, %arg24[%c0_94, %c0_95] : memref<1x1xf32, #tpu.memory_space<smem>>
    } else {
    }
    return
  }
  func.func @transform_0(%arg0: i32) -> (i32, i32) {
    %c0_i32 = arith.constant 0 : i32
    %c0_i32_0 = arith.constant 0 : i32
    %c0_i32_1 = arith.constant 0 : i32
    return %c0_i32, %c0_i32_0 : i32, i32
  }
  func.func @transform_1(%arg0: i32) -> (i32, i32) {
    %c0_i32 = arith.constant 0 : i32
    %c0_i32_0 = arith.constant 0 : i32
    %c0_i32_1 = arith.constant 0 : i32
    return %c0_i32, %c0_i32_0 : i32, i32
  }
  func.func @transform_2(%arg0: i32) -> (i32, i32) {
    %c0_i32 = arith.constant 0 : i32
    %c0_i32_0 = arith.constant 0 : i32
    %c0_i32_1 = arith.constant 0 : i32
    return %c0_i32, %c0_i32_0 : i32, i32
  }
  func.func @transform_3(%arg0: i32) -> (i32, i32) {
    %c0_i32 = arith.constant 0 : i32
    %c0_i32_0 = arith.constant 0 : i32
    %c0_i32_1 = arith.constant 0 : i32
    return %c0_i32, %c0_i32_0 : i32, i32
  }
  func.func @transform_4(%arg0: i32) -> (i32, i32) {
    %c0_i32 = arith.constant 0 : i32
    %c0_i32_0 = arith.constant 0 : i32
    %c0_i32_1 = arith.constant 0 : i32
    return %c0_i32, %c0_i32_0 : i32, i32
  }
  func.func @transform_5(%arg0: i32) -> (i32, i32) {
    %c0_i32 = arith.constant 0 : i32
    %c0_i32_0 = arith.constant 0 : i32
    %c0_i32_1 = arith.constant 0 : i32
    return %c0_i32, %c0_i32_0 : i32, i32
  }
  func.func @transform_6(%arg0: i32) -> (i32, i32) {
    %c0_i32 = arith.constant 0 : i32
    %c0_i32_0 = arith.constant 0 : i32
    %c0_i32_1 = arith.constant 0 : i32
    return %c0_i32, %c0_i32_0 : i32, i32
  }
  func.func @transform_7(%arg0: i32) -> (i32, i32) {
    %c0_i32 = arith.constant 0 : i32
    %c0_i32_0 = arith.constant 0 : i32
    %c0_i32_1 = arith.constant 0 : i32
    return %c0_i32, %c0_i32_0 : i32, i32
  }
  func.func @transform_8(%arg0: i32) -> (i32, i32, i32) {
    %c0_i32 = arith.constant 0 : i32
    %c0_i32_0 = arith.constant 0 : i32
    %c0_i32_1 = arith.constant 0 : i32
    return %arg0, %c0_i32, %c0_i32_0 : i32, i32, i32
  }
  func.func @transform_9(%arg0: i32) -> (i32, i32, i32) {
    %c0_i32 = arith.constant 0 : i32
    %c0_i32_0 = arith.constant 0 : i32
    %c0_i32_1 = arith.constant 0 : i32
    return %arg0, %c0_i32, %c0_i32_0 : i32, i32, i32
  }
  func.func @transform_10(%arg0: i32) -> (i32, i32, i32) {
    %c0_i32 = arith.constant 0 : i32
    %c0_i32_0 = arith.constant 0 : i32
    %c0_i32_1 = arith.constant 0 : i32
    return %arg0, %c0_i32, %c0_i32_0 : i32, i32, i32
  }
  func.func @transform_11(%arg0: i32) -> (i32, i32, i32) {
    %c0_i32 = arith.constant 0 : i32
    %c0_i32_0 = arith.constant 0 : i32
    %c0_i32_1 = arith.constant 0 : i32
    return %arg0, %c0_i32, %c0_i32_0 : i32, i32, i32
  }
  func.func @transform_12(%arg0: i32) -> (i32, i32, i32) {
    %c0_i32 = arith.constant 0 : i32
    %c0_i32_0 = arith.constant 0 : i32
    %c0_i32_1 = arith.constant 0 : i32
    return %arg0, %c0_i32, %c0_i32_0 : i32, i32, i32
  }
  func.func @transform_13(%arg0: i32) -> (i32, i32, i32) {
    %c0_i32 = arith.constant 0 : i32
    %c0_i32_0 = arith.constant 0 : i32
    %c0_i32_1 = arith.constant 0 : i32
    return %arg0, %c0_i32, %c0_i32_0 : i32, i32, i32
  }
  func.func @transform_14(%arg0: i32) -> (i32, i32, i32) {
    %c0_i32 = arith.constant 0 : i32
    %c0_i32_0 = arith.constant 0 : i32
    %c0_i32_1 = arith.constant 0 : i32
    return %arg0, %c0_i32, %c0_i32_0 : i32, i32, i32
  }
  func.func @transform_15(%arg0: i32) -> (i32, i32, i32) {
    %c0_i32 = arith.constant 0 : i32
    %c0_i32_0 = arith.constant 0 : i32
    %c0_i32_1 = arith.constant 0 : i32
    return %arg0, %c0_i32, %c0_i32_0 : i32, i32, i32
  }
  func.func @transform_16(%arg0: i32) -> (i32, i32, i32) {
    %c0_i32 = arith.constant 0 : i32
    %c0_i32_0 = arith.constant 0 : i32
    %c0_i32_1 = arith.constant 0 : i32
    return %arg0, %c0_i32, %c0_i32_0 : i32, i32, i32
  }
  func.func @transform_17(%arg0: i32) -> (i32, i32, i32) {
    %c0_i32 = arith.constant 0 : i32
    %c0_i32_0 = arith.constant 0 : i32
    %c0_i32_1 = arith.constant 0 : i32
    return %arg0, %c0_i32, %c0_i32_0 : i32, i32, i32
  }
  func.func @transform_18(%arg0: i32) -> (i32, i32, i32) {
    %c0_i32 = arith.constant 0 : i32
    %c0_i32_0 = arith.constant 0 : i32
    %c0_i32_1 = arith.constant 0 : i32
    return %arg0, %c0_i32, %c0_i32_0 : i32, i32, i32
  }
  func.func @transform_19(%arg0: i32) -> (i32, i32, i32) {
    %c0_i32 = arith.constant 0 : i32
    %c0_i32_0 = arith.constant 0 : i32
    %c0_i32_1 = arith.constant 0 : i32
    return %arg0, %c0_i32, %c0_i32_0 : i32, i32, i32
  }
  func.func @transform_20(%arg0: i32) -> (i32, i32) {
    %c0_i32 = arith.constant 0 : i32
    %c0_i32_0 = arith.constant 0 : i32
    %c0_i32_1 = arith.constant 0 : i32
    return %c0_i32, %c0_i32_0 : i32, i32
  }
  func.func @transform_21(%arg0: i32) -> (i32, i32) {
    %c0_i32 = arith.constant 0 : i32
    %c0_i32_0 = arith.constant 0 : i32
    %c0_i32_1 = arith.constant 0 : i32
    return %c0_i32, %c0_i32_0 : i32, i32
  }
  func.func @transform_22(%arg0: i32) -> (i32, i32, i32) {
    %c0_i32 = arith.constant 0 : i32
    %c0_i32_0 = arith.constant 0 : i32
    %c0_i32_1 = arith.constant 0 : i32
    %c0_i32_2 = arith.constant 0 : i32
    return %c0_i32, %c0_i32_0, %c0_i32_1 : i32, i32, i32
  }
  func.func @transform_23(%arg0: i32) -> (i32, i32) {
    %c0_i32 = arith.constant 0 : i32
    %c0_i32_0 = arith.constant 0 : i32
    %c0_i32_1 = arith.constant 0 : i32
    return %c0_i32, %c0_i32_0 : i32, i32
  }
}

</mosaic_0001>

<llo_original>
// kernel: bert_forward.1
$region0: #{bert_forward.1}
  #allocation0 [shape = 'u32[]', space=smem, size = 0x4, offset = 0x4, fixed_abs, tag = 'smem constant byte address 0x4 - core index']
  #allocation1 [shape = 'u32[72,128]{1,0:T(1,128)}', space=vmem, size = 0x9000, scoped, tag = 'internal scratch']
  #allocation2 [shape = 'f32[2,8,128]{2,1,0:T(8,128)}', space=vmem, size = 0x2000, scoped, tag = 'scratch operand']
  %s0 = inlined_call_operand.vmem [shape: s32[2,8], index: 0, kind: input, shape index: {}]
  %s1 = inlined_call_operand.vmem [shape: s32[2,8], index: 1, kind: input, shape index: {}]
  %s2 = inlined_call_operand.vmem [shape: s32[2,8], index: 2, kind: input, shape index: {}]
  %s3 = inlined_call_operand.hbm [shape: f32[128,128], index: 3, kind: input, shape index: {}]
  %s4 = inlined_call_operand.vmem [shape: f32[8,128], index: 4, kind: input, shape index: {}]
  %s5 = inlined_call_operand.vmem [shape: f32[1,128], index: 5, kind: input, shape index: {}]
  %s6 = inlined_call_operand.hbm [shape: f32[1,128], index: 6, kind: input, shape index: {}]
  %s7 = inlined_call_operand.hbm [shape: f32[1,128], index: 7, kind: input, shape index: {}]
  %s8 = inlined_call_operand.hbm [shape: bf16[2,128,384], index: 8, kind: input, shape index: {}]
  %s9 = inlined_call_operand.vmem [shape: f32[2,1,384], index: 9, kind: input, shape index: {}]
  %s10 = inlined_call_operand.hbm [shape: bf16[2,128,128], index: 10, kind: input, shape index: {}]
  %s11 = inlined_call_operand.hbm [shape: f32[2,1,128], index: 11, kind: input, shape index: {}]
  %s12 = inlined_call_operand.vmem [shape: f32[2,1,128], index: 12, kind: input, shape index: {}]
  %s13 = inlined_call_operand.vmem [shape: f32[2,1,128], index: 13, kind: input, shape index: {}]
  %s14 = inlined_call_operand.hbm [shape: bf16[2,128,256], index: 14, kind: input, shape index: {}]
  %s15 = inlined_call_operand.hbm [shape: f32[2,1,256], index: 15, kind: input, shape index: {}]
  %s16 = inlined_call_operand.hbm [shape: bf16[2,256,128], index: 16, kind: input, shape index: {}]
  %s17 = inlined_call_operand.hbm [shape: f32[2,1,128], index: 17, kind: input, shape index: {}]
  %s18 = inlined_call_operand.vmem [shape: f32[2,1,128], index: 18, kind: input, shape index: {}]
  %s19 = inlined_call_operand.hbm [shape: f32[2,1,128], index: 19, kind: input, shape index: {}]
  %s20 = inlined_call_operand.hbm [shape: bf16[128,128], index: 20, kind: input, shape index: {}]
  %s21 = inlined_call_operand.hbm [shape: f32[1,128], index: 21, kind: input, shape index: {}]
  %s22 = inlined_call_operand.hbm [shape: f32[2,8,128], index: 22, kind: output, shape index: {0}]
  %s23 = inlined_call_operand.hbm [shape: f32[1,1], index: 23, kind: output, shape index: {1}]
  %24 = xla_tuple %s22, %s23
  %s25 = sld [smem:[#allocation0]]
  $region189: #{bert_forward.1} parent=0
    _
  %s27 = ssub.s32 1, %s25
  %s28 = scalar_select 0, %s27, %s25
  $region1: #{bert_forward.1} parent=0
    #allocation3 [shape = 'u8[65536]{0}', space=vmem, size = 0x10000, scoped, tag = 'input window, operand 3, single buffered']
    #allocation4 [shape = 's32[2]{0}', space=sflag, size = 0x8, scoped, tag = 'scoped memory for bert_forward.1']
    #allocation5 [shape = 's32[2]{0}', space=sflag, size = 0x8, scoped, tag = 'scoped memory for bert_forward.1']
    #allocation6 [shape = 's32[2]{0}', space=sflag, size = 0x8, scoped, tag = 'scoped memory for bert_forward.1']
    #allocation7 [shape = 'u8[512]{0}', space=vmem, size = 0x400, scoped, tag = 'input window, operand 6, single buffered']
    #allocation8 [shape = 's32[1]{0}', space=sflag, size = 0x4, scoped, tag = 'scoped memory for bert_forward.1']
    #allocation9 [shape = 'u8[512]{0}', space=vmem, size = 0x400, scoped, tag = 'input window, operand 7, single buffered']
    #allocation10 [shape = 'u8[196608]{0}', space=vmem, size = 0x30000, scoped, tag = 'input window, operand 8']
    #allocation11 [shape = 's32[2]{0}', space=sflag, size = 0x8, scoped, tag = 'scoped memory for bert_forward.1']
    #allocation12 [shape = 'u8[65536]{0}', space=vmem, size = 0x10000, scoped, tag = 'input window, operand 10']
    #allocation13 [shape = 'u8[1024]{0}', space=vmem, size = 0x400, scoped, tag = 'input window, operand 11']
    #allocation14 [shape = 's32[2]{0}', space=sflag, size = 0x8, scoped, tag = 'scoped memory for bert_forward.1']
    #allocation15 [shape = 'u8[131072]{0}', space=vmem, size = 0x20000, scoped, tag = 'input window, operand 14']
    #allocation16 [shape = 'u8[2048]{0}', space=vmem, size = 0x800, scoped, tag = 'input window, operand 15']
    #allocation17 [shape = 's32[2]{0}', space=sflag, size = 0x8, scoped, tag = 'scoped memory for bert_forward.1']
    #allocation18 [shape = 'u8[131072]{0}', space=vmem, size = 0x20000, scoped, tag = 'input window, operand 16']
    #allocation19 [shape = 'u8[1024]{0}', space=vmem, size = 0x400, scoped, tag = 'input window, operand 17']
    #allocation20 [shape = 's32[2]{0}', space=sflag, size = 0x8, scoped, tag = 'scoped memory for bert_forward.1']
    #allocation21 [shape = 'u8[1024]{0}', space=vmem, size = 0x400, scoped, tag = 'input window, operand 19']
    #allocation22 [shape = 'u8[32768]{0}', space=vmem, size = 0x8000, scoped, tag = 'input window, operand 20, single buffered']
    #allocation23 [shape = 's32[1]{0}', space=sflag, size = 0x4, scoped, tag = 'scoped memory for bert_forward.1']
    #allocation24 [shape = 'u8[512]{0}', space=vmem, size = 0x400, scoped, tag = 'input window, operand 21, single buffered']
    #allocation25 [shape = 'u8[8192]{0}', space=vmem, size = 0x2000, scoped, tag = 'output window, operand 0, single buffered']
    #allocation26 [shape = 'u8[512]{0}', space=smem, size = 0x200, scoped, tag = 'output window, operand 1, single buffered']
    %29 = vsyncpa [#allocation4], 0
    %30 = vsyncpa [#allocation8], 0
    %31 = vsyncpa [#allocation11], 0
    %s32 = scalar_lea.sflag [#allocation11], 1
    %33 = vsyncpa %s32, 0
    %34 = vsyncpa [#allocation14], 0
    %s35 = scalar_lea.sflag [#allocation14], 1
    %36 = vsyncpa %s35, 0
    %37 = vsyncpa [#allocation17], 0
    %s38 = scalar_lea.sflag [#allocation17], 1
    %39 = vsyncpa %s38, 0
    %40 = vsyncpa [#allocation20], 0
    %s41 = scalar_lea.sflag [#allocation20], 1
    %42 = vsyncpa %s41, 0
    %43 = vsyncpa [#allocation23], 0
    %44 = vsyncpa [#allocation5], 0
    %45 = vsyncpa [#allocation6], 0
    loop: start=0, step=1, limit=4
    $region2: #{bert_forward.1} parent=1 // loop_pre_header
      _
    $region3: #{bert_forward.1} parent=1 // loop_header
      %s47 = sphi 0, %s51
      %p48 = scmp.ge.s32.totalorder %s47, 4
      %s55 = sphi 0, %s55
      %s57 = sphi 0, %s55
      %s58 = sphi 0, %s57
      %s72 = sphi 0, %s58
      %s76 = sphi 0, %s76
      %s78 = sphi 0, %s76
      %s79 = sphi 0, %s78
      %s93 = sphi 0, %s79
      %s97 = sphi 0, %s97
      %s99 = sphi 0, %s97
      %s100 = sphi 0, %s99
      %s114 = sphi 0, %s100
      %s118 = sphi 0, %s118
      %s120 = sphi 0, %s118
      %s121 = sphi 0, %s120
      %s135 = sphi 0, %s121
      %s139 = sphi 0, %s139
      %s141 = sphi 0, %s139
      %s142 = sphi 0, %s141
      %s156 = sphi 0, %s142
      %s160 = sphi 0, %s160
      %s162 = sphi 0, %s160
      %s163 = sphi 0, %s162
      %s177 = sphi 0, %s163
      %s181 = sphi 0, %s181
      %s183 = sphi 0, %s181
      %s184 = sphi 0, %s183
      %s198 = sphi 0, %s184
      %s202 = sphi 0, %s202
      %s204 = sphi 0, %s202
      %s205 = sphi 0, %s204
      %s219 = sphi 0, %s205
      %s225 = sphi 0, %s227
      %s228 = sphi 0, %s225
      %s229 = sphi 0, %s228
      %s245 = sphi 0, %s229
      %s251 = sphi 0, %s253
      %s254 = sphi 0, %s251
      %s255 = sphi 0, %s254
      %s271 = sphi 0, %s255
      %s277 = sphi 0, %s279
      %s280 = sphi 0, %s277
      %s281 = sphi 0, %s280
      %s297 = sphi 0, %s281
      %s303 = sphi 0, %s305
      %s306 = sphi 0, %s303
      %s307 = sphi 0, %s306
      %s323 = sphi 0, %s307
      %s329 = sphi 0, %s331
      %s332 = sphi 0, %s329
      %s333 = sphi 0, %s332
      %s349 = sphi 0, %s333
      %s355 = sphi 0, %s357
      %s358 = sphi 0, %s355
      %s359 = sphi 0, %s358
      %s375 = sphi 0, %s359
      %s381 = sphi 0, %s383
      %s384 = sphi 0, %s381
      %s385 = sphi 0, %s384
      %s401 = sphi 0, %s385
      %s407 = sphi 0, %s409
      %s410 = sphi 0, %s407
      %s411 = sphi 0, %s410
      %s427 = sphi 0, %s411
      %s433 = sphi 0, %s435
      %s436 = sphi 0, %s433
      %s437 = sphi 0, %s436
      %s453 = sphi 0, %s437
      %s459 = sphi 0, %s461
      %s462 = sphi 0, %s459
      %s463 = sphi 0, %s462
      %s479 = sphi 0, %s463
      %s485 = sphi 0, %s487
      %s488 = sphi 0, %s485
      %s489 = sphi 0, %s488
      %s505 = sphi 0, %s489
      %s511 = sphi 0, %s513
      %s514 = sphi 0, %s511
      %s515 = sphi 0, %s514
      %s531 = sphi 0, %s515
      %s535 = sphi 0, %s535
      %s537 = sphi 0, %s535
      %s538 = sphi 0, %s537
      %s552 = sphi 0, %s538
      %s556 = sphi 0, %s556
      %s558 = sphi 0, %s556
      %s559 = sphi 0, %s558
      %s573 = sphi 0, %s559
      %s577 = sphi 0, %s577
      %s579 = sphi 0, %s577
      %s580 = sphi 0, %s579
      %s594 = sphi 0, %s580
      %s598 = sphi 0, %s598
      %s600 = sphi 0, %s598
      %s601 = sphi 0, %s600
      %s615 = sphi 0, %s601
    $region4: #{bert_forward.1} parent=1 // loop_header_branch
      %50 = sbr.rel (%p48) target = $region8
    $region5: #{bert_forward.1} parent=1 // loop_body
      %s52 = ssub.s32 %s47, 1
      %s53 = ssub.s32 %s47, 2
      %s54 = sadd.s32 %s47, 1
      %s56 = sadd.s32 %s55, 1
      %p59 = scmp.eq.s32.totalorder %s47, 1
      %p60 = scmp.ne.s32.totalorder %s55, %s57
      %p61 = scmp.eq.s32.totalorder %s47, 0
      %p62 = por %p60, %p61
      %p63 = scmp.ne.s32.totalorder %s55, %s57
      %p64 = scmp.eq.s32.totalorder %s52, 1
      %p65 = por %p63, %p64
      %p66 = scmp.ne.s32.totalorder %s57, %s58
      %p67 = scmp.eq.s32.totalorder %s52, 0
      %p68 = por %p66, %p67
      %p69 = scmp.ne.s32.totalorder %s57, %s58
      %p70 = scmp.eq.s32.totalorder %s53, 1
      %p71 = por %p69, %p70
      %p73 = scmp.ne.s32.totalorder %s58, %s72
      %p74 = scmp.eq.s32.totalorder %s53, 0
      %p75 = por %p73, %p74
      %s77 = sadd.s32 %s76, 1
      %p80 = scmp.eq.s32.totalorder %s47, 1
      %p81 = scmp.ne.s32.totalorder %s76, %s78
      %p82 = scmp.eq.s32.totalorder %s47, 0
      %p83 = por %p81, %p82
      %p84 = scmp.ne.s32.totalorder %s76, %s78
      %p85 = scmp.eq.s32.totalorder %s52, 1
      %p86 = por %p84, %p85
      %p87 = scmp.ne.s32.totalorder %s78, %s79
      %p88 = scmp.eq.s32.totalorder %s52, 0
      %p89 = por %p87, %p88
      %p90 = scmp.ne.s32.totalorder %s78, %s79
      %p91 = scmp.eq.s32.totalorder %s53, 1
      %p92 = por %p90, %p91
      %p94 = scmp.ne.s32.totalorder %s79, %s93
      %p95 = scmp.eq.s32.totalorder %s53, 0
      %p96 = por %p94, %p95
      %s98 = sadd.s32 %s97, 1
      %p101 = scmp.eq.s32.totalorder %s47, 1
      %p102 = scmp.ne.s32.totalorder %s97, %s99
      %p103 = scmp.eq.s32.totalorder %s47, 0
      %p104 = por %p102, %p103
      %p105 = scmp.ne.s32.totalorder %s97, %s99
      %p106 = scmp.eq.s32.totalorder %s52, 1
      %p107 = por %p105, %p106
      %p108 = scmp.ne.s32.totalorder %s99, %s100
      %p109 = scmp.eq.s32.totalorder %s52, 0
      %p110 = por %p108, %p109
      %p111 = scmp.ne.s32.totalorder %s99, %s100
      %p112 = scmp.eq.s32.totalorder %s53, 1
      %p113 = por %p111, %p112
      %p115 = scmp.ne.s32.totalorder %s100, %s114
      %p116 = scmp.eq.s32.totalorder %s53, 0
      %p117 = por %p115, %p116
      %s119 = sadd.s32 %s118, 1
      %p122 = scmp.eq.s32.totalorder %s47, 1
      %p123 = scmp.ne.s32.totalorder %s118, %s120
      %p124 = scmp.eq.s32.totalorder %s47, 0
      %p125 = por %p123, %p124
      %p126 = scmp.ne.s32.totalorder %s118, %s120
      %p127 = scmp.eq.s32.totalorder %s52, 1
      %p128 = por %p126, %p127
      %p129 = scmp.ne.s32.totalorder %s120, %s121
      %p130 = scmp.eq.s32.totalorder %s52, 0
      %p131 = por %p129, %p130
      %p132 = scmp.ne.s32.totalorder %s120, %s121
      %p133 = scmp.eq.s32.totalorder %s53, 1
      %p134 = por %p132, %p133
      %p136 = scmp.ne.s32.totalorder %s121, %s135
      %p137 = scmp.eq.s32.totalorder %s53, 0
      %p138 = por %p136, %p137
      %s140 = sadd.s32 %s139, 1
      %p143 = scmp.eq.s32.totalorder %s47, 1
      %p144 = scmp.ne.s32.totalorder %s139, %s141
      %p145 = scmp.eq.s32.totalorder %s47, 0
      %p146 = por %p144, %p145
      %p147 = scmp.ne.s32.totalorder %s139, %s141
      %p148 = scmp.eq.s32.totalorder %s52, 1
      %p149 = por %p147, %p148
      %p150 = scmp.ne.s32.totalorder %s141, %s142
      %p151 = scmp.eq.s32.totalorder %s52, 0
      %p152 = por %p150, %p151
      %p153 = scmp.ne.s32.totalorder %s141, %s142
      %p154 = scmp.eq.s32.totalorder %s53, 1
      %p155 = por %p153, %p154
      %p157 = scmp.ne.s32.totalorder %s142, %s156
      %p158 = scmp.eq.s32.totalorder %s53, 0
      %p159 = por %p157, %p158
      %s161 = sadd.s32 %s160, 1
      %p164 = scmp.eq.s32.totalorder %s47, 1
      %p165 = scmp.ne.s32.totalorder %s160, %s162
      %p166 = scmp.eq.s32.totalorder %s47, 0
      %p167 = por %p165, %p166
      %p168 = scmp.ne.s32.totalorder %s160, %s162
      %p169 = scmp.eq.s32.totalorder %s52, 1
      %p170 = por %p168, %p169
      %p171 = scmp.ne.s32.totalorder %s162, %s163
      %p172 = scmp.eq.s32.totalorder %s52, 0
      %p173 = por %p171, %p172
      %p174 = scmp.ne.s32.totalorder %s162, %s163
      %p175 = scmp.eq.s32.totalorder %s53, 1
      %p176 = por %p174, %p175
      %p178 = scmp.ne.s32.totalorder %s163, %s177
      %p179 = scmp.eq.s32.totalorder %s53, 0
      %p180 = por %p178, %p179
      %s182 = sadd.s32 %s181, 1
      %p185 = scmp.eq.s32.totalorder %s47, 1
      %p186 = scmp.ne.s32.totalorder %s181, %s183
      %p187 = scmp.eq.s32.totalorder %s47, 0
      %p188 = por %p186, %p187
      %p189 = scmp.ne.s32.totalorder %s181, %s183
      %p190 = scmp.eq.s32.totalorder %s52, 1
      %p191 = por %p189, %p190
      %p192 = scmp.ne.s32.totalorder %s183, %s184
      %p193 = scmp.eq.s32.totalorder %s52, 0
      %p194 = por %p192, %p193
      %p195 = scmp.ne.s32.totalorder %s183, %s184
      %p196 = scmp.eq.s32.totalorder %s53, 1
      %p197 = por %p195, %p196
      %p199 = scmp.ne.s32.totalorder %s184, %s198
      %p200 = scmp.eq.s32.totalorder %s53, 0
      %p201 = por %p199, %p200
      %s203 = sadd.s32 %s202, 1
      %p206 = scmp.eq.s32.totalorder %s47, 1
      %p207 = scmp.ne.s32.totalorder %s202, %s204
      %p208 = scmp.eq.s32.totalorder %s47, 0
      %p209 = por %p207, %p208
      %p210 = scmp.ne.s32.totalorder %s202, %s204
      %p211 = scmp.eq.s32.totalorder %s52, 1
      %p212 = por %p210, %p211
      %p213 = scmp.ne.s32.totalorder %s204, %s205
      %p214 = scmp.eq.s32.totalorder %s52, 0
      %p215 = por %p213, %p214
      %p216 = scmp.ne.s32.totalorder %s204, %s205
      %p217 = scmp.eq.s32.totalorder %s53, 1
      %p218 = por %p216, %p217
      %p220 = scmp.ne.s32.totalorder %s205, %s219
      %p221 = scmp.eq.s32.totalorder %s53, 0
      %p222 = por %p220, %p221
      %s223 = ssub.s32 %s47, %s54
      %p224 = scmp.eq.s32.totalorder %s223, 0
      %s226 = sadd.s32 %s225, 1
      %s227 = scalar_select %p224, %s225, %s226
      %p230 = pneg %p224
      %p231 = scmp.eq.s32.totalorder %s47, 1
      %p232 = por %p230, %p231
      %p233 = scmp.ne.s32.totalorder %s225, %s228
      %p234 = scmp.eq.s32.totalorder %s47, 0
      %p235 = por %p233, %p234
      %p236 = scmp.ne.s32.totalorder %s225, %s228
      %p237 = scmp.eq.s32.totalorder %s52, 1
      %p238 = por %p236, %p237
      %p239 = scmp.ne.s32.totalorder %s228, %s229
      %p240 = scmp.eq.s32.totalorder %s52, 0
      %p241 = por %p239, %p240
      %p242 = scmp.ne.s32.totalorder %s228, %s229
      %p243 = scmp.eq.s32.totalorder %s53, 1
      %p244 = por %p242, %p243
      %p246 = scmp.ne.s32.totalorder %s229, %s245
      %p247 = scmp.eq.s32.totalorder %s53, 0
      %p248 = por %p246, %p247
      %s249 = ssub.s32 %s47, %s54
      %p250 = scmp.eq.s32.totalorder %s249, 0
      %s252 = sadd.s32 %s251, 1
      %s253 = scalar_select %p250, %s251, %s252
      %p256 = pneg %p250
      %p257 = scmp.eq.s32.totalorder %s47, 1
      %p258 = por %p256, %p257
      %p259 = scmp.ne.s32.totalorder %s251, %s254
      %p260 = scmp.eq.s32.totalorder %s47, 0
      %p261 = por %p259, %p260
      %p262 = scmp.ne.s32.totalorder %s251, %s254
      %p263 = scmp.eq.s32.totalorder %s52, 1
      %p264 = por %p262, %p263
      %p265 = scmp.ne.s32.totalorder %s254, %s255
      %p266 = scmp.eq.s32.totalorder %s52, 0
      %p267 = por %p265, %p266
      %p268 = scmp.ne.s32.totalorder %s254, %s255
      %p269 = scmp.eq.s32.totalorder %s53, 1
      %p270 = por %p268, %p269
      %p272 = scmp.ne.s32.totalorder %s255, %s271
      %p273 = scmp.eq.s32.totalorder %s53, 0
      %p274 = por %p272, %p273
      %s275 = ssub.s32 %s47, %s54
      %p276 = scmp.eq.s32.totalorder %s275, 0
      %s278 = sadd.s32 %s277, 1
      %s279 = scalar_select %p276, %s277, %s278
      %p282 = pneg %p276
      %p283 = scmp.eq.s32.totalorder %s47, 1
      %p284 = por %p282, %p283
      %p285 = scmp.ne.s32.totalorder %s277, %s280
      %p286 = scmp.eq.s32.totalorder %s47, 0
      %p287 = por %p285, %p286
      %p288 = scmp.ne.s32.totalorder %s277, %s280
      %p289 = scmp.eq.s32.totalorder %s52, 1
      %p290 = por %p288, %p289
      %p291 = scmp.ne.s32.totalorder %s280, %s281
      %p292 = scmp.eq.s32.totalorder %s52, 0
      %p293 = por %p291, %p292
      %p294 = scmp.ne.s32.totalorder %s280, %s281
      %p295 = scmp.eq.s32.totalorder %s53, 1
      %p296 = por %p294, %p295
      %p298 = scmp.ne.s32.totalorder %s281, %s297
      %p299 = scmp.eq.s32.totalorder %s53, 0
      %p300 = por %p298, %p299
      %s301 = ssub.s32 %s47, %s54
      %p302 = scmp.eq.s32.totalorder %s301, 0
      %s304 = sadd.s32 %s303, 1
      %s305 = scalar_select %p302, %s303, %s304
      %p308 = pneg %p302
      %p309 = scmp.eq.s32.totalorder %s47, 1
      %p310 = por %p308, %p309
      %p311 = scmp.ne.s32.totalorder %s303, %s306
      %p312 = scmp.eq.s32.totalorder %s47, 0
      %p313 = por %p311, %p312
      %p314 = scmp.ne.s32.totalorder %s303, %s306
      %p315 = scmp.eq.s32.totalorder %s52, 1
      %p316 = por %p314, %p315
      %p317 = scmp.ne.s32.totalorder %s306, %s307
      %p318 = scmp.eq.s32.totalorder %s52, 0
      %p319 = por %p317, %p318
      %p320 = scmp.ne.s32.totalorder %s306, %s307
      %p321 = scmp.eq.s32.totalorder %s53, 1
      %p322 = por %p320, %p321
      %p324 = scmp.ne.s32.totalorder %s307, %s323
      %p325 = scmp.eq.s32.totalorder %s53, 0
      %p326 = por %p324, %p325
      %s327 = ssub.s32 %s47, %s54
      %p328 = scmp.eq.s32.totalorder %s327, 0
      %s330 = sadd.s32 %s329, 1
      %s331 = scalar_select %p328, %s329, %s330
      %p334 = pneg %p328
      %p335 = scmp.eq.s32.totalorder %s47, 1
      %p336 = por %p334, %p335
      %p337 = scmp.ne.s32.totalorder %s329, %s332
      %p338 = scmp.eq.s32.totalorder %s47, 0
      %p339 = por %p337, %p338
      %p340 = scmp.ne.s32.totalorder %s329, %s332
      %p341 = scmp.eq.s32.totalorder %s52, 1
      %p342 = por %p340, %p341
      %p343 = scmp.ne.s32.totalorder %s332, %s333
      %p344 = scmp.eq.s32.totalorder %s52, 0
      %p345 = por %p343, %p344
      %p346 = scmp.ne.s32.totalorder %s332, %s333
      %p347 = scmp.eq.s32.totalorder %s53, 1
      %p348 = por %p346, %p347
      %p350 = scmp.ne.s32.totalorder %s333, %s349
      %p351 = scmp.eq.s32.totalorder %s53, 0
      %p352 = por %p350, %p351
      %s353 = ssub.s32 %s47, %s54
      %p354 = scmp.eq.s32.totalorder %s353, 0
      %s356 = sadd.s32 %s355, 1
      %s357 = scalar_select %p354, %s355, %s356
      %p360 = pneg %p354
      %p361 = scmp.eq.s32.totalorder %s47, 1
      %p362 = por %p360, %p361
      %p363 = scmp.ne.s32.totalorder %s355, %s358
      %p364 = scmp.eq.s32.totalorder %s47, 0
      %p365 = por %p363, %p364
      %p366 = scmp.ne.s32.totalorder %s355, %s358
      %p367 = scmp.eq.s32.totalorder %s52, 1
      %p368 = por %p366, %p367
      %p369 = scmp.ne.s32.totalorder %s358, %s359
      %p370 = scmp.eq.s32.totalorder %s52, 0
      %p371 = por %p369, %p370
      %p372 = scmp.ne.s32.totalorder %s358, %s359
      %p373 = scmp.eq.s32.totalorder %s53, 1
      %p374 = por %p372, %p373
      %p376 = scmp.ne.s32.totalorder %s359, %s375
      %p377 = scmp.eq.s32.totalorder %s53, 0
      %p378 = por %p376, %p377
      %s379 = ssub.s32 %s47, %s54
      %p380 = scmp.eq.s32.totalorder %s379, 0
      %s382 = sadd.s32 %s381, 1
      %s383 = scalar_select %p380, %s381, %s382
      %p386 = pneg %p380
      %p387 = scmp.eq.s32.totalorder %s47, 1
      %p388 = por %p386, %p387
      %p389 = scmp.ne.s32.totalorder %s381, %s384
      %p390 = scmp.eq.s32.totalorder %s47, 0
      %p391 = por %p389, %p390
      %p392 = scmp.ne.s32.totalorder %s381, %s384
      %p393 = scmp.eq.s32.totalorder %s52, 1
      %p394 = por %p392, %p393
      %p395 = scmp.ne.s32.totalorder %s384, %s385
      %p396 = scmp.eq.s32.totalorder %s52, 0
      %p397 = por %p395, %p396
      %p398 = scmp.ne.s32.totalorder %s384, %s385
      %p399 = scmp.eq.s32.totalorder %s53, 1
      %p400 = por %p398, %p399
      %p402 = scmp.ne.s32.totalorder %s385, %s401
      %p403 = scmp.eq.s32.totalorder %s53, 0
      %p404 = por %p402, %p403
      %s405 = ssub.s32 %s47, %s54
      %p406 = scmp.eq.s32.totalorder %s405, 0
      %s408 = sadd.s32 %s407, 1
      %s409 = scalar_select %p406, %s407, %s408
      %p412 = pneg %p406
      %p413 = scmp.eq.s32.totalorder %s47, 1
      %p414 = por %p412, %p413
      %p415 = scmp.ne.s32.totalorder %s407, %s410
      %p416 = scmp.eq.s32.totalorder %s47, 0
      %p417 = por %p415, %p416
      %p418 = scmp.ne.s32.totalorder %s407, %s410
      %p419 = scmp.eq.s32.totalorder %s52, 1
      %p420 = por %p418, %p419
      %p421 = scmp.ne.s32.totalorder %s410, %s411
      %p422 = scmp.eq.s32.totalorder %s52, 0
      %p423 = por %p421, %p422
      %p424 = scmp.ne.s32.totalorder %s410, %s411
      %p425 = scmp.eq.s32.totalorder %s53, 1
      %p426 = por %p424, %p425
      %p428 = scmp.ne.s32.totalorder %s411, %s427
      %p429 = scmp.eq.s32.totalorder %s53, 0
      %p430 = por %p428, %p429
      %s431 = ssub.s32 %s47, %s54
      %p432 = scmp.eq.s32.totalorder %s431, 0
      %s434 = sadd.s32 %s433, 1
      %s435 = scalar_select %p432, %s433, %s434
      %p438 = pneg %p432
      %p439 = scmp.eq.s32.totalorder %s47, 1
      %p440 = por %p438, %p439
      %p441 = scmp.ne.s32.totalorder %s433, %s436
      %p442 = scmp.eq.s32.totalorder %s47, 0
      %p443 = por %p441, %p442
      %p444 = scmp.ne.s32.totalorder %s433, %s436
      %p445 = scmp.eq.s32.totalorder %s52, 1
      %p446 = por %p444, %p445
      %p447 = scmp.ne.s32.totalorder %s436, %s437
      %p448 = scmp.eq.s32.totalorder %s52, 0
      %p449 = por %p447, %p448
      %p450 = scmp.ne.s32.totalorder %s436, %s437
      %p451 = scmp.eq.s32.totalorder %s53, 1
      %p452 = por %p450, %p451
      %p454 = scmp.ne.s32.totalorder %s437, %s453
      %p455 = scmp.eq.s32.totalorder %s53, 0
      %p456 = por %p454, %p455
      %s457 = ssub.s32 %s47, %s54
      %p458 = scmp.eq.s32.totalorder %s457, 0
      %s460 = sadd.s32 %s459, 1
      %s461 = scalar_select %p458, %s459, %s460
      %p464 = pneg %p458
      %p465 = scmp.eq.s32.totalorder %s47, 1
      %p466 = por %p464, %p465
      %p467 = scmp.ne.s32.totalorder %s459, %s462
      %p468 = scmp.eq.s32.totalorder %s47, 0
      %p469 = por %p467, %p468
      %p470 = scmp.ne.s32.totalorder %s459, %s462
      %p471 = scmp.eq.s32.totalorder %s52, 1
      %p472 = por %p470, %p471
      %p473 = scmp.ne.s32.totalorder %s462, %s463
      %p474 = scmp.eq.s32.totalorder %s52, 0
      %p475 = por %p473, %p474
      %p476 = scmp.ne.s32.totalorder %s462, %s463
      %p477 = scmp.eq.s32.totalorder %s53, 1
      %p478 = por %p476, %p477
      %p480 = scmp.ne.s32.totalorder %s463, %s479
      %p481 = scmp.eq.s32.totalorder %s53, 0
      %p482 = por %p480, %p481
      %s483 = ssub.s32 %s47, %s54
      %p484 = scmp.eq.s32.totalorder %s483, 0
      %s486 = sadd.s32 %s485, 1
      %s487 = scalar_select %p484, %s485, %s486
      %p490 = pneg %p484
      %p491 = scmp.eq.s32.totalorder %s47, 1
      %p492 = por %p490, %p491
      %p493 = scmp.ne.s32.totalorder %s485, %s488
      %p494 = scmp.eq.s32.totalorder %s47, 0
      %p495 = por %p493, %p494
      %p496 = scmp.ne.s32.totalorder %s485, %s488
      %p497 = scmp.eq.s32.totalorder %s52, 1
      %p498 = por %p496, %p497
      %p499 = scmp.ne.s32.totalorder %s488, %s489
      %p500 = scmp.eq.s32.totalorder %s52, 0
      %p501 = por %p499, %p500
      %p502 = scmp.ne.s32.totalorder %s488, %s489
      %p503 = scmp.eq.s32.totalorder %s53, 1
      %p504 = por %p502, %p503
      %p506 = scmp.ne.s32.totalorder %s489, %s505
      %p507 = scmp.eq.s32.totalorder %s53, 0
      %p508 = por %p506, %p507
      %s509 = ssub.s32 %s47, %s54
      %p510 = scmp.eq.s32.totalorder %s509, 0
      %s512 = sadd.s32 %s511, 1
      %s513 = scalar_select %p510, %s511, %s512
      %p516 = pneg %p510
      %p517 = scmp.eq.s32.totalorder %s47, 1
      %p518 = por %p516, %p517
      %p519 = scmp.ne.s32.totalorder %s511, %s514
      %p520 = scmp.eq.s32.totalorder %s47, 0
      %p521 = por %p519, %p520
      %p522 = scmp.ne.s32.totalorder %s511, %s514
      %p523 = scmp.eq.s32.totalorder %s52, 1
      %p524 = por %p522, %p523
      %p525 = scmp.ne.s32.totalorder %s514, %s515
      %p526 = scmp.eq.s32.totalorder %s52, 0
      %p527 = por %p525, %p526
      %p528 = scmp.ne.s32.totalorder %s514, %s515
      %p529 = scmp.eq.s32.totalorder %s53, 1
      %p530 = por %p528, %p529
      %p532 = scmp.ne.s32.totalorder %s515, %s531
      %p533 = scmp.eq.s32.totalorder %s53, 0
      %p534 = por %p532, %p533
      %s536 = sadd.s32 %s535, 1
      %p539 = scmp.eq.s32.totalorder %s47, 1
      %p540 = scmp.ne.s32.totalorder %s535, %s537
      %p541 = scmp.eq.s32.totalorder %s47, 0
      %p542 = por %p540, %p541
      %p543 = scmp.ne.s32.totalorder %s535, %s537
      %p544 = scmp.eq.s32.totalorder %s52, 1
      %p545 = por %p543, %p544
      %p546 = scmp.ne.s32.totalorder %s537, %s538
      %p547 = scmp.eq.s32.totalorder %s52, 0
      %p548 = por %p546, %p547
      %p549 = scmp.ne.s32.totalorder %s537, %s538
      %p550 = scmp.eq.s32.totalorder %s53, 1
      %p551 = por %p549, %p550
      %p553 = scmp.ne.s32.totalorder %s538, %s552
      %p554 = scmp.eq.s32.totalorder %s53, 0
      %p555 = por %p553, %p554
      %s557 = sadd.s32 %s556, 1
      %p560 = scmp.eq.s32.totalorder %s47, 1
      %p561 = scmp.ne.s32.totalorder %s556, %s558
      %p562 = scmp.eq.s32.totalorder %s47, 0
      %p563 = por %p561, %p562
      %p564 = scmp.ne.s32.totalorder %s556, %s558
      %p565 = scmp.eq.s32.totalorder %s52, 1
      %p566 = por %p564, %p565
      %p567 = scmp.ne.s32.totalorder %s558, %s559
      %p568 = scmp.eq.s32.totalorder %s52, 0
      %p569 = por %p567, %p568
      %p570 = scmp.ne.s32.totalorder %s558, %s559
      %p571 = scmp.eq.s32.totalorder %s53, 1
      %p572 = por %p570, %p571
      %p574 = scmp.ne.s32.totalorder %s559, %s573
      %p575 = scmp.eq.s32.totalorder %s53, 0
      %p576 = por %p574, %p575
      %s578 = sadd.s32 %s577, 1
      %p581 = scmp.eq.s32.totalorder %s47, 1
      %p582 = scmp.ne.s32.totalorder %s577, %s579
      %p583 = scmp.eq.s32.totalorder %s47, 0
      %p584 = por %p582, %p583
      %p585 = scmp.ne.s32.totalorder %s577, %s579
      %p586 = scmp.eq.s32.totalorder %s52, 1
      %p587 = por %p585, %p586
      %p588 = scmp.ne.s32.totalorder %s579, %s580
      %p589 = scmp.eq.s32.totalorder %s52, 0
      %p590 = por %p588, %p589
      %p591 = scmp.ne.s32.totalorder %s579, %s580
      %p592 = scmp.eq.s32.totalorder %s53, 1
      %p593 = por %p591, %p592
      %p595 = scmp.ne.s32.totalorder %s580, %s594
      %p596 = scmp.eq.s32.totalorder %s53, 0
      %p597 = por %p595, %p596
      %s599 = sadd.s32 %s598, 1
      %p602 = scmp.eq.s32.totalorder %s47, 1
      %p603 = scmp.ne.s32.totalorder %s598, %s600
      %p604 = scmp.eq.s32.totalorder %s47, 0
      %p605 = por %p603, %p604
      %p606 = scmp.ne.s32.totalorder %s598, %s600
      %p607 = scmp.eq.s32.totalorder %s52, 1
      %p608 = por %p606, %p607
      %p609 = scmp.ne.s32.totalorder %s600, %s601
      %p610 = scmp.eq.s32.totalorder %s52, 0
      %p611 = por %p609, %p610
      %p612 = scmp.ne.s32.totalorder %s600, %s601
      %p613 = scmp.eq.s32.totalorder %s53, 1
      %p614 = por %p612, %p613
      %p616 = scmp.ne.s32.totalorder %s601, %s615
      %p617 = scmp.eq.s32.totalorder %s53, 0
      %p618 = por %p616, %p617
      %p619 = scmp.le.s32.totalorder 1, %s47
      %p620 = scmp.lt.s32.totalorder %s47, 3
      %p621 = pnand %p619, %p620
      %p622 = pneg %p621
      // Predicated region
      $region9: #{bert_forward.1} parent=5 // pred_check
        _
      $region10: #{bert_forward.1} parent=5 // pred_check_branch
        %624 = sbr.rel (%p621) target = $region12
      $region11: #{bert_forward.1} parent=5 // pred_region
        %s625 = ssub.s32 %s47, 1
        // Predicated region
        $region13: #{bert_forward.1} parent=11 // pred_check
          %p626 = pneg %p68
        $region14: #{bert_forward.1} parent=11 // pred_check_branch
          %628 = sbr.rel (%p626) target = $region16
        $region15: #{bert_forward.1} parent=11 // pred_region
          _
        $region16: #{bert_forward.1} parent=11 // pred_fallthru
          _
        // Predicated region
        $region17: #{bert_forward.1} parent=11 // pred_check
          %p629 = pneg %p89
        $region18: #{bert_forward.1} parent=11 // pred_check_branch
          %631 = sbr.rel (%p629) target = $region20
        $region19: #{bert_forward.1} parent=11 // pred_region
          _
        $region20: #{bert_forward.1} parent=11 // pred_fallthru
          _
        // Predicated region
        $region21: #{bert_forward.1} parent=11 // pred_check
          %p632 = pneg %p110
        $region22: #{bert_forward.1} parent=11 // pred_check_branch
          %634 = sbr.rel (%p632) target = $region24
        $region23: #{bert_forward.1} parent=11 // pred_region
          _
        $region24: #{bert_forward.1} parent=11 // pred_fallthru
          _
        // Predicated region
        $region25: #{bert_forward.1} parent=11 // pred_check
          %p635 = pneg %p131
        $region26: #{bert_forward.1} parent=11 // pred_check_branch
          %637 = sbr.rel (%p635) target = $region28
        $region27: #{bert_forward.1} parent=11 // pred_region
          %639 = vsyncadd [#allocation4], 0
          %s640 = sshll.u32 %s3, 4
          %s641 = int_to_ptr.hbm [resolvable:$true] %s640
          %s642 = sshll.u32 [#allocation3], 4
          %s643 = int_to_ptr.vmem [resolvable:$true] %s642
          %648 = dma.hbm_to_vmem [thread:$0]  %s641, 2048, %s643, [#allocation4], 128, 128, 8
        $region28: #{bert_forward.1} parent=11 // pred_fallthru
          _
        // Predicated region
        $region29: #{bert_forward.1} parent=11 // pred_check
          %p649 = pneg %p152
        $region30: #{bert_forward.1} parent=11 // pred_check_branch
          %651 = sbr.rel (%p649) target = $region32
        $region31: #{bert_forward.1} parent=11 // pred_region
          _
        $region32: #{bert_forward.1} parent=11 // pred_fallthru
          _
        // Predicated region
        $region33: #{bert_forward.1} parent=11 // pred_check
          %p652 = pneg %p173
        $region34: #{bert_forward.1} parent=11 // pred_check_branch
          %654 = sbr.rel (%p652) target = $region36
        $region35: #{bert_forward.1} parent=11 // pred_region
          _
        $region36: #{bert_forward.1} parent=11 // pred_fallthru
          _
        // Predicated region
        $region37: #{bert_forward.1} parent=11 // pred_check
          %p655 = pneg %p194
        $region38: #{bert_forward.1} parent=11 // pred_check_branch
          %657 = sbr.rel (%p655) target = $region40
        $region39: #{bert_forward.1} parent=11 // pred_region
          %659 = vsyncadd [#allocation8], 0
          %s661 = sshll.u32 %s6, 4
          %s662 = int_to_ptr.hbm [resolvable:$true] %s661
          %s663 = sshll.u32 [#allocation7], 4
          %s664 = int_to_ptr.vmem [resolvable:$true] %s663
          %666 = dma.hbm_to_vmem [thread:$0]  %s662, 16, %s664, [#allocation8]
        $region40: #{bert_forward.1} parent=11 // pred_fallthru
          _
        // Predicated region
        $region41: #{bert_forward.1} parent=11 // pred_check
          %p667 = pneg %p215
        $region42: #{bert_forward.1} parent=11 // pred_check_branch
          %669 = sbr.rel (%p667) target = $region44
        $region43: #{bert_forward.1} parent=11 // pred_region
          %671 = vsyncadd [#allocation8], 0
          %s673 = sshll.u32 %s7, 4
          %s674 = int_to_ptr.hbm [resolvable:$true] %s673
          %s675 = sshll.u32 [#allocation9], 4
          %s676 = int_to_ptr.vmem [resolvable:$true] %s675
          %678 = dma.hbm_to_vmem [thread:$0]  %s674, 16, %s676, [#allocation8]
        $region44: #{bert_forward.1} parent=11 // pred_fallthru
          _
        // Predicated region
        $region45: #{bert_forward.1} parent=11 // pred_check
          %p679 = pneg %p548
        $region46: #{bert_forward.1} parent=11 // pred_check_branch
          %681 = sbr.rel (%p679) target = $region48
        $region47: #{bert_forward.1} parent=11 // pred_region
          %683 = vsyncadd [#allocation23], 0
          %s684 = sshll.u32 %s20, 4
          %s685 = int_to_ptr.hbm [resolvable:$true] %s684
          %s686 = sshll.u32 [#allocation22], 4
          %s687 = int_to_ptr.vmem [resolvable:$true] %s686
          %692 = dma.hbm_to_vmem [thread:$0]  %s685, 1024, %s687, [#allocation23], 64, 64, 4
        $region48: #{bert_forward.1} parent=11 // pred_fallthru
          _
        // Predicated region
        $region49: #{bert_forward.1} parent=11 // pred_check
          %p693 = pneg %p569
        $region50: #{bert_forward.1} parent=11 // pred_check_branch
          %695 = sbr.rel (%p693) target = $region52
        $region51: #{bert_forward.1} parent=11 // pred_region
          %697 = vsyncadd [#allocation23], 0
          %s699 = sshll.u32 %s21, 4
          %s700 = int_to_ptr.hbm [resolvable:$true] %s699
          %s701 = sshll.u32 [#allocation24], 4
          %s702 = int_to_ptr.vmem [resolvable:$true] %s701
          %704 = dma.hbm_to_vmem [thread:$0]  %s700, 16, %s702, [#allocation23]
        $region52: #{bert_forward.1} parent=11 // pred_fallthru
          _
      $region12: #{bert_forward.1} parent=5 // pred_fallthru
        _
      %p705 = scmp.lt.s32.totalorder %s47, 2
      // Predicated region
      $region53: #{bert_forward.1} parent=5 // pred_check
        %p706 = pneg %p705
      $region54: #{bert_forward.1} parent=5 // pred_check_branch
        %708 = sbr.rel (%p706) target = $region56
      $region55: #{bert_forward.1} parent=5 // pred_region
        // Predicated region
        $region57: #{bert_forward.1} parent=55 // pred_check
          %p709 = pneg %p235
        $region58: #{bert_forward.1} parent=55 // pred_check_branch
          %711 = sbr.rel (%p709) target = $region60
        $region59: #{bert_forward.1} parent=55 // pred_region
          %s712 = sand.u32 %s47, 1
          %s713 = scalar_lea.sflag [#allocation11], %s712
          %s714 = sand.u32 %s225, 1
          %s715 = smul.addr %s714, 192
          %s716 = scalar_lea.vmem [#allocation10], %s715
          %718 = vsyncadd %s713, 0
          %s719 = smul.addr %s47, 48
          %s720 = smul.addr %s719, 4
          %s721 = scalar_lea.hbm %s8, %s720
          %s722 = sshll.u32 %s721, 4
          %s723 = int_to_ptr.hbm [resolvable:$true] %s722
          %s724 = sshll.u32 %s716, 4
          %s725 = int_to_ptr.vmem [resolvable:$true] %s724
          %730 = dma.hbm_to_vmem [thread:$0]  %s723, 3072, %s725, %s713, 192, 192, 12
        $region60: #{bert_forward.1} parent=55 // pred_fallthru
          _
        // Predicated region
        $region61: #{bert_forward.1} parent=55 // pred_check
          %p731 = pneg %p261
        $region62: #{bert_forward.1} parent=55 // pred_check_branch
          %733 = sbr.rel (%p731) target = $region64
        $region63: #{bert_forward.1} parent=55 // pred_region
          %p734 = scmp.lt.s32.totalorder %s47, 1
          %s735 = scalar_select %p734, %s47, 1
          %s736 = smul.addr %s735, 3
          %s737 = scalar_lea.vmem %s9, %s736
        $region64: #{bert_forward.1} parent=55 // pred_fallthru
          _
        // Predicated region
        $region65: #{bert_forward.1} parent=55 // pred_check
          %p738 = pneg %p287
        $region66: #{bert_forward.1} parent=55 // pred_check_branch
          %740 = sbr.rel (%p738) target = $region68
        $region67: #{bert_forward.1} parent=55 // pred_region
          %s741 = sand.u32 %s47, 1
          %s742 = scalar_lea.sflag [#allocation11], %s741
          %s743 = sand.u32 %s277, 1
          %s744 = smul.addr %s743, 64
          %s745 = scalar_lea.vmem [#allocation12], %s744
          %747 = vsyncadd %s742, 0
          %s748 = smul.addr %s47, 16
          %s749 = smul.addr %s748, 4
          %s750 = scalar_lea.hbm %s10, %s749
          %s751 = sshll.u32 %s750, 4
          %s752 = int_to_ptr.hbm [resolvable:$true] %s751
          %s753 = sshll.u32 %s745, 4
          %s754 = int_to_ptr.vmem [resolvable:$true] %s753
          %759 = dma.hbm_to_vmem [thread:$0]  %s752, 1024, %s754, %s742, 64, 64, 4
        $region68: #{bert_forward.1} parent=55 // pred_fallthru
          _
        // Predicated region
        $region69: #{bert_forward.1} parent=55 // pred_check
          %p760 = pneg %p313
        $region70: #{bert_forward.1} parent=55 // pred_check_branch
          %762 = sbr.rel (%p760) target = $region72
        $region71: #{bert_forward.1} parent=55 // pred_region
          %s763 = sand.u32 %s47, 1
          %s764 = scalar_lea.sflag [#allocation14], %s763
          %s765 = sand.u32 %s303, 1
          %s766 = scalar_lea.vmem [#allocation13], %s765
          %768 = vsyncadd %s764, 0
          %s769 = scalar_lea.hbm %s11, %s47
          %s771 = sshll.u32 %s769, 4
          %s772 = int_to_ptr.hbm [resolvable:$true] %s771
          %s773 = sshll.u32 %s766, 4
          %s774 = int_to_ptr.vmem [resolvable:$true] %s773
          %776 = dma.hbm_to_vmem [thread:$0]  %s772, 16, %s774, %s764
        $region72: #{bert_forward.1} parent=55 // pred_fallthru
          _
        // Predicated region
        $region73: #{bert_forward.1} parent=55 // pred_check
          %p777 = pneg %p339
        $region74: #{bert_forward.1} parent=55 // pred_check_branch
          %779 = sbr.rel (%p777) target = $region76
        $region75: #{bert_forward.1} parent=55 // pred_region
          %p780 = scmp.lt.s32.totalorder %s47, 1
          %s781 = scalar_select %p780, %s47, 1
          %s782 = scalar_lea.vmem %s12, %s781
        $region76: #{bert_forward.1} parent=55 // pred_fallthru
          _
        // Predicated region
        $region77: #{bert_forward.1} parent=55 // pred_check
          %p783 = pneg %p365
        $region78: #{bert_forward.1} parent=55 // pred_check_branch
          %785 = sbr.rel (%p783) target = $region80
        $region79: #{bert_forward.1} parent=55 // pred_region
          %p786 = scmp.lt.s32.totalorder %s47, 1
          %s787 = scalar_select %p786, %s47, 1
          %s788 = scalar_lea.vmem %s13, %s787
        $region80: #{bert_forward.1} parent=55 // pred_fallthru
          _
        // Predicated region
        $region81: #{bert_forward.1} parent=55 // pred_check
          %p789 = pneg %p391
        $region82: #{bert_forward.1} parent=55 // pred_check_branch
          %791 = sbr.rel (%p789) target = $region84
        $region83: #{bert_forward.1} parent=55 // pred_region
          %s792 = sand.u32 %s47, 1
          %s793 = scalar_lea.sflag [#allocation14], %s792
          %s794 = sand.u32 %s381, 1
          %s795 = smul.addr %s794, 128
          %s796 = scalar_lea.vmem [#allocation15], %s795
          %798 = vsyncadd %s793, 0
          %s799 = smul.addr %s47, 32
          %s800 = smul.addr %s799, 4
          %s801 = scalar_lea.hbm %s14, %s800
          %s802 = sshll.u32 %s801, 4
          %s803 = int_to_ptr.hbm [resolvable:$true] %s802
          %s804 = sshll.u32 %s796, 4
          %s805 = int_to_ptr.vmem [resolvable:$true] %s804
          %810 = dma.hbm_to_vmem [thread:$0]  %s803, 2048, %s805, %s793, 128, 128, 8
        $region84: #{bert_forward.1} parent=55 // pred_fallthru
          _
        // Predicated region
        $region85: #{bert_forward.1} parent=55 // pred_check
          %p811 = pneg %p417
        $region86: #{bert_forward.1} parent=55 // pred_check_branch
          %813 = sbr.rel (%p811) target = $region88
        $region87: #{bert_forward.1} parent=55 // pred_region
          %s814 = sand.u32 %s47, 1
          %s815 = scalar_lea.sflag [#allocation17], %s814
          %s816 = sand.u32 %s407, 1
          %s817 = smul.addr %s816, 2
          %s818 = scalar_lea.vmem [#allocation16], %s817
          %820 = vsyncadd %s815, 0
          %s821 = smul.addr %s47, 2
          %s822 = scalar_lea.hbm %s15, %s821
          %s824 = sshll.u32 %s822, 4
          %s825 = int_to_ptr.hbm [resolvable:$true] %s824
          %s826 = sshll.u32 %s818, 4
          %s827 = int_to_ptr.vmem [resolvable:$true] %s826
          %829 = dma.hbm_to_vmem [thread:$0]  %s825, 32, %s827, %s815
        $region88: #{bert_forward.1} parent=55 // pred_fallthru
          _
        // Predicated region
        $region89: #{bert_forward.1} parent=55 // pred_check
          %p830 = pneg %p443
        $region90: #{bert_forward.1} parent=55 // pred_check_branch
          %832 = sbr.rel (%p830) target = $region92
        $region91: #{bert_forward.1} parent=55 // pred_region
          %s833 = sand.u32 %s47, 1
          %s834 = scalar_lea.sflag [#allocation17], %s833
          %s835 = sand.u32 %s433, 1
          %s836 = smul.addr %s835, 128
          %s837 = scalar_lea.vmem [#allocation18], %s836
          %839 = vsyncadd %s834, 0
          %s840 = smul.addr %s47, 32
          %s841 = smul.addr %s840, 4
          %s842 = scalar_lea.hbm %s16, %s841
          %s843 = sshll.u32 %s842, 4
          %s844 = int_to_ptr.hbm [resolvable:$true] %s843
          %s845 = sshll.u32 %s837, 4
          %s846 = int_to_ptr.vmem [resolvable:$true] %s845
          %851 = dma.hbm_to_vmem [thread:$0]  %s844, 2048, %s846, %s834, 64, 64, 4
        $region92: #{bert_forward.1} parent=55 // pred_fallthru
          _
        // Predicated region
        $region93: #{bert_forward.1} parent=55 // pred_check
          %p852 = pneg %p469
        $region94: #{bert_forward.1} parent=55 // pred_check_branch
          %854 = sbr.rel (%p852) target = $region96
        $region95: #{bert_forward.1} parent=55 // pred_region
          %s855 = sand.u32 %s47, 1
          %s856 = scalar_lea.sflag [#allocation20], %s855
          %s857 = sand.u32 %s459, 1
          %s858 = scalar_lea.vmem [#allocation19], %s857
          %860 = vsyncadd %s856, 0
          %s861 = scalar_lea.hbm %s17, %s47
          %s863 = sshll.u32 %s861, 4
          %s864 = int_to_ptr.hbm [resolvable:$true] %s863
          %s865 = sshll.u32 %s858, 4
          %s866 = int_to_ptr.vmem [resolvable:$true] %s865
          %868 = dma.hbm_to_vmem [thread:$0]  %s864, 16, %s866, %s856
        $region96: #{bert_forward.1} parent=55 // pred_fallthru
          _
        // Predicated region
        $region97: #{bert_forward.1} parent=55 // pred_check
          %p869 = pneg %p495
        $region98: #{bert_forward.1} parent=55 // pred_check_branch
          %871 = sbr.rel (%p869) target = $region100
        $region99: #{bert_forward.1} parent=55 // pred_region
          %p872 = scmp.lt.s32.totalorder %s47, 1
          %s873 = scalar_select %p872, %s47, 1
          %s874 = scalar_lea.vmem %s18, %s873
        $region100: #{bert_forward.1} parent=55 // pred_fallthru
          _
        // Predicated region
        $region101: #{bert_forward.1} parent=55 // pred_check
          %p875 = pneg %p521
        $region102: #{bert_forward.1} parent=55 // pred_check_branch
          %877 = sbr.rel (%p875) target = $region104
        $region103: #{bert_forward.1} parent=55 // pred_region
          %s878 = sand.u32 %s47, 1
          %s879 = scalar_lea.sflag [#allocation20], %s878
          %s880 = sand.u32 %s511, 1
          %s881 = scalar_lea.vmem [#allocation21], %s880
          %883 = vsyncadd %s879, 0
          %s884 = scalar_lea.hbm %s19, %s47
          %s886 = sshll.u32 %s884, 4
          %s887 = int_to_ptr.hbm [resolvable:$true] %s886
          %s888 = sshll.u32 %s881, 4
          %s889 = int_to_ptr.vmem [resolvable:$true] %s888
          %891 = dma.hbm_to_vmem [thread:$0]  %s887, 16, %s889, %s879
        $region104: #{bert_forward.1} parent=55 // pred_fallthru
          _
      $region56: #{bert_forward.1} parent=5 // pred_fallthru
        _
      %p892 = scmp.le.s32.totalorder 1, %s47
      %p893 = scmp.lt.s32.totalorder %s47, 3
      %p894 = pnand %p892, %p893
      %p895 = pneg %p894
      // Predicated region
      $region105: #{bert_forward.1} parent=5 // pred_check
        _
      $region106: #{bert_forward.1} parent=5 // pred_check_branch
        %897 = sbr.rel (%p894) target = $region108
      $region107: #{bert_forward.1} parent=5 // pred_region
        %s898 = ssub.s32 %s47, 1
        // Predicated region
        $region109: #{bert_forward.1} parent=107 // pred_check
          %p899 = pneg %p131
        $region110: #{bert_forward.1} parent=107 // pred_check_branch
          %901 = sbr.rel (%p899) target = $region112
        $region111: #{bert_forward.1} parent=107 // pred_region
          %903 = dma.done [#allocation4], 2048
        $region112: #{bert_forward.1} parent=107 // pred_fallthru
          _
        // Predicated region
        $region113: #{bert_forward.1} parent=107 // pred_check
          %p904 = pneg %p194
        $region114: #{bert_forward.1} parent=107 // pred_check_branch
          %906 = sbr.rel (%p904) target = $region116
        $region115: #{bert_forward.1} parent=107 // pred_region
          %908 = dma.done [#allocation8], 16
        $region116: #{bert_forward.1} parent=107 // pred_fallthru
          _
        // Predicated region
        $region117: #{bert_forward.1} parent=107 // pred_check
          %p909 = pneg %p215
        $region118: #{bert_forward.1} parent=107 // pred_check_branch
          %911 = sbr.rel (%p909) target = $region120
        $region119: #{bert_forward.1} parent=107 // pred_region
          %913 = dma.done [#allocation8], 16
        $region120: #{bert_forward.1} parent=107 // pred_fallthru
          _
        %s914 = sand.u32 %s52, 1
        %s915 = scalar_lea.sflag [#allocation11], %s914
        %s916 = sand.u32 %s228, 1
        %s917 = smul.addr %s916, 192
        %s918 = scalar_lea.vmem [#allocation10], %s917
        // Predicated region
        $region121: #{bert_forward.1} parent=107 // pred_check
          %p919 = pneg %p241
        $region122: #{bert_forward.1} parent=107 // pred_check_branch
          %921 = sbr.rel (%p919) target = $region124
        $region123: #{bert_forward.1} parent=107 // pred_region
          %923 = dma.done %s915, 3072
        $region124: #{bert_forward.1} parent=107 // pred_fallthru
          _
        %s924 = sand.u32 %s52, 1
        %s925 = scalar_lea.sflag [#allocation11], %s924
        %s926 = sand.u32 %s280, 1
        %s927 = smul.addr %s926, 64
        %s928 = scalar_lea.vmem [#allocation12], %s927
        // Predicated region
        $region125: #{bert_forward.1} parent=107 // pred_check
          %p929 = pneg %p293
        $region126: #{bert_forward.1} parent=107 // pred_check_branch
          %931 = sbr.rel (%p929) target = $region128
        $region127: #{bert_forward.1} parent=107 // pred_region
          %933 = dma.done %s925, 1024
        $region128: #{bert_forward.1} parent=107 // pred_fallthru
          _
        %s934 = sand.u32 %s52, 1
        %s935 = scalar_lea.sflag [#allocation14], %s934
        %s936 = sand.u32 %s306, 1
        %s937 = scalar_lea.vmem [#allocation13], %s936
        // Predicated region
        $region129: #{bert_forward.1} parent=107 // pred_check
          %p938 = pneg %p319
        $region130: #{bert_forward.1} parent=107 // pred_check_branch
          %940 = sbr.rel (%p938) target = $region132
        $region131: #{bert_forward.1} parent=107 // pred_region
          %942 = dma.done %s935, 16
        $region132: #{bert_forward.1} parent=107 // pred_fallthru
          _
        %s943 = sand.u32 %s52, 1
        %s944 = scalar_lea.sflag [#allocation14], %s943
        %s945 = sand.u32 %s384, 1
        %s946 = smul.addr %s945, 128
        %s947 = scalar_lea.vmem [#allocation15], %s946
        // Predicated region
        $region133: #{bert_forward.1} parent=107 // pred_check
          %p948 = pneg %p397
        $region134: #{bert_forward.1} parent=107 // pred_check_branch
          %950 = sbr.rel (%p948) target = $region136
        $region135: #{bert_forward.1} parent=107 // pred_region
          %952 = dma.done %s944, 2048
        $region136: #{bert_forward.1} parent=107 // pred_fallthru
          _
        %s953 = sand.u32 %s52, 1
        %s954 = scalar_lea.sflag [#allocation17], %s953
        %s955 = sand.u32 %s410, 1
        %s956 = smul.addr %s955, 2
        %s957 = scalar_lea.vmem [#allocation16], %s956
        // Predicated region
        $region137: #{bert_forward.1} parent=107 // pred_check
          %p958 = pneg %p423
        $region138: #{bert_forward.1} parent=107 // pred_check_branch
          %960 = sbr.rel (%p958) target = $region140
        $region139: #{bert_forward.1} parent=107 // pred_region
          %962 = dma.done %s954, 32
        $region140: #{bert_forward.1} parent=107 // pred_fallthru
          _
        %s963 = sand.u32 %s52, 1
        %s964 = scalar_lea.sflag [#allocation17], %s963
        %s965 = sand.u32 %s436, 1
        %s966 = smul.addr %s965, 128
        %s967 = scalar_lea.vmem [#allocation18], %s966
        // Predicated region
        $region141: #{bert_forward.1} parent=107 // pred_check
          %p968 = pneg %p449
        $region142: #{bert_forward.1} parent=107 // pred_check_branch
          %970 = sbr.rel (%p968) target = $region144
        $region143: #{bert_forward.1} parent=107 // pred_region
          %972 = dma.done %s964, 2048
        $region144: #{bert_forward.1} parent=107 // pred_fallthru
          _
        %s973 = sand.u32 %s52, 1
        %s974 = scalar_lea.sflag [#allocation20], %s973
        %s975 = sand.u32 %s462, 1
        %s976 = scalar_lea.vmem [#allocation19], %s975
        // Predicated region
        $region145: #{bert_forward.1} parent=107 // pred_check
          %p977 = pneg %p475
        $region146: #{bert_forward.1} parent=107 // pred_check_branch
          %979 = sbr.rel (%p977) target = $region148
        $region147: #{bert_forward.1} parent=107 // pred_region
          %981 = dma.done %s974, 16
        $region148: #{bert_forward.1} parent=107 // pred_fallthru
          _
        %s982 = sand.u32 %s52, 1
        %s983 = scalar_lea.sflag [#allocation20], %s982
        %s984 = sand.u32 %s514, 1
        %s985 = scalar_lea.vmem [#allocation21], %s984
        // Predicated region
        $region149: #{bert_forward.1} parent=107 // pred_check
          %p986 = pneg %p527
        $region150: #{bert_forward.1} parent=107 // pred_check_branch
          %988 = sbr.rel (%p986) target = $region152
        $region151: #{bert_forward.1} parent=107 // pred_region
          %990 = dma.done %s983, 16
        $region152: #{bert_forward.1} parent=107 // pred_fallthru
          _
        // Predicated region
        $region153: #{bert_forward.1} parent=107 // pred_check
          %p991 = pneg %p548
        $region154: #{bert_forward.1} parent=107 // pred_check_branch
          %993 = sbr.rel (%p991) target = $region156
        $region155: #{bert_forward.1} parent=107 // pred_region
          %995 = dma.done [#allocation23], 1024
        $region156: #{bert_forward.1} parent=107 // pred_fallthru
          _
        // Predicated region
        $region157: #{bert_forward.1} parent=107 // pred_check
          %p996 = pneg %p569
        $region158: #{bert_forward.1} parent=107 // pred_check_branch
          %998 = sbr.rel (%p996) target = $region160
        $region159: #{bert_forward.1} parent=107 // pred_region
          %1000 = dma.done [#allocation23], 16
        $region160: #{bert_forward.1} parent=107 // pred_fallthru
          _
        %p1001 = pneg %p68
        %p1002 = pneg %p65
        %p1003 = pneg %p89
        %p1004 = pneg %p86
        %p1005 = pneg %p110
        %p1006 = pneg %p107
        %p1007 = pneg %p131
        %p1008 = pneg %p128
        %p1009 = pneg %p152
        %p1010 = pneg %p149
        %p1011 = pneg %p173
        %p1012 = pneg %p170
        %p1013 = pneg %p194
        %p1014 = pneg %p191
        %p1015 = pneg %p215
        %p1016 = pneg %p212
        %s1017 = sand.u32 %s52, 1
        %s1018 = scalar_lea.sflag [#allocation11], %s1017
        %s1019 = sand.u32 %s228, 1
        %s1020 = smul.addr %s1019, 192
        %s1021 = scalar_lea.vmem [#allocation10], %s1020
        %p1022 = pneg %p241
        %p1023 = pneg %p238
        %p1024 = scmp.lt.s32.totalorder %s52, 1
        %s1025 = scalar_select %p1024, %s52, 1
        %s1026 = smul.addr %s1025, 3
        %s1027 = scalar_lea.vmem %s9, %s1026
        %p1028 = pneg %p267
        %p1029 = pneg %p264
        %s1030 = sand.u32 %s52, 1
        %s1031 = scalar_lea.sflag [#allocation11], %s1030
        %s1032 = sand.u32 %s280, 1
        %s1033 = smul.addr %s1032, 64
        %s1034 = scalar_lea.vmem [#allocation12], %s1033
        %p1035 = pneg %p293
        %p1036 = pneg %p290
        %s1037 = sand.u32 %s52, 1
        %s1038 = scalar_lea.sflag [#allocation14], %s1037
        %s1039 = sand.u32 %s306, 1
        %s1040 = scalar_lea.vmem [#allocation13], %s1039
        %p1041 = pneg %p319
        %p1042 = pneg %p316
        %p1043 = scmp.lt.s32.totalorder %s52, 1
        %s1044 = scalar_select %p1043, %s52, 1
        %s1045 = scalar_lea.vmem %s12, %s1044
        %p1046 = pneg %p345
        %p1047 = pneg %p342
        %p1048 = scmp.lt.s32.totalorder %s52, 1
        %s1049 = scalar_select %p1048, %s52, 1
        %s1050 = scalar_lea.vmem %s13, %s1049
        %p1051 = pneg %p371
        %p1052 = pneg %p368
        %s1053 = sand.u32 %s52, 1
        %s1054 = scalar_lea.sflag [#allocation14], %s1053
        %s1055 = sand.u32 %s384, 1
        %s1056 = smul.addr %s1055, 128
        %s1057 = scalar_lea.vmem [#allocation15], %s1056
        %p1058 = pneg %p397
        %p1059 = pneg %p394
        %s1060 = sand.u32 %s52, 1
        %s1061 = scalar_lea.sflag [#allocation17], %s1060
        %s1062 = sand.u32 %s410, 1
        %s1063 = smul.addr %s1062, 2
        %s1064 = scalar_lea.vmem [#allocation16], %s1063
        %p1065 = pneg %p423
        %p1066 = pneg %p420
        %s1067 = sand.u32 %s52, 1
        %s1068 = scalar_lea.sflag [#allocation17], %s1067
        %s1069 = sand.u32 %s436, 1
        %s1070 = smul.addr %s1069, 128
        %s1071 = scalar_lea.vmem [#allocation18], %s1070
        %p1072 = pneg %p449
        %p1073 = pneg %p446
        %s1074 = sand.u32 %s52, 1
        %s1075 = scalar_lea.sflag [#allocation20], %s1074
        %s1076 = sand.u32 %s462, 1
        %s1077 = scalar_lea.vmem [#allocation19], %s1076
        %p1078 = pneg %p475
        %p1079 = pneg %p472
        %p1080 = scmp.lt.s32.totalorder %s52, 1
        %s1081 = scalar_select %p1080, %s52, 1
        %s1082 = scalar_lea.vmem %s18, %s1081
        %p1083 = pneg %p501
        %p1084 = pneg %p498
        %s1085 = sand.u32 %s52, 1
        %s1086 = scalar_lea.sflag [#allocation20], %s1085
        %s1087 = sand.u32 %s514, 1
        %s1088 = scalar_lea.vmem [#allocation21], %s1087
        %p1089 = pneg %p527
        %p1090 = pneg %p524
        %p1091 = pneg %p548
        %p1092 = pneg %p545
        %p1093 = pneg %p569
        %p1094 = pneg %p566
        %p1095 = pneg %p590
        %p1096 = pneg %p587
        %p1097 = pneg %p611
        %p1098 = pneg %p608
        %p1099 = scmp.lt.s32.totalorder %s52, 1
        %s1100 = scalar_select %p1099, %s52, 1
        %s1101 = smul.addr %s1100, 3
        %s1102 = scalar_lea.vmem %s9, %s1101
        %p1103 = scmp.lt.s32.totalorder %s52, 1
        %s1104 = scalar_select %p1103, %s52, 1
        %s1105 = scalar_lea.vmem %s12, %s1104
        %p1106 = scmp.lt.s32.totalorder %s52, 1
        %s1107 = scalar_select %p1106, %s52, 1
        %s1108 = scalar_lea.vmem %s13, %s1107
        %p1109 = scmp.lt.s32.totalorder %s52, 1
        %s1110 = scalar_select %p1109, %s52, 1
        %s1111 = scalar_lea.vmem %s18, %s1110
        %p1113 = scmp.eq.s32.totalorder %s52, 0
        // Predicated region
        $region161: #{bert_forward.1} parent=107 // pred_check
          %p1114 = pneg %p1113
        $region162: #{bert_forward.1} parent=107 // pred_check_branch
          %1116 = sbr.rel (%p1114) target = $region164
        $region163: #{bert_forward.1} parent=107 // pred_region
          %v1117 = vld [vmem:[%s0] sm:$0x3]
          %v1118 = vlaneseq
          %v1119 = vand.u32 %v1118, 127
          %v1120 = vperm.slane %v1117, 0
          %v1121 = vlaneseq
          %v1122 = vshrl.u32 %v1121, 7
          %1124 = vset.pattern.permute.xlu0 %v1122
          %1125 = vperm.xlu0 %1124, %v1120
          %v1126 = vpop.permute.xlu0 %1125
          %v1127 = vperm.slane %v1117, 1
          %v1128 = vlaneseq
          %v1129 = vshrl.u32 %v1128, 7
          %1131 = vset.pattern.permute.xlu0 %v1129
          %1132 = vperm.xlu0 %1131, %v1127
          %v1133 = vpop.permute.xlu0 %1132
          %vm1134 = vcmp.eq.s32.totalorder %v1119, %v1126
          %vm1135 = vcmp.eq.s32.totalorder %v1119, %v1133
          %v1136 = vsel %vm1134, 1, 0
          %v1137 = vsel %vm1135, 1, 0
          %v1138 = vcvt.s32.f32 %v1136
          %v1139 = vcvt.s32.f32 %v1137
          %v1140 = vld [vmem:[#allocation3] sm:$0xff]
          %v1141 = vld [vmem:[#allocation3 + $0x8] sm:$0xff]
          %v1142 = vld [vmem:[#allocation3 + $0x10] sm:$0xff]
          %v1143 = vld [vmem:[#allocation3 + $0x18] sm:$0xff]
          %v1144 = vld [vmem:[#allocation3 + $0x20] sm:$0xff]
          %v1145 = vld [vmem:[#allocation3 + $0x28] sm:$0xff]
          %v1146 = vld [vmem:[#allocation3 + $0x30] sm:$0xff]
          %v1147 = vld [vmem:[#allocation3 + $0x38] sm:$0xff]
          %v1148 = vld [vmem:[#allocation3 + $0x40] sm:$0xff]
          %v1149 = vld [vmem:[#allocation3 + $0x48] sm:$0xff]
          %v1150 = vld [vmem:[#allocation3 + $0x50] sm:$0xff]
          %v1151 = vld [vmem:[#allocation3 + $0x58] sm:$0xff]
          %v1152 = vld [vmem:[#allocation3 + $0x60] sm:$0xff]
          %v1153 = vld [vmem:[#allocation3 + $0x68] sm:$0xff]
          %v1154 = vld [vmem:[#allocation3 + $0x70] sm:$0xff]
          %v1155 = vld [vmem:[#allocation3 + $0x78] sm:$0xff]
          %1156 = vmatpush.msra.mxu0 %v1155
          %1157 = vmatpush.msra.mxu0 %v1154
          %1158 = vmatpush.msra.mxu0 %v1153
          %1159 = vmatpush.msra.mxu0 %v1152
          %1160 = vmatpush.msra.mxu0 %v1151
          %1161 = vmatpush.msra.mxu0 %v1150
          %1162 = vmatpush.msra.mxu0 %v1149
          %1163 = vmatpush.msra.mxu0 %v1148
          %1164 = vmatpush.msra.mxu0 %v1147
          %1165 = vmatpush.msra.mxu0 %v1146
          %1166 = vmatpush.msra.mxu0 %v1145
          %1167 = vmatpush.msra.mxu0 %v1144
          %1168 = vmatpush.msra.mxu0 %v1143
          %1169 = vmatpush.msra.mxu0 %v1142
          %1170 = vmatpush.msra.mxu0 %v1141
          %1171 = vmatpush.msra.mxu0 %v1140
          %1172 = vmatmul.f32.gmra.mxu0 %v1138
          %v1173 = vpop.f32.mrf.mxu0
          %v1174 = vadd.f32 0.0, %v1173
          %1175 = vmatmul.f32.gmra.mxu0 %v1139
          %v1176 = vpop.f32.mrf.mxu0
          %v1177 = vadd.f32 0.0, %v1176
          %1178 = vdwg.mxu0
          %v1179 = vld [vmem:[%s4] sm:$0xff]
          %v1180 = vadd.f32 %v1174, %v1179
          %v1181 = vadd.f32 %v1177, %v1179
          %v1182 = vld [vmem:[%s5] sm:$0x1]
          %v1184 = vperm.slane %v1182, 0
          %v1186 = vadd.f32 %v1180, %v1184
          %v1187 = vadd.f32 %v1181, %v1184
          %v1188 = vld [vmem:[#allocation7] sm:$0x1]
          %v1189 = vld [vmem:[#allocation9] sm:$0x1]
          %1190 = vadd.xlane.f32.xlu0 %v1186
          %v1191 = vpop.xlane.xlu0 %1190
          %1192 = vadd.xlane.f32.xlu0 %v1187
          %v1193 = vpop.xlane.xlu0 %1192
          %v1194 = vrcp.pop 128.0
          %v1195 = vmul.f32 128.0, %v1194
          %v1196 = vsub.f32 1.0, %v1195
          %v1197 = vmul.f32 %v1194, %v1196
          %v1198 = vadd.f32 %v1194, %v1197
          %vm1199 = vweird.f32 %v1194
          %v1200 = vsel %vm1199, %v1194, %v1198
          %v1201 = vmul.f32 %v1191, %v1200
          %v1202 = vmul.f32 %v1193, %v1200
          %v1203 = vsub.f32 %v1186, %v1201
          %v1204 = vsub.f32 %v1187, %v1202
          %v1205 = vmul.f32 %v1203, %v1203
          %v1206 = vmul.f32 %v1204, %v1204
          %1207 = vadd.xlane.f32.xlu0 %v1205
          %v1208 = vpop.xlane.xlu0 %1207
          %1209 = vadd.xlane.f32.xlu0 %v1206
          %v1210 = vpop.xlane.xlu0 %1209
          %v1211 = vmul.f32 %v1208, %v1200
          %v1212 = vmul.f32 %v1210, %v1200
          %v1213 = vadd.f32 %v1211, 1e-12
          %v1214 = vadd.f32 %v1212, 1e-12
          %v1215 = vrsqrt.pop %v1213
          %v1216 = vmul.f32 %v1215, %v1213
          %v1217 = vmul.f32 %v1216, %v1215
          %v1218 = vmul.f32 0.5, %v1217
          %v1219 = vsub.f32 1.5, %v1218
          %v1220 = vmul.f32 %v1215, %v1219
          %vm1221 = vweird.f32 %v1213
          %vm1222 = vweird.f32 %v1215
          %vm1223 = vmor %vm1221, %vm1222
          %v1224 = vsel %vm1223, %v1215, %v1220
          %v1225 = vrsqrt.pop %v1214
          %v1226 = vmul.f32 %v1225, %v1214
          %v1227 = vmul.f32 %v1226, %v1225
          %v1228 = vmul.f32 0.5, %v1227
          %v1229 = vsub.f32 1.5, %v1228
          %v1230 = vmul.f32 %v1225, %v1229
          %vm1231 = vweird.f32 %v1214
          %vm1232 = vweird.f32 %v1225
          %vm1233 = vmor %vm1231, %vm1232
          %v1234 = vsel %vm1233, %v1225, %v1230
          %v1235 = vmul.f32 %v1203, %v1224
          %v1236 = vmul.f32 %v1204, %v1234
          %v1238 = vperm.slane %v1188, 0
          %v1240 = vmul.f32 %v1235, %v1238
          %v1241 = vmul.f32 %v1236, %v1238
          %v1243 = vperm.slane %v1189, 0
          %v1245 = vadd.f32 %v1240, %v1243
          %v1246 = vadd.f32 %v1241, %v1243
          %1247 = vst [vmem:[#allocation2] sm:$0xff] %v1245
          %1248 = vst [vmem:[#allocation2 + $0x8] sm:$0xff] %v1246
        $region164: #{bert_forward.1} parent=107 // pred_fallthru
          _
        %v1249 = vld [vmem:[#allocation2] sm:$0xff]
        %v1250 = vld [vmem:[#allocation2 + $0x8] sm:$0xff]
        %v1251 = vpack.c.bf16 %v1250, %v1249
        %v1252 = vld [vmem:[%s1] sm:$0x3]
        %v1253 = vcvt.s32.f32 %v1252
        %v1254 = vsub.f32 1.0, %v1253
        %v1255 = vmul.f32 %v1254, -10000.0
        %v1257 = vrot.slane %v1255, 1
        %v1258 = vld [vmem:[%s918] sm:$0xff]
        %v1259 = vld [vmem:[%s918 + $0x8] sm:$0xf]
        %v1260 = vld [vmem:[%s918 + $0xc] sm:$0xff]
        %v1261 = vld [vmem:[%s918 + $0x14] sm:$0xf]
        %v1262 = vld [vmem:[%s918 + $0x18] sm:$0xff]
        %v1263 = vld [vmem:[%s918 + $0x20] sm:$0xf]
        %v1264 = vld [vmem:[%s918 + $0x24] sm:$0xff]
        %v1265 = vld [vmem:[%s918 + $0x2c] sm:$0xf]
        %v1266 = vld [vmem:[%s918 + $0x30] sm:$0xff]
        %v1267 = vld [vmem:[%s918 + $0x38] sm:$0xf]
        %v1268 = vld [vmem:[%s918 + $0x3c] sm:$0xff]
        %v1269 = vld [vmem:[%s918 + $0x44] sm:$0xf]
        %v1270 = vld [vmem:[%s918 + $0x48] sm:$0xff]
        %v1271 = vld [vmem:[%s918 + $0x50] sm:$0xf]
        %v1272 = vld [vmem:[%s918 + $0x54] sm:$0xff]
        %v1273 = vld [vmem:[%s918 + $0x5c] sm:$0xf]
        %v1274 = vld [vmem:[%s918 + $0x60] sm:$0xff]
        %v1275 = vld [vmem:[%s918 + $0x68] sm:$0xf]
        %v1276 = vld [vmem:[%s918 + $0x6c] sm:$0xff]
        %v1277 = vld [vmem:[%s918 + $0x74] sm:$0xf]
        %v1278 = vld [vmem:[%s918 + $0x78] sm:$0xff]
        %v1279 = vld [vmem:[%s918 + $0x80] sm:$0xf]
        %v1280 = vld [vmem:[%s918 + $0x84] sm:$0xff]
        %v1281 = vld [vmem:[%s918 + $0x8c] sm:$0xf]
        %v1282 = vld [vmem:[%s918 + $0x90] sm:$0xff]
        %v1283 = vld [vmem:[%s918 + $0x98] sm:$0xf]
        %v1284 = vld [vmem:[%s918 + $0x9c] sm:$0xff]
        %v1285 = vld [vmem:[%s918 + $0xa4] sm:$0xf]
        %v1286 = vld [vmem:[%s918 + $0xa8] sm:$0xff]
        %v1287 = vld [vmem:[%s918 + $0xb0] sm:$0xf]
        %v1288 = vld [vmem:[%s918 + $0xb4] sm:$0xff]
        %v1289 = vld [vmem:[%s918 + $0xbc] sm:$0xf]
        %v1290 = vld [vmem:[%s1102] sm:$0x7]
        %v1292 = vperm.slane %v1290, 0
        %v1293 = vperm.slane %v1290, 1
        %v1294 = vperm.slane %v1290, 2
        %v1330 = vunpack.c.l.b16 %v1258
        %v1331 = vunpack.c.h.b16 %v1258
        %v1332 = vunpack.c.l.b16 %v1259
        %v1333 = vunpack.c.l.b16 %v1260
        %v1334 = vunpack.c.h.b16 %v1260
        %v1335 = vunpack.c.l.b16 %v1261
        %v1336 = vunpack.c.l.b16 %v1262
        %v1337 = vunpack.c.h.b16 %v1262
        %v1338 = vunpack.c.l.b16 %v1263
        %v1339 = vunpack.c.l.b16 %v1264
        %v1340 = vunpack.c.h.b16 %v1264
        %v1341 = vunpack.c.l.b16 %v1265
        %v1342 = vunpack.c.l.b16 %v1266
        %v1343 = vunpack.c.h.b16 %v1266
        %v1344 = vunpack.c.l.b16 %v1267
        %v1345 = vunpack.c.l.b16 %v1268
        %v1346 = vunpack.c.h.b16 %v1268
        %v1347 = vunpack.c.l.b16 %v1269
        %v1348 = vunpack.c.l.b16 %v1270
        %v1349 = vunpack.c.h.b16 %v1270
        %v1350 = vunpack.c.l.b16 %v1271
        %v1351 = vunpack.c.l.b16 %v1272
        %v1352 = vunpack.c.h.b16 %v1272
        %v1353 = vunpack.c.l.b16 %v1273
        %v1354 = vunpack.c.l.b16 %v1274
        %v1355 = vunpack.c.h.b16 %v1274
        %v1356 = vunpack.c.l.b16 %v1275
        %v1357 = vunpack.c.l.b16 %v1276
        %v1358 = vunpack.c.h.b16 %v1276
        %v1359 = vunpack.c.l.b16 %v1277
        %v1360 = vunpack.c.l.b16 %v1278
        %v1361 = vunpack.c.h.b16 %v1278
        %v1362 = vunpack.c.l.b16 %v1279
        %v1363 = vunpack.c.l.b16 %v1280
        %v1364 = vunpack.c.h.b16 %v1280
        %v1365 = vunpack.c.l.b16 %v1281
        %v1366 = vunpack.c.l.b16 %v1282
        %v1367 = vunpack.c.h.b16 %v1282
        %v1368 = vunpack.c.l.b16 %v1283
        %v1369 = vunpack.c.l.b16 %v1284
        %v1370 = vunpack.c.h.b16 %v1284
        %v1371 = vunpack.c.l.b16 %v1285
        %v1372 = vunpack.c.l.b16 %v1286
        %v1373 = vunpack.c.h.b16 %v1286
        %v1374 = vunpack.c.l.b16 %v1287
        %v1375 = vunpack.c.l.b16 %v1288
        %v1376 = vunpack.c.h.b16 %v1288
        %v1377 = vunpack.c.l.b16 %v1289
        %v1378 = vpack.c.b16 %v1333, %v1330
        %v1379 = vpack.c.b16 %v1334, %v1331
        %v1380 = vpack.c.b16 %v1335, %v1332
        %v1381 = vpack.c.b16 %v1339, %v1336
        %v1382 = vpack.c.b16 %v1340, %v1337
        %v1383 = vpack.c.b16 %v1341, %v1338
        %v1384 = vpack.c.b16 %v1345, %v1342
        %v1385 = vpack.c.b16 %v1346, %v1343
        %v1386 = vpack.c.b16 %v1347, %v1344
        %v1387 = vpack.c.b16 %v1351, %v1348
        %v1388 = vpack.c.b16 %v1352, %v1349
        %v1389 = vpack.c.b16 %v1353, %v1350
        %v1390 = vpack.c.b16 %v1357, %v1354
        %v1391 = vpack.c.b16 %v1358, %v1355
        %v1392 = vpack.c.b16 %v1359, %v1356
        %v1393 = vpack.c.b16 %v1363, %v1360
        %v1394 = vpack.c.b16 %v1364, %v1361
        %v1395 = vpack.c.b16 %v1365, %v1362
        %v1396 = vpack.c.b16 %v1369, %v1366
        %v1397 = vpack.c.b16 %v1370, %v1367
        %v1398 = vpack.c.b16 %v1371, %v1368
        %v1399 = vpack.c.b16 %v1375, %v1372
        %v1400 = vpack.c.b16 %v1376, %v1373
        %v1401 = vpack.c.b16 %v1377, %v1374
        %1426 = vmatpush.bf16.msra.mxu0 %v1399
        %1427 = vmatpush.bf16.msra.mxu0 %v1396
        %1428 = vmatpush.bf16.msra.mxu0 %v1393
        %1429 = vmatpush.bf16.msra.mxu0 %v1390
        %1430 = vmatpush.bf16.msra.mxu0 %v1387
        %1431 = vmatpush.bf16.msra.mxu0 %v1384
        %1432 = vmatpush.bf16.msra.mxu0 %v1381
        %1433 = vmatpush.bf16.msra.mxu0 %v1378
        %1434 = vmatmul.bf16.gmra.mxu0 %v1251
        %v1435 = vpop.f32.mrf.mxu0
        %v1436 = vadd.f32 %v1292, %v1435
        %v1437 = vpop.f32.mrf.mxu0
        %v1438 = vadd.f32 %v1292, %v1437
        %1439 = vdwg.mxu0
        %1440 = vmatpush.bf16.msra.mxu0 %v1400
        %1441 = vmatpush.bf16.msra.mxu0 %v1397
        %1442 = vmatpush.bf16.msra.mxu0 %v1394
        %1443 = vmatpush.bf16.msra.mxu0 %v1391
        %1444 = vmatpush.bf16.msra.mxu0 %v1388
        %1445 = vmatpush.bf16.msra.mxu0 %v1385
        %1446 = vmatpush.bf16.msra.mxu0 %v1382
        %1447 = vmatpush.bf16.msra.mxu0 %v1379
        %1448 = vmatmul.bf16.gmra.mxu0 %v1251
        %v1449 = vpop.f32.mrf.mxu0
        %v1450 = vadd.f32 %v1293, %v1449
        %v1451 = vpop.f32.mrf.mxu0
        %v1452 = vadd.f32 %v1293, %v1451
        %1453 = vdwg.mxu0
        %1454 = vmatpush.bf16.msra.mxu0 %v1401
        %1455 = vmatpush.bf16.msra.mxu0 %v1398
        %1456 = vmatpush.bf16.msra.mxu0 %v1395
        %1457 = vmatpush.bf16.msra.mxu0 %v1392
        %1458 = vmatpush.bf16.msra.mxu0 %v1389
        %1459 = vmatpush.bf16.msra.mxu0 %v1386
        %1460 = vmatpush.bf16.msra.mxu0 %v1383
        %1461 = vmatpush.bf16.msra.mxu0 %v1380
        %1462 = vmatmul.bf16.gmra.mxu0 %v1251
        %v1463 = vpop.f32.mrf.mxu0
        %v1464 = vadd.f32 %v1294, %v1463
        %v1465 = vpop.f32.mrf.mxu0
        %v1466 = vadd.f32 %v1294, %v1465
        %1467 = vdwg.mxu0
        %v1468 = vld [vmem:[%s928] sm:$0xf]
        %v1469 = vld [vmem:[%s928 + $0x4] sm:$0xf]
        %v1470 = vld [vmem:[%s928 + $0x8] sm:$0xf]
        %v1471 = vld [vmem:[%s928 + $0xc] sm:$0xf]
        %v1472 = vld [vmem:[%s928 + $0x10] sm:$0xf]
        %v1473 = vld [vmem:[%s928 + $0x14] sm:$0xf]
        %v1474 = vld [vmem:[%s928 + $0x18] sm:$0xf]
        %v1475 = vld [vmem:[%s928 + $0x1c] sm:$0xf]
        %v1476 = vld [vmem:[%s928 + $0x20] sm:$0xf]
        %v1477 = vld [vmem:[%s928 + $0x24] sm:$0xf]
        %v1478 = vld [vmem:[%s928 + $0x28] sm:$0xf]
        %v1479 = vld [vmem:[%s928 + $0x2c] sm:$0xf]
        %v1480 = vld [vmem:[%s928 + $0x30] sm:$0xf]
        %v1481 = vld [vmem:[%s928 + $0x34] sm:$0xf]
        %v1482 = vld [vmem:[%s928 + $0x38] sm:$0xf]
        %v1483 = vld [vmem:[%s928 + $0x3c] sm:$0xf]
        %v1484 = vld [vmem:[%s937] sm:$0x1]
        %v1486 = vperm.slane %v1484, 0
        %v1488 = vadd.f32 %v1486, 0.0
        %v1489 = vpack.c.bf16 %v1436, %v1436
        %v1490 = vpack.c.bf16 %v1438, %v1438
        %v1491 = vpack.c.bf16 %v1450, %v1450
        %v1492 = vpack.c.bf16 %v1452, %v1452
        %v1493 = vpack.c.bf16 %v1464, %v1464
        %v1494 = vpack.c.bf16 %v1466, %v1466
        %vm1495 = vcmask 523264
        %v1497 = vsel %vm1495, %v1489, 0
        %v1500 = vsel %vm1495, %v1491, 0
        %1502 = vmatpush.bf16.xpose.msra.mxu0 0
        %1503 = vmatpush.bf16.xpose.msra.mxu0 0
        %1504 = vmatpush.bf16.xpose.msra.mxu0 0
        %1505 = vmatpush.bf16.xpose.msra.mxu0 0
        %1506 = vmatpush.bf16.xpose.msra.mxu0 0
        %1507 = vmatpush.bf16.xpose.msra.mxu0 0
        %1508 = vmatpush.bf16.xpose.msra.mxu0 0
        %1509 = vmatpush.bf16.xpose.msra.mxu0 %v1500
        %1510 = vmatmul.bf16.gmra.mxu0 %v1497
        %v1511 = vpop.f32.mrf.mxu0
        %v1512 = vadd.f32 0.0, %v1511
        %v1513 = vpop.f32.mrf.mxu0
        %1514 = vdwg.mxu0
        %v1516 = vsel %vm1495, %v1490, 0
        %v1519 = vsel %vm1495, %v1492, 0
        %1521 = vmatpush.bf16.xpose.msra.mxu0 0
        %1522 = vmatpush.bf16.xpose.msra.mxu0 0
        %1523 = vmatpush.bf16.xpose.msra.mxu0 0
        %1524 = vmatpush.bf16.xpose.msra.mxu0 0
        %1525 = vmatpush.bf16.xpose.msra.mxu0 0
        %1526 = vmatpush.bf16.xpose.msra.mxu0 0
        %1527 = vmatpush.bf16.xpose.msra.mxu0 0
        %1528 = vmatpush.bf16.xpose.msra.mxu0 %v1519
        %1529 = vmatmul.bf16.gmra.mxu0 %v1516
        %v1530 = vpop.f32.mrf.mxu0
        %v1531 = vadd.f32 0.0, %v1530
        %v1532 = vpop.f32.mrf.mxu0
        %1533 = vdwg.mxu0
        %v1534 = vmul.f32 %v1512, 0.125
        %v1535 = vmul.f32 %v1531, 0.125
        %v1536 = vperm.slane %v1255, 0
        %v1537 = vperm.slane %v1257, 0
        %v1540 = vadd.f32 %v1534, %v1536
        %v1541 = vadd.f32 %v1535, %v1537
        %vm1542 = vcmask 64512
        %v1543 = vsel %vm1542, %v1540, -inf
        %1544 = vmax.xlane.f32.xlu0 %v1543
        %v1545 = vpop.xlane.xlu0 %1544
        %v1546 = vsel %vm1542, %v1541, -inf
        %1547 = vmax.xlane.f32.xlu0 %v1546
        %v1548 = vpop.xlane.xlu0 %1547
        %v1549 = vsub.f32 %v1540, %v1545
        %v1550 = vsub.f32 %v1541, %v1548
        %v1551 = vmul.f32 %v1549, 1.442695
        %v1552 = vpow.pop %v1551
        %v1553 = vmul.f32 %v1550, 1.442695
        %v1554 = vpow.pop %v1553
        %v1555 = vsel %vm1542, %v1552, 0.0
        %1556 = vadd.xlane.f32.xlu0 %v1555
        %v1557 = vpop.xlane.xlu0 %1556
        %v1558 = vsel %vm1542, %v1554, 0.0
        %1559 = vadd.xlane.f32.xlu0 %v1558
        %v1560 = vpop.xlane.xlu0 %1559
        %v1561 = vrcp.pop %v1557
        %v1562 = vrcp.pop %v1560
        %v1563 = vmul.f32 %v1552, %v1561
        %v1564 = vmul.f32 %v1554, %v1562
        %v1565 = vpack.c.bf16 %v1563, %v1563
        %v1566 = vpack.c.bf16 %v1564, %v1564
        %v1568 = vsel %vm1542, %v1565, 0
        %vm1570 = vcmask 1043456
        %v1572 = vsel %vm1570, %v1493, 0
        %1574 = vmatpush.bf16.msra.mxu0 0
        %1575 = vmatpush.bf16.msra.mxu0 0
        %1576 = vmatpush.bf16.msra.mxu0 0
        %1577 = vmatpush.bf16.msra.mxu0 0
        %1578 = vmatpush.bf16.msra.mxu0 0
        %1579 = vmatpush.bf16.msra.mxu0 0
        %1580 = vmatpush.bf16.msra.mxu0 0
        %1581 = vmatpush.bf16.msra.mxu0 %v1572
        %1582 = vmatmul.bf16.gmra.mxu0 %v1568
        %v1583 = vpop.f32.mrf.mxu0
        %v1584 = vadd.f32 0.0, %v1583
        %v1585 = vpop.f32.mrf.mxu0
        %1586 = vdwg.mxu0
        %v1588 = vsel %vm1542, %v1566, 0
        %v1591 = vsel %vm1570, %v1494, 0
        %1593 = vmatpush.bf16.msra.mxu0 0
        %1594 = vmatpush.bf16.msra.mxu0 0
        %1595 = vmatpush.bf16.msra.mxu0 0
        %1596 = vmatpush.bf16.msra.mxu0 0
        %1597 = vmatpush.bf16.msra.mxu0 0
        %1598 = vmatpush.bf16.msra.mxu0 0
        %1599 = vmatpush.bf16.msra.mxu0 0
        %1600 = vmatpush.bf16.msra.mxu0 %v1591
        %1601 = vmatmul.bf16.gmra.mxu0 %v1588
        %v1602 = vpop.f32.mrf.mxu0
        %v1603 = vadd.f32 0.0, %v1602
        %v1604 = vpop.f32.mrf.mxu0
        %1605 = vdwg.mxu0
        %v1606 = vpack.c.bf16 %v1603, %v1584
        %v1615 = vunpack.c.l.b16 %v1468
        %v1616 = vunpack.c.l.b16 %v1469
        %v1617 = vunpack.c.l.b16 %v1470
        %v1618 = vunpack.c.l.b16 %v1471
        %v1619 = vunpack.c.l.b16 %v1472
        %v1620 = vunpack.c.l.b16 %v1473
        %v1621 = vunpack.c.l.b16 %v1474
        %v1622 = vunpack.c.l.b16 %v1475
        %v1623 = vpack.c.b16 %v1616, %v1615
        %v1624 = vpack.c.b16 %v1618, %v1617
        %v1625 = vpack.c.b16 %v1620, %v1619
        %v1626 = vpack.c.b16 %v1622, %v1621
        %v1632 = vsel %vm1495, %v1606, 0
        %1634 = vmatpush.bf16.msra.mxu0 0
        %1635 = vmatpush.bf16.msra.mxu0 0
        %1636 = vmatpush.bf16.msra.mxu0 0
        %1637 = vmatpush.bf16.msra.mxu0 0
        %1638 = vmatpush.bf16.msra.mxu0 %v1626
        %1639 = vmatpush.bf16.msra.mxu0 %v1625
        %1640 = vmatpush.bf16.msra.mxu0 %v1624
        %1641 = vmatpush.bf16.msra.mxu0 %v1623
        %1642 = vmatmul.bf16.gmra.mxu0 %v1632
        %v1643 = vpop.f32.mrf.mxu0
        %v1644 = vadd.f32 0.0, %v1643
        %v1645 = vpop.f32.mrf.mxu0
        %v1646 = vadd.f32 0.0, %v1645
        %1647 = vdwg.mxu0
        %v1648 = vadd.f32 %v1488, %v1644
        %v1649 = vadd.f32 %v1488, %v1646
        %v1651 = vunpack.c.l.b16 %v1489
        %v1652 = vpack.c.b16 %v1651, %v1651
        %1653 = vrot.lane.b32.xlu0 %v1652, 64
        %v1654 = vpop.permute.xlu0 %1653
        %v1656 = vunpack.c.l.b16 %v1491
        %v1657 = vpack.c.b16 %v1656, %v1656
        %1658 = vrot.lane.b32.xlu0 %v1657, 64
        %v1659 = vpop.permute.xlu0 %1658
        %v1661 = vsel %vm1495, %v1654, 0
        %v1664 = vsel %vm1495, %v1659, 0
        %1666 = vmatpush.bf16.xpose.msra.mxu0 0
        %1667 = vmatpush.bf16.xpose.msra.mxu0 0
        %1668 = vmatpush.bf16.xpose.msra.mxu0 0
        %1669 = vmatpush.bf16.xpose.msra.mxu0 0
        %1670 = vmatpush.bf16.xpose.msra.mxu0 0
        %1671 = vmatpush.bf16.xpose.msra.mxu0 0
        %1672 = vmatpush.bf16.xpose.msra.mxu0 0
        %1673 = vmatpush.bf16.xpose.msra.mxu0 %v1664
        %1674 = vmatmul.bf16.gmra.mxu0 %v1661
        %v1675 = vpop.f32.mrf.mxu0
        %v1676 = vadd.f32 0.0, %v1675
        %v1677 = vpop.f32.mrf.mxu0
        %1678 = vdwg.mxu0
        %v1680 = vunpack.c.l.b16 %v1490
        %v1681 = vpack.c.b16 %v1680, %v1680
        %1682 = vrot.lane.b32.xlu0 %v1681, 64
        %v1683 = vpop.permute.xlu0 %1682
        %v1685 = vunpack.c.l.b16 %v1492
        %v1686 = vpack.c.b16 %v1685, %v1685
        %1687 = vrot.lane.b32.xlu0 %v1686, 64
        %v1688 = vpop.permute.xlu0 %1687
        %v1690 = vsel %vm1495, %v1683, 0
        %v1693 = vsel %vm1495, %v1688, 0
        %1695 = vmatpush.bf16.xpose.msra.mxu0 0
        %1696 = vmatpush.bf16.xpose.msra.mxu0 0
        %1697 = vmatpush.bf16.xpose.msra.mxu0 0
        %1698 = vmatpush.bf16.xpose.msra.mxu0 0
        %1699 = vmatpush.bf16.xpose.msra.mxu0 0
        %1700 = vmatpush.bf16.xpose.msra.mxu0 0
        %1701 = vmatpush.bf16.xpose.msra.mxu0 0
        %1702 = vmatpush.bf16.xpose.msra.mxu0 %v1693
        %1703 = vmatmul.bf16.gmra.mxu0 %v1690
        %v1704 = vpop.f32.mrf.mxu0
        %v1705 = vadd.f32 0.0, %v1704
        %v1706 = vpop.f32.mrf.mxu0
        %1707 = vdwg.mxu0
        %v1708 = vmul.f32 %v1676, 0.125
        %v1709 = vmul.f32 %v1705, 0.125
        %v1710 = vadd.f32 %v1708, %v1536
        %v1711 = vadd.f32 %v1709, %v1537
        %v1712 = vsel %vm1542, %v1710, -inf
        %1713 = vmax.xlane.f32.xlu0 %v1712
        %v1714 = vpop.xlane.xlu0 %1713
        %v1715 = vsel %vm1542, %v1711, -inf
        %1716 = vmax.xlane.f32.xlu0 %v1715
        %v1717 = vpop.xlane.xlu0 %1716
        %v1718 = vsub.f32 %v1710, %v1714
        %v1719 = vsub.f32 %v1711, %v1717
        %v1720 = vmul.f32 %v1718, 1.442695
        %v1721 = vpow.pop %v1720
        %v1722 = vmul.f32 %v1719, 1.442695
        %v1723 = vpow.pop %v1722
        %v1724 = vsel %vm1542, %v1721, 0.0
        %1725 = vadd.xlane.f32.xlu0 %v1724
        %v1726 = vpop.xlane.xlu0 %1725
        %v1727 = vsel %vm1542, %v1723, 0.0
        %1728 = vadd.xlane.f32.xlu0 %v1727
        %v1729 = vpop.xlane.xlu0 %1728
        %v1730 = vrcp.pop %v1726
        %v1731 = vrcp.pop %v1729
        %v1732 = vmul.f32 %v1721, %v1730
        %v1733 = vmul.f32 %v1723, %v1731
        %v1734 = vpack.c.bf16 %v1732, %v1732
        %v1735 = vpack.c.bf16 %v1733, %v1733
        %v1737 = vunpack.c.l.b16 %v1493
        %v1738 = vpack.c.b16 %v1737, %v1737
        %1739 = vrot.lane.b32.xlu0 %v1738, 64
        %v1740 = vpop.permute.xlu0 %1739
        %v1742 = vsel %vm1542, %v1734, 0
        %v1745 = vsel %vm1570, %v1740, 0
        %1747 = vmatpush.bf16.msra.mxu0 0
        %1748 = vmatpush.bf16.msra.mxu0 0
        %1749 = vmatpush.bf16.msra.mxu0 0
        %1750 = vmatpush.bf16.msra.mxu0 0
        %1751 = vmatpush.bf16.msra.mxu0 0
        %1752 = vmatpush.bf16.msra.mxu0 0
        %1753 = vmatpush.bf16.msra.mxu0 0
        %1754 = vmatpush.bf16.msra.mxu0 %v1745
        %1755 = vmatmul.bf16.gmra.mxu0 %v1742
        %v1756 = vpop.f32.mrf.mxu0
        %v1757 = vadd.f32 0.0, %v1756
        %v1758 = vpop.f32.mrf.mxu0
        %1759 = vdwg.mxu0
        %v1761 = vunpack.c.l.b16 %v1494
        %v1762 = vpack.c.b16 %v1761, %v1761
        %1763 = vrot.lane.b32.xlu0 %v1762, 64
        %v1764 = vpop.permute.xlu0 %1763
        %v1766 = vsel %vm1542, %v1735, 0
        %v1769 = vsel %vm1570, %v1764, 0
        %1771 = vmatpush.bf16.msra.mxu0 0
        %1772 = vmatpush.bf16.msra.mxu0 0
        %1773 = vmatpush.bf16.msra.mxu0 0
        %1774 = vmatpush.bf16.msra.mxu0 0
        %1775 = vmatpush.bf16.msra.mxu0 0
        %1776 = vmatpush.bf16.msra.mxu0 0
        %1777 = vmatpush.bf16.msra.mxu0 0
        %1778 = vmatpush.bf16.msra.mxu0 %v1769
        %1779 = vmatmul.bf16.gmra.mxu0 %v1766
        %v1780 = vpop.f32.mrf.mxu0
        %v1781 = vadd.f32 0.0, %v1780
        %v1782 = vpop.f32.mrf.mxu0
        %1783 = vdwg.mxu0
        %v1784 = vpack.c.bf16 %v1781, %v1757
        %v1793 = vunpack.c.l.b16 %v1476
        %v1794 = vunpack.c.l.b16 %v1477
        %v1795 = vunpack.c.l.b16 %v1478
        %v1796 = vunpack.c.l.b16 %v1479
        %v1797 = vunpack.c.l.b16 %v1480
        %v1798 = vunpack.c.l.b16 %v1481
        %v1799 = vunpack.c.l.b16 %v1482
        %v1800 = vunpack.c.l.b16 %v1483
        %v1801 = vpack.c.b16 %v1794, %v1793
        %v1802 = vpack.c.b16 %v1796, %v1795
        %v1803 = vpack.c.b16 %v1798, %v1797
        %v1804 = vpack.c.b16 %v1800, %v1799
        %v1810 = vsel %vm1495, %v1784, 0
        %1812 = vmatpush.bf16.msra.mxu0 0
        %1813 = vmatpush.bf16.msra.mxu0 0
        %1814 = vmatpush.bf16.msra.mxu0 0
        %1815 = vmatpush.bf16.msra.mxu0 0
        %1816 = vmatpush.bf16.msra.mxu0 %v1804
        %1817 = vmatpush.bf16.msra.mxu0 %v1803
        %1818 = vmatpush.bf16.msra.mxu0 %v1802
        %1819 = vmatpush.bf16.msra.mxu0 %v1801
        %1820 = vmatmul.bf16.gmra.mxu0 %v1810
        %v1821 = vpop.f32.mrf.mxu0
        %v1822 = vadd.f32 0.0, %v1821
        %v1823 = vpop.f32.mrf.mxu0
        %v1824 = vadd.f32 0.0, %v1823
        %1825 = vdwg.mxu0
        %v1826 = vadd.f32 %v1648, %v1822
        %v1827 = vadd.f32 %v1649, %v1824
        %v1828 = vadd.f32 %v1249, %v1826
        %v1829 = vadd.f32 %v1250, %v1827
        %v1830 = vld [vmem:[%s1105] sm:$0x1]
        %v1831 = vld [vmem:[%s1108] sm:$0x1]
        %1832 = vadd.xlane.f32.xlu0 %v1828
        %v1833 = vpop.xlane.xlu0 %1832
        %1834 = vadd.xlane.f32.xlu0 %v1829
        %v1835 = vpop.xlane.xlu0 %1834
        %v1836 = vrcp.pop 128.0
        %v1837 = vmul.f32 128.0, %v1836
        %v1838 = vsub.f32 1.0, %v1837
        %v1839 = vmul.f32 %v1836, %v1838
        %v1840 = vadd.f32 %v1836, %v1839
        %vm1841 = vweird.f32 %v1836
        %v1842 = vsel %vm1841, %v1836, %v1840
        %v1843 = vmul.f32 %v1833, %v1842
        %v1844 = vmul.f32 %v1835, %v1842
        %v1845 = vsub.f32 %v1828, %v1843
        %v1846 = vsub.f32 %v1829, %v1844
        %v1847 = vmul.f32 %v1845, %v1845
        %v1848 = vmul.f32 %v1846, %v1846
        %1849 = vadd.xlane.f32.xlu0 %v1847
        %v1850 = vpop.xlane.xlu0 %1849
        %1851 = vadd.xlane.f32.xlu0 %v1848
        %v1852 = vpop.xlane.xlu0 %1851
        %v1853 = vmul.f32 %v1850, %v1842
        %v1854 = vmul.f32 %v1852, %v1842
        %v1855 = vadd.f32 %v1853, 1e-12
        %v1856 = vadd.f32 %v1854, 1e-12
        %v1857 = vrsqrt.pop %v1855
        %v1858 = vmul.f32 %v1857, %v1855
        %v1859 = vmul.f32 %v1858, %v1857
        %v1860 = vmul.f32 0.5, %v1859
        %v1861 = vsub.f32 1.5, %v1860
        %v1862 = vmul.f32 %v1857, %v1861
        %vm1863 = vweird.f32 %v1855
        %vm1864 = vweird.f32 %v1857
        %vm1865 = vmor %vm1863, %vm1864
        %v1866 = vsel %vm1865, %v1857, %v1862
        %v1867 = vrsqrt.pop %v1856
        %v1868 = vmul.f32 %v1867, %v1856
        %v1869 = vmul.f32 %v1868, %v1867
        %v1870 = vmul.f32 0.5, %v1869
        %v1871 = vsub.f32 1.5, %v1870
        %v1872 = vmul.f32 %v1867, %v1871
        %vm1873 = vweird.f32 %v1856
        %vm1874 = vweird.f32 %v1867
        %vm1875 = vmor %vm1873, %vm1874
        %v1876 = vsel %vm1875, %v1867, %v1872
        %v1877 = vmul.f32 %v1845, %v1866
        %v1878 = vmul.f32 %v1846, %v1876
        %v1880 = vperm.slane %v1830, 0
        %v1882 = vmul.f32 %v1877, %v1880
        %v1883 = vmul.f32 %v1878, %v1880
        %v1885 = vperm.slane %v1831, 0
        %v1887 = vadd.f32 %v1882, %v1885
        %v1888 = vadd.f32 %v1883, %v1885
        %v1889 = vpack.c.bf16 %v1888, %v1887
        %v1890 = vld [vmem:[%s947] sm:$0xff]
        %v1891 = vld [vmem:[%s947 + $0x8] sm:$0xff]
        %v1892 = vld [vmem:[%s947 + $0x10] sm:$0xff]
        %v1893 = vld [vmem:[%s947 + $0x18] sm:$0xff]
        %v1894 = vld [vmem:[%s947 + $0x20] sm:$0xff]
        %v1895 = vld [vmem:[%s947 + $0x28] sm:$0xff]
        %v1896 = vld [vmem:[%s947 + $0x30] sm:$0xff]
        %v1897 = vld [vmem:[%s947 + $0x38] sm:$0xff]
        %v1898 = vld [vmem:[%s947 + $0x40] sm:$0xff]
        %v1899 = vld [vmem:[%s947 + $0x48] sm:$0xff]
        %v1900 = vld [vmem:[%s947 + $0x50] sm:$0xff]
        %v1901 = vld [vmem:[%s947 + $0x58] sm:$0xff]
        %v1902 = vld [vmem:[%s947 + $0x60] sm:$0xff]
        %v1903 = vld [vmem:[%s947 + $0x68] sm:$0xff]
        %v1904 = vld [vmem:[%s947 + $0x70] sm:$0xff]
        %v1905 = vld [vmem:[%s947 + $0x78] sm:$0xff]
        %v1906 = vld [vmem:[%s957] sm:$0x3]
        %v1908 = vperm.slane %v1906, 0
        %v1909 = vperm.slane %v1906, 1
        %v1928 = vunpack.c.l.b16 %v1890
        %v1929 = vunpack.c.h.b16 %v1890
        %v1930 = vunpack.c.l.b16 %v1891
        %v1931 = vunpack.c.h.b16 %v1891
        %v1932 = vunpack.c.l.b16 %v1892
        %v1933 = vunpack.c.h.b16 %v1892
        %v1934 = vunpack.c.l.b16 %v1893
        %v1935 = vunpack.c.h.b16 %v1893
        %v1936 = vunpack.c.l.b16 %v1894
        %v1937 = vunpack.c.h.b16 %v1894
        %v1938 = vunpack.c.l.b16 %v1895
        %v1939 = vunpack.c.h.b16 %v1895
        %v1940 = vunpack.c.l.b16 %v1896
        %v1941 = vunpack.c.h.b16 %v1896
        %v1942 = vunpack.c.l.b16 %v1897
        %v1943 = vunpack.c.h.b16 %v1897
        %v1944 = vunpack.c.l.b16 %v1898
        %v1945 = vunpack.c.h.b16 %v1898
        %v1946 = vunpack.c.l.b16 %v1899
        %v1947 = vunpack.c.h.b16 %v1899
        %v1948 = vunpack.c.l.b16 %v1900
        %v1949 = vunpack.c.h.b16 %v1900
        %v1950 = vunpack.c.l.b16 %v1901
        %v1951 = vunpack.c.h.b16 %v1901
        %v1952 = vunpack.c.l.b16 %v1902
        %v1953 = vunpack.c.h.b16 %v1902
        %v1954 = vunpack.c.l.b16 %v1903
        %v1955 = vunpack.c.h.b16 %v1903
        %v1956 = vunpack.c.l.b16 %v1904
        %v1957 = vunpack.c.h.b16 %v1904
        %v1958 = vunpack.c.l.b16 %v1905
        %v1959 = vunpack.c.h.b16 %v1905
        %v1960 = vpack.c.b16 %v1930, %v1928
        %v1961 = vpack.c.b16 %v1931, %v1929
        %v1962 = vpack.c.b16 %v1934, %v1932
        %v1963 = vpack.c.b16 %v1935, %v1933
        %v1964 = vpack.c.b16 %v1938, %v1936
        %v1965 = vpack.c.b16 %v1939, %v1937
        %v1966 = vpack.c.b16 %v1942, %v1940
        %v1967 = vpack.c.b16 %v1943, %v1941
        %v1968 = vpack.c.b16 %v1946, %v1944
        %v1969 = vpack.c.b16 %v1947, %v1945
        %v1970 = vpack.c.b16 %v1950, %v1948
        %v1971 = vpack.c.b16 %v1951, %v1949
        %v1972 = vpack.c.b16 %v1954, %v1952
        %v1973 = vpack.c.b16 %v1955, %v1953
        %v1974 = vpack.c.b16 %v1958, %v1956
        %v1975 = vpack.c.b16 %v1959, %v1957
        %1992 = vmatpush.bf16.msra.mxu0 %v1974
        %1993 = vmatpush.bf16.msra.mxu0 %v1972
        %1994 = vmatpush.bf16.msra.mxu0 %v1970
        %1995 = vmatpush.bf16.msra.mxu0 %v1968
        %1996 = vmatpush.bf16.msra.mxu0 %v1966
        %1997 = vmatpush.bf16.msra.mxu0 %v1964
        %1998 = vmatpush.bf16.msra.mxu0 %v1962
        %1999 = vmatpush.bf16.msra.mxu0 %v1960
        %2000 = vmatmul.bf16.gmra.mxu0 %v1889
        %v2001 = vpop.f32.mrf.mxu0
        %v2002 = vadd.f32 %v1908, %v2001
        %v2003 = vpop.f32.mrf.mxu0
        %v2004 = vadd.f32 %v1908, %v2003
        %2005 = vdwg.mxu0
        %2006 = vmatpush.bf16.msra.mxu0 %v1975
        %2007 = vmatpush.bf16.msra.mxu0 %v1973
        %2008 = vmatpush.bf16.msra.mxu0 %v1971
        %2009 = vmatpush.bf16.msra.mxu0 %v1969
        %2010 = vmatpush.bf16.msra.mxu0 %v1967
        %2011 = vmatpush.bf16.msra.mxu0 %v1965
        %2012 = vmatpush.bf16.msra.mxu0 %v1963
        %2013 = vmatpush.bf16.msra.mxu0 %v1961
        %2014 = vmatmul.bf16.gmra.mxu0 %v1889
        %v2015 = vpop.f32.mrf.mxu0
        %v2016 = vadd.f32 %v1909, %v2015
        %v2017 = vpop.f32.mrf.mxu0
        %v2018 = vadd.f32 %v1909, %v2017
        %2019 = vdwg.mxu0
        %v2020 = vmul.f32 %v2002, 0.5
        %v2021 = vmul.f32 %v2016, 0.5
        %v2022 = vmul.f32 %v2004, 0.5
        %v2023 = vmul.f32 %v2018, 0.5
        %v2024 = vmul.f32 %v2002, 0.044715
        %v2025 = vmul.f32 %v2016, 0.044715
        %v2026 = vmul.f32 %v2004, 0.044715
        %v2027 = vmul.f32 %v2018, 0.044715
        %v2028 = vmul.f32 %v2024, %v2002
        %v2029 = vmul.f32 %v2025, %v2016
        %v2030 = vmul.f32 %v2026, %v2004
        %v2031 = vmul.f32 %v2027, %v2018
        %v2032 = vmul.f32 %v2028, %v2002
        %v2033 = vmul.f32 %v2029, %v2016
        %v2034 = vmul.f32 %v2030, %v2004
        %v2035 = vmul.f32 %v2031, %v2018
        %v2036 = vadd.f32 %v2002, %v2032
        %v2037 = vadd.f32 %v2016, %v2033
        %v2038 = vadd.f32 %v2004, %v2034
        %v2039 = vadd.f32 %v2018, %v2035
        %v2040 = vmul.f32 %v2036, 0.7978846
        %v2041 = vmul.f32 %v2037, 0.7978846
        %v2042 = vmul.f32 %v2038, 0.7978846
        %v2043 = vmul.f32 %v2039, 0.7978846
        %v2044 = vtanh.pop %v2040
        %v2045 = vtanh.pop %v2041
        %v2046 = vtanh.pop %v2042
        %v2047 = vtanh.pop %v2043
        %v2048 = vadd.f32 %v2044, 1.0
        %v2049 = vadd.f32 %v2045, 1.0
        %v2050 = vadd.f32 %v2046, 1.0
        %v2051 = vadd.f32 %v2047, 1.0
        %v2052 = vmul.f32 %v2020, %v2048
        %v2053 = vmul.f32 %v2021, %v2049
        %v2054 = vmul.f32 %v2022, %v2050
        %v2055 = vmul.f32 %v2023, %v2051
        %v2056 = vpack.c.bf16 %v2054, %v2052
        %v2057 = vpack.c.bf16 %v2055, %v2053
        %v2058 = vld [vmem:[%s967] sm:$0xf]
        %v2059 = vld [vmem:[%s967 + $0x4] sm:$0xf]
        %v2060 = vld [vmem:[%s967 + $0x8] sm:$0xf]
        %v2061 = vld [vmem:[%s967 + $0xc] sm:$0xf]
        %v2062 = vld [vmem:[%s967 + $0x10] sm:$0xf]
        %v2063 = vld [vmem:[%s967 + $0x14] sm:$0xf]
        %v2064 = vld [vmem:[%s967 + $0x18] sm:$0xf]
        %v2065 = vld [vmem:[%s967 + $0x1c] sm:$0xf]
        %v2066 = vld [vmem:[%s967 + $0x20] sm:$0xf]
        %v2067 = vld [vmem:[%s967 + $0x24] sm:$0xf]
        %v2068 = vld [vmem:[%s967 + $0x28] sm:$0xf]
        %v2069 = vld [vmem:[%s967 + $0x2c] sm:$0xf]
        %v2070 = vld [vmem:[%s967 + $0x30] sm:$0xf]
        %v2071 = vld [vmem:[%s967 + $0x34] sm:$0xf]
        %v2072 = vld [vmem:[%s967 + $0x38] sm:$0xf]
        %v2073 = vld [vmem:[%s967 + $0x3c] sm:$0xf]
        %v2074 = vld [vmem:[%s967 + $0x40] sm:$0xf]
        %v2075 = vld [vmem:[%s967 + $0x44] sm:$0xf]
        %v2076 = vld [vmem:[%s967 + $0x48] sm:$0xf]
        %v2077 = vld [vmem:[%s967 + $0x4c] sm:$0xf]
        %v2078 = vld [vmem:[%s967 + $0x50] sm:$0xf]
        %v2079 = vld [vmem:[%s967 + $0x54] sm:$0xf]
        %v2080 = vld [vmem:[%s967 + $0x58] sm:$0xf]
        %v2081 = vld [vmem:[%s967 + $0x5c] sm:$0xf]
        %v2082 = vld [vmem:[%s967 + $0x60] sm:$0xf]
        %v2083 = vld [vmem:[%s967 + $0x64] sm:$0xf]
        %v2084 = vld [vmem:[%s967 + $0x68] sm:$0xf]
        %v2085 = vld [vmem:[%s967 + $0x6c] sm:$0xf]
        %v2086 = vld [vmem:[%s967 + $0x70] sm:$0xf]
        %v2087 = vld [vmem:[%s967 + $0x74] sm:$0xf]
        %v2088 = vld [vmem:[%s967 + $0x78] sm:$0xf]
        %v2089 = vld [vmem:[%s967 + $0x7c] sm:$0xf]
        %v2090 = vld [vmem:[%s976] sm:$0x1]
        %v2092 = vperm.slane %v2090, 0
        %v2126 = vunpack.c.l.b16 %v2058
        %v2127 = vunpack.c.l.b16 %v2059
        %v2128 = vunpack.c.l.b16 %v2060
        %v2129 = vunpack.c.l.b16 %v2061
        %v2130 = vunpack.c.l.b16 %v2062
        %v2131 = vunpack.c.l.b16 %v2063
        %v2132 = vunpack.c.l.b16 %v2064
        %v2133 = vunpack.c.l.b16 %v2065
        %v2134 = vunpack.c.l.b16 %v2066
        %v2135 = vunpack.c.l.b16 %v2067
        %v2136 = vunpack.c.l.b16 %v2068
        %v2137 = vunpack.c.l.b16 %v2069
        %v2138 = vunpack.c.l.b16 %v2070
        %v2139 = vunpack.c.l.b16 %v2071
        %v2140 = vunpack.c.l.b16 %v2072
        %v2141 = vunpack.c.l.b16 %v2073
        %v2142 = vunpack.c.l.b16 %v2074
        %v2143 = vunpack.c.l.b16 %v2075
        %v2144 = vunpack.c.l.b16 %v2076
        %v2145 = vunpack.c.l.b16 %v2077
        %v2146 = vunpack.c.l.b16 %v2078
        %v2147 = vunpack.c.l.b16 %v2079
        %v2148 = vunpack.c.l.b16 %v2080
        %v2149 = vunpack.c.l.b16 %v2081
        %v2150 = vunpack.c.l.b16 %v2082
        %v2151 = vunpack.c.l.b16 %v2083
        %v2152 = vunpack.c.l.b16 %v2084
        %v2153 = vunpack.c.l.b16 %v2085
        %v2154 = vunpack.c.l.b16 %v2086
        %v2155 = vunpack.c.l.b16 %v2087
        %v2156 = vunpack.c.l.b16 %v2088
        %v2157 = vunpack.c.l.b16 %v2089
        %v2158 = vpack.c.b16 %v2127, %v2126
        %v2159 = vpack.c.b16 %v2129, %v2128
        %v2160 = vpack.c.b16 %v2131, %v2130
        %v2161 = vpack.c.b16 %v2133, %v2132
        %v2162 = vpack.c.b16 %v2135, %v2134
        %v2163 = vpack.c.b16 %v2137, %v2136
        %v2164 = vpack.c.b16 %v2139, %v2138
        %v2165 = vpack.c.b16 %v2141, %v2140
        %v2166 = vpack.c.b16 %v2143, %v2142
        %v2167 = vpack.c.b16 %v2145, %v2144
        %v2168 = vpack.c.b16 %v2147, %v2146
        %v2169 = vpack.c.b16 %v2149, %v2148
        %v2170 = vpack.c.b16 %v2151, %v2150
        %v2171 = vpack.c.b16 %v2153, %v2152
        %v2172 = vpack.c.b16 %v2155, %v2154
        %v2173 = vpack.c.b16 %v2157, %v2156
        %2190 = vmatpush.bf16.msra.mxu0 %v2165
        %2191 = vmatpush.bf16.msra.mxu0 %v2164
        %2192 = vmatpush.bf16.msra.mxu0 %v2163
        %2193 = vmatpush.bf16.msra.mxu0 %v2162
        %2194 = vmatpush.bf16.msra.mxu0 %v2161
        %2195 = vmatpush.bf16.msra.mxu0 %v2160
        %2196 = vmatpush.bf16.msra.mxu0 %v2159
        %2197 = vmatpush.bf16.msra.mxu0 %v2158
        %2198 = vmatmul.bf16.gmra.mxu0 %v2056
        %v2199 = vpop.f32.mrf.mxu0
        %v2200 = vadd.f32 %v2092, %v2199
        %v2201 = vpop.f32.mrf.mxu0
        %v2202 = vadd.f32 %v2092, %v2201
        %2203 = vdwg.mxu0
        %2204 = vmatpush.bf16.msra.mxu0 %v2173
        %2205 = vmatpush.bf16.msra.mxu0 %v2172
        %2206 = vmatpush.bf16.msra.mxu0 %v2171
        %2207 = vmatpush.bf16.msra.mxu0 %v2170
        %2208 = vmatpush.bf16.msra.mxu0 %v2169
        %2209 = vmatpush.bf16.msra.mxu0 %v2168
        %2210 = vmatpush.bf16.msra.mxu0 %v2167
        %2211 = vmatpush.bf16.msra.mxu0 %v2166
        %2212 = vmatmul.bf16.gmra.mxu0 %v2057
        %v2213 = vpop.f32.mrf.mxu0
        %v2214 = vadd.f32 %v2200, %v2213
        %v2215 = vpop.f32.mrf.mxu0
        %v2216 = vadd.f32 %v2202, %v2215
        %2217 = vdwg.mxu0
        %v2218 = vadd.f32 %v1887, %v2214
        %v2219 = vadd.f32 %v1888, %v2216
        %v2220 = vld [vmem:[%s1111] sm:$0x1]
        %v2221 = vld [vmem:[%s985] sm:$0x1]
        %2222 = vadd.xlane.f32.xlu0 %v2218
        %v2223 = vpop.xlane.xlu0 %2222
        %2224 = vadd.xlane.f32.xlu0 %v2219
        %v2225 = vpop.xlane.xlu0 %2224
        %v2226 = vmul.f32 %v2223, %v1842
        %v2227 = vmul.f32 %v2225, %v1842
        %v2228 = vsub.f32 %v2218, %v2226
        %v2229 = vsub.f32 %v2219, %v2227
        %v2230 = vmul.f32 %v2228, %v2228
        %v2231 = vmul.f32 %v2229, %v2229
        %2232 = vadd.xlane.f32.xlu0 %v2230
        %v2233 = vpop.xlane.xlu0 %2232
        %2234 = vadd.xlane.f32.xlu0 %v2231
        %v2235 = vpop.xlane.xlu0 %2234
        %v2236 = vmul.f32 %v2233, %v1842
        %v2237 = vmul.f32 %v2235, %v1842
        %v2238 = vadd.f32 %v2236, 1e-12
        %v2239 = vadd.f32 %v2237, 1e-12
        %v2240 = vrsqrt.pop %v2238
        %v2241 = vmul.f32 %v2240, %v2238
        %v2242 = vmul.f32 %v2241, %v2240
        %v2243 = vmul.f32 0.5, %v2242
        %v2244 = vsub.f32 1.5, %v2243
        %v2245 = vmul.f32 %v2240, %v2244
        %vm2246 = vweird.f32 %v2238
        %vm2247 = vweird.f32 %v2240
        %vm2248 = vmor %vm2246, %vm2247
        %v2249 = vsel %vm2248, %v2240, %v2245
        %v2250 = vrsqrt.pop %v2239
        %v2251 = vmul.f32 %v2250, %v2239
        %v2252 = vmul.f32 %v2251, %v2250
        %v2253 = vmul.f32 0.5, %v2252
        %v2254 = vsub.f32 1.5, %v2253
        %v2255 = vmul.f32 %v2250, %v2254
        %vm2256 = vweird.f32 %v2239
        %vm2257 = vweird.f32 %v2250
        %vm2258 = vmor %vm2256, %vm2257
        %v2259 = vsel %vm2258, %v2250, %v2255
        %v2260 = vmul.f32 %v2228, %v2249
        %v2261 = vmul.f32 %v2229, %v2259
        %v2263 = vperm.slane %v2220, 0
        %v2265 = vmul.f32 %v2260, %v2263
        %v2266 = vmul.f32 %v2261, %v2263
        %v2268 = vperm.slane %v2221, 0
        %v2270 = vadd.f32 %v2265, %v2268
        %v2271 = vadd.f32 %v2266, %v2268
        %2272 = vst [vmem:[#allocation2] sm:$0xff] %v2270
        %2273 = vst [vmem:[#allocation2 + $0x8] sm:$0xff] %v2271
        %p2274 = scmp.eq.s32.totalorder %s52, 1
        // Predicated region
        $region165: #{bert_forward.1} parent=107 // pred_check
          %p2275 = pneg %p2274
        $region166: #{bert_forward.1} parent=107 // pred_check_branch
          %2277 = sbr.rel (%p2275) target = $region168
        $region167: #{bert_forward.1} parent=107 // pred_region
          %v2278 = vpack.c.bf16 %v2271, %v2270
          %v2279 = vld [vmem:[#allocation22] sm:$0xf]
          %v2280 = vld [vmem:[#allocation22 + $0x4] sm:$0xf]
          %v2281 = vld [vmem:[#allocation22 + $0x8] sm:$0xf]
          %v2282 = vld [vmem:[#allocation22 + $0xc] sm:$0xf]
          %v2283 = vld [vmem:[#allocation22 + $0x10] sm:$0xf]
          %v2284 = vld [vmem:[#allocation22 + $0x14] sm:$0xf]
          %v2285 = vld [vmem:[#allocation22 + $0x18] sm:$0xf]
          %v2286 = vld [vmem:[#allocation22 + $0x1c] sm:$0xf]
          %v2287 = vld [vmem:[#allocation22 + $0x20] sm:$0xf]
          %v2288 = vld [vmem:[#allocation22 + $0x24] sm:$0xf]
          %v2289 = vld [vmem:[#allocation22 + $0x28] sm:$0xf]
          %v2290 = vld [vmem:[#allocation22 + $0x2c] sm:$0xf]
          %v2291 = vld [vmem:[#allocation22 + $0x30] sm:$0xf]
          %v2292 = vld [vmem:[#allocation22 + $0x34] sm:$0xf]
          %v2293 = vld [vmem:[#allocation22 + $0x38] sm:$0xf]
          %v2294 = vld [vmem:[#allocation22 + $0x3c] sm:$0xf]
          %v2295 = vld [vmem:[#allocation24] sm:$0x1]
          %v2297 = vperm.slane %v2295, 0
          %v2315 = vunpack.c.l.b16 %v2279
          %v2316 = vunpack.c.l.b16 %v2280
          %v2317 = vunpack.c.l.b16 %v2281
          %v2318 = vunpack.c.l.b16 %v2282
          %v2319 = vunpack.c.l.b16 %v2283
          %v2320 = vunpack.c.l.b16 %v2284
          %v2321 = vunpack.c.l.b16 %v2285
          %v2322 = vunpack.c.l.b16 %v2286
          %v2323 = vunpack.c.l.b16 %v2287
          %v2324 = vunpack.c.l.b16 %v2288
          %v2325 = vunpack.c.l.b16 %v2289
          %v2326 = vunpack.c.l.b16 %v2290
          %v2327 = vunpack.c.l.b16 %v2291
          %v2328 = vunpack.c.l.b16 %v2292
          %v2329 = vunpack.c.l.b16 %v2293
          %v2330 = vunpack.c.l.b16 %v2294
          %v2331 = vpack.c.b16 %v2316, %v2315
          %v2332 = vpack.c.b16 %v2318, %v2317
          %v2333 = vpack.c.b16 %v2320, %v2319
          %v2334 = vpack.c.b16 %v2322, %v2321
          %v2335 = vpack.c.b16 %v2324, %v2323
          %v2336 = vpack.c.b16 %v2326, %v2325
          %v2337 = vpack.c.b16 %v2328, %v2327
          %v2338 = vpack.c.b16 %v2330, %v2329
          %2347 = vmatpush.bf16.msra.mxu0 %v2338
          %2348 = vmatpush.bf16.msra.mxu0 %v2337
          %2349 = vmatpush.bf16.msra.mxu0 %v2336
          %2350 = vmatpush.bf16.msra.mxu0 %v2335
          %2351 = vmatpush.bf16.msra.mxu0 %v2334
          %2352 = vmatpush.bf16.msra.mxu0 %v2333
          %2353 = vmatpush.bf16.msra.mxu0 %v2332
          %2354 = vmatpush.bf16.msra.mxu0 %v2331
          %2355 = vmatmul.bf16.gmra.mxu0 %v2278
          %v2356 = vpop.f32.mrf.mxu0
          %v2357 = vadd.f32 %v2297, %v2356
          %v2358 = vpop.f32.mrf.mxu0
          %v2359 = vadd.f32 %v2297, %v2358
          %2360 = vdwg.mxu0
          %2361 = vst [vmem:[#allocation25] sm:$0xff] %v2357
          %2362 = vst [vmem:[#allocation25 + $0x8] sm:$0xff] %v2359
          %v2363 = vld [vmem:[%s2] sm:$0x3]
          %v2364 = vlaneseq
          %v2365 = vand.u32 %v2364, 127
          %vm2366 = vcmp.lt.s32.totalorder %v2365, 11
          %v2367 = vsel %vm2366, %v2357, -1e+09
          %v2368 = vsel %vm2366, %v2359, -1e+09
          %2369 = vmax.xlane.f32.xlu0 %v2367
          %v2370 = vpop.xlane.xlu0 %2369
          %2371 = vmax.xlane.f32.xlu0 %v2368
          %v2372 = vpop.xlane.xlu0 %2371
          %v2373 = vsub.f32 %v2367, %v2370
          %v2374 = vsub.f32 %v2368, %v2372
          %v2375 = vmul.f32 %v2373, 1.442695
          %v2376 = vpow.pop %v2375
          %v2377 = vmul.f32 %v2374, 1.442695
          %v2378 = vpow.pop %v2377
          %2379 = vadd.xlane.f32.xlu0 %v2376
          %v2380 = vpop.xlane.xlu0 %2379
          %2381 = vadd.xlane.f32.xlu0 %v2378
          %v2382 = vpop.xlane.xlu0 %2381
          %v2383 = vlog2.pop %v2380
          %v2384 = vmul.f32 %v2383, 0.6931472
          %v2385 = vlog2.pop %v2382
          %v2386 = vmul.f32 %v2385, 0.6931472
          %v2387 = vadd.f32 %v2370, %v2384
          %v2388 = vadd.f32 %v2372, %v2386
          %v2389 = vperm.slane %v2363, 0
          %v2390 = vlaneseq
          %v2391 = vshrl.u32 %v2390, 7
          %2393 = vset.pattern.permute.xlu0 %v2391
          %2394 = vperm.xlu0 %2393, %v2389
          %v2395 = vpop.permute.xlu0 %2394
          %v2396 = vperm.slane %v2363, 1
          %v2397 = vlaneseq
          %v2398 = vshrl.u32 %v2397, 7
          %2400 = vset.pattern.permute.xlu0 %v2398
          %2401 = vperm.xlu0 %2400, %v2396
          %v2402 = vpop.permute.xlu0 %2401
          %vm2403 = vcmp.eq.s32.totalorder %v2365, %v2395
          %vm2404 = vcmp.eq.s32.totalorder %v2365, %v2402
          %v2405 = vsel %vm2403, %v2367, 0.0
          %v2406 = vsel %vm2404, %v2368, 0.0
          %2407 = vadd.xlane.f32.xlu0 %v2405
          %v2408 = vpop.xlane.xlu0 %2407
          %2409 = vadd.xlane.f32.xlu0 %v2406
          %v2410 = vpop.xlane.xlu0 %2409
          %vm2411 = vcmp.ne.s32.totalorder %v2363, 4294967196
          %v2412 = vsel %vm2411, 1, 0
          %v2413 = vcvt.s32.f32 %v2412
          %v2414 = vsub.f32 %v2387, %v2408
          %v2415 = vsub.f32 %v2388, %v2410
          %v2417 = vperm.slane %v2413, 0
          %v2418 = vlaneseq
          %v2419 = vshrl.u32 %v2418, 7
          %2421 = vset.pattern.permute.xlu0 %v2419
          %2422 = vperm.xlu0 %2421, %v2417
          %v2423 = vpop.permute.xlu0 %2422
          %v2424 = vperm.slane %v2413, 1
          %v2425 = vlaneseq
          %v2426 = vshrl.u32 %v2425, 7
          %2428 = vset.pattern.permute.xlu0 %v2426
          %2429 = vperm.xlu0 %2428, %v2424
          %v2430 = vpop.permute.xlu0 %2429
          %v2433 = vmul.f32 %v2414, %v2423
          %v2434 = vmul.f32 %v2415, %v2430
          %2437 = vset.pattern.permute.xlu0 0
          %2438 = vperm.xlu0 %2437, %v2433
          %v2439 = vpop.permute.xlu0 %2438
          %2440 = vset.pattern.permute.xlu0 0
          %2441 = vperm.xlu0 %2440, %v2434
          %v2442 = vpop.permute.xlu0 %2441
          %v2443 = vperm.slane %v2439, %v2365
          %v2444 = vperm.slane %v2442, %v2365
          %vm2445 = vcmask 1041409
          %v2446 = vsel %vm2445, %v2444, %v2443
          %vm2448 = vcmask 58368
          %v2449 = vsel %vm2448, %v2446, 0.0
          %2450 = vadd.xlane.f32.xlu0 %v2449
          %v2451 = vpop.xlane.xlu0 %2450
          %v2452 = vrot.slane %v2451, 4
          %v2453 = vadd.f32 %v2451, %v2452
          %v2454 = vrot.slane %v2453, 2
          %v2455 = vadd.f32 %v2453, %v2454
          %v2456 = vrot.slane %v2455, 1
          %v2457 = vadd.f32 %v2455, %v2456
          %s2458 = vtos %v2457
          %v2459 = vsel %vm2448, %v2413, 0.0
          %2460 = vadd.xlane.f32.xlu0 %v2459
          %v2461 = vpop.xlane.xlu0 %2460
          %v2462 = vrot.slane %v2461, 4
          %v2463 = vadd.f32 %v2461, %v2462
          %v2464 = vrot.slane %v2463, 2
          %v2465 = vadd.f32 %v2463, %v2464
          %v2466 = vrot.slane %v2465, 1
          %v2467 = vadd.f32 %v2465, %v2466
          %s2468 = vtos %v2467
          %s2469 = smax.f32 %s2468, 1.0
          %v2470 = vstv %s2469
          %v2471 = vrcp.pop %v2470
          %v2472 = vmul.f32 %v2470, %v2471
          %v2473 = vsub.f32 1.0, %v2472
          %v2474 = vmul.f32 %v2471, %v2473
          %v2475 = vadd.f32 %v2471, %v2474
          %vm2476 = vweird.f32 %v2470
          %vm2477 = vweird.f32 %v2471
          %vm2478 = vmor %vm2476, %vm2477
          %v2479 = vsel %vm2478, %v2471, %v2475
          %v2480 = vand.u32 2147483647, %v2470
          %vm2481 = vcmp.eq.f32.partialorder %v2480, 8.507059e+37
          %v2482 = vand.u32 %v2470, 2147483648
          %v2483 = vor.u32 1.1754944e-38, %v2482
          %v2484 = vsel %vm2481, %v2483, %v2479
          %s2485 = vtos %v2484
          %s2486 = smul.f32 %s2458, %s2485
          %s2487 = scalar_lea.smem [#allocation26], 0
          %2488 = sst [smem:[%s2487]] %s2486
        $region168: #{bert_forward.1} parent=107 // pred_fallthru
          _
        // Predicated region
        $region169: #{bert_forward.1} parent=107 // pred_check
          %p2489 = pneg %p587
        $region170: #{bert_forward.1} parent=107 // pred_check_branch
          %2491 = sbr.rel (%p2489) target = $region172
        $region171: #{bert_forward.1} parent=107 // pred_region
          %2493 = vsyncadd [#allocation5], 0
          %s2494 = sshll.u32 [#allocation25], 4
          %s2495 = int_to_ptr.vmem [resolvable:$true] %s2494
          %s2496 = sshll.u32 %s22, 4
          %s2497 = int_to_ptr.hbm [resolvable:$true] %s2496
          %2502 = dma.vmem_to_hbm [thread:$0]  %s2495, 256, %s2497, [#allocation5], 128, 128, 8
        $region172: #{bert_forward.1} parent=107 // pred_fallthru
          _
        // Predicated region
        $region173: #{bert_forward.1} parent=107 // pred_check
          %p2503 = pneg %p608
        $region174: #{bert_forward.1} parent=107 // pred_check_branch
          %2505 = sbr.rel (%p2503) target = $region176
        $region175: #{bert_forward.1} parent=107 // pred_region
          %2507 = vsyncadd [#allocation6], 0
          %s2509 = sshll.u32 %s23, 4
          %s2510 = int_to_ptr.hbm [resolvable:$true] %s2509
          %2512 = dma.smem_to_hbm [#allocation26], 16, %s2510, [#allocation6]
        $region176: #{bert_forward.1} parent=107 // pred_fallthru
          _
        // Predicated region
        $region177: #{bert_forward.1} parent=107 // pred_check
          %p2513 = pneg %p587
        $region178: #{bert_forward.1} parent=107 // pred_check_branch
          %2515 = sbr.rel (%p2513) target = $region180
        $region179: #{bert_forward.1} parent=107 // pred_region
          %2517 = dma.done [#allocation5], 256
        $region180: #{bert_forward.1} parent=107 // pred_fallthru
          _
        // Predicated region
        $region181: #{bert_forward.1} parent=107 // pred_check
          %p2518 = pneg %p608
        $region182: #{bert_forward.1} parent=107 // pred_check_branch
          %2520 = sbr.rel (%p2518) target = $region184
        $region183: #{bert_forward.1} parent=107 // pred_region
          %2522 = dma.done [#allocation6], 16
        $region184: #{bert_forward.1} parent=107 // pred_fallthru
          _
        %2523 = sfence
      $region108: #{bert_forward.1} parent=5 // pred_fallthru
        _
      %p2524 = scmp.le.s32.totalorder 2, %s47
      // Predicated region
      $region185: #{bert_forward.1} parent=5 // pred_check
        %p2525 = pneg %p2524
      $region186: #{bert_forward.1} parent=5 // pred_check_branch
        %2527 = sbr.rel (%p2525) target = $region188
      $region187: #{bert_forward.1} parent=5 // pred_region
        %s2528 = ssub.s32 %s47, 2
      $region188: #{bert_forward.1} parent=5 // pred_fallthru
        _
    $region6: #{bert_forward.1} parent=1 // loop_footer
      %s51 = sadd.s32 1, %s47
    $region7: #{bert_forward.1} parent=1 // loop_footer_branch
      %46 = sbr.rel target = $region3
    $region8: #{bert_forward.1} parent=1 // loop_exit
      _
    %2529 = vsyncpa [#allocation4], 1
    %s2530 = scalar_lea.sflag [#allocation4], 1
    %2531 = vsyncpa %s2530, 1
    %2532 = vsyncpa [#allocation8], 1
    %2533 = vsyncpa [#allocation11], 1
    %s2534 = scalar_lea.sflag [#allocation11], 1
    %2535 = vsyncpa %s2534, 1
    %2536 = vsyncpa [#allocation14], 1
    %s2537 = scalar_lea.sflag [#allocation14], 1
    %2538 = vsyncpa %s2537, 1
    %2539 = vsyncpa [#allocation17], 1
    %s2540 = scalar_lea.sflag [#allocation17], 1
    %2541 = vsyncpa %s2540, 1
    %2542 = vsyncpa [#allocation20], 1
    %s2543 = scalar_lea.sflag [#allocation20], 1
    %2544 = vsyncpa %s2543, 1
    %2545 = vsyncpa [#allocation23], 1
    %2546 = vsyncpa [#allocation5], 1
    %s2547 = scalar_lea.sflag [#allocation5], 1
    %2548 = vsyncpa %s2547, 1
    %2549 = vsyncpa [#allocation6], 1
    %s2550 = scalar_lea.sflag [#allocation6], 1
    %2551 = vsyncpa %s2550, 1

</llo_original>
